<compile_context>
chip_gen: v7x
topology: tpu7x:2x2x1
jax: 0.10.0
libtpu: 0.0.40
codegen_flags: <defaults>
</compile_context>

<pallas_src>
import functools
import numpy as np
import jax
import jax.numpy as jnp
from jax.experimental import pallas as pl
from jax.experimental.pallas import tpu as pltpu

_VMEM_LIMIT = 48 * 1024 * 1024
_EPS = 1e-5
_SLOPE = 0.2

# (phase, tap, row-shift s, col-shift t) in padded coordinates.
_TAP_MAP_PHASE = tuple(
    (2 * rp + cp, 2 * a + b, rp + a, cp + b)
    for rp in (0, 1) for cp in (0, 1) for a in (0, 1) for b in (0, 1))
_TAP_MAP_PACKED = tuple((0, 3 * s + t, s, t) for s in range(3) for t in range(3))


def _cparams():
    return pltpu.CompilerParams(dimension_semantics=("parallel",),
                                vmem_limit_bytes=_VMEM_LIMIT)


# ---------------------------------------------------------------------------
# Fused ConvTranspose2d(k=4,s=2,p=1) [+ BatchNorm(train)+LeakyReLU | +tanh].
# ---------------------------------------------------------------------------
def _convT_kernel(x_ref, w_ref, p1_ref, p2_ref, o_ref, *,
                  N, H, W, tap_map, mode, eps, slope):
    """x_ref : (R, Cin)           flattened padded NHWC activation (resident)
       w_ref : (P, T, Cin, ct)    per-(phase, tap) weight slices (this tile)
       p1/p2 : (1, ct)            BN gamma/beta  or  conv bias / unused
       o_ref : (P, N*HWp, ct)     per-phase slab-layout output
    """
    Wp = W + 2
    HWp = H * Wp
    img_stride = (H + 2) * Wp
    n_phase = o_ref.shape[0]

    groups = {}
    for (ph, tap, s, t) in tap_map:
        groups.setdefault((s, t), []).append((ph, tap))

    accs = [[None] * n_phase for _ in range(N)]
    for n in range(N):
        base = n * img_stride
        for (s, t), users in sorted(groups.items()):
            start = base + s * Wp + t
            xv = x_ref[start:start + HWp, :]                 # (HWp, Cin) bf16
            for (ph, tap) in users:
                d = jnp.dot(xv, w_ref[ph, tap, :, :],
                            preferred_element_type=jnp.float32)
                prev = accs[n][ph]
                accs[n][ph] = d if prev is None else prev + d

    if mode == "bn_lrelu":
        # mask out the 2 junk columns per image row before computing stats
        col = jax.lax.broadcasted_iota(jnp.int32, (HWp, 1), 0) % Wp
        valid = col < W
        cnt = float(n_phase * N * H * W)
        tot = None
        for n in range(N):
            for ph in range(n_phase):
                s_ = jnp.sum(jnp.where(valid, accs[n][ph], 0.0),
                             axis=0, keepdims=True)
                tot = s_ if tot is None else tot + s_
        mean = tot * (1.0 / cnt)
        totv = None
        for n in range(N):
            for ph in range(n_phase):
                c_ = accs[n][ph] - mean
                v_ = jnp.sum(jnp.where(valid, c_ * c_, 0.0),
                             axis=0, keepdims=True)
                totv = v_ if totv is None else totv + v_
        var = totv * (1.0 / cnt)
        scale = p1_ref[...] * jax.lax.rsqrt(var + eps)
        shift = p2_ref[...] - mean * scale
        for n in range(N):
            for ph in range(n_phase):
                y = accs[n][ph] * scale + shift
                y = jnp.where(y >= 0, y, slope * y)
                o_ref[ph, n * HWp:(n + 1) * HWp, :] = y.astype(o_ref.dtype)
    else:  # "bias_tanh"
        bias = p1_ref[...]
        for n in range(N):
            for ph in range(n_phase):
                y = jnp.tanh(accs[n][ph] + bias)
                o_ref[ph, n * HWp:(n + 1) * HWp, :] = y.astype(o_ref.dtype)


def conv_transpose_layer(x2d, w, p1, p2, *, N, H, W, mode, ct=None):
    """x2d: (N*(H+2)*(W+2)+8, Cin) bf16.  Returns (P, N*H*(W+2), Coutp) bf16."""
    n_phase, n_taps, cin, ctw = w.shape
    HWp = H * (W + 2)
    R = x2d.shape[0]
    if ct is None:
        ct = ctw
    assert ctw % ct == 0
    nt = ctw // ct
    tap_map = _TAP_MAP_PHASE if n_phase == 4 else _TAP_MAP_PACKED
    kernel = functools.partial(_convT_kernel, N=N, H=H, W=W, tap_map=tap_map,
                               mode=mode, eps=_EPS, slope=_SLOPE)
    return pl.pallas_call(
        kernel,
        out_shape=jax.ShapeDtypeStruct((n_phase, N * HWp, ctw), jnp.bfloat16),
        grid_spec=pltpu.PrefetchScalarGridSpec(
            num_scalar_prefetch=0,
            grid=(nt,),
            in_specs=[
                pl.BlockSpec((R, cin), lambda j: (0, 0)),
                pl.BlockSpec((n_phase, n_taps, cin, ct),
                             lambda j: (0, 0, 0, j)),
                pl.BlockSpec((1, ct), lambda j: (0, j)),
                pl.BlockSpec((1, ct), lambda j: (0, j)),
            ],
            out_specs=pl.BlockSpec((n_phase, N * HWp, ct),
                                   lambda j: (0, 0, j)),
        ),
        compiler_params=_cparams(),
    )(x2d, w, p1, p2)


# ---------------------------------------------------------------------------
# fc:  y = x @ W + b   (N tiled over the grid, weight streamed per tile)
# ---------------------------------------------------------------------------
def _matmul_bias_kernel(x_ref, w_ref, b_ref, o_ref):
    o_ref[...] = (jnp.dot(x_ref[...], w_ref[...],
                          preferred_element_type=jnp.float32)
                  + b_ref[...]).astype(o_ref.dtype)


def fc_layer(x, w, b, *, tn=4096, out_dtype=jnp.bfloat16):
    M, K = x.shape
    Kw, Nn = w.shape
    assert Kw == K and Nn % tn == 0
    return pl.pallas_call(
        _matmul_bias_kernel,
        out_shape=jax.ShapeDtypeStruct((M, Nn), out_dtype),
        grid_spec=pltpu.PrefetchScalarGridSpec(
            num_scalar_prefetch=0,
            grid=(Nn // tn,),
            in_specs=[pl.BlockSpec((M, K), lambda j: (0, 0)),
                      pl.BlockSpec((K, tn), lambda j: (0, j)),
                      pl.BlockSpec((1, tn), lambda j: (0, j))],
            out_specs=pl.BlockSpec((M, tn), lambda j: (0, j)),
        ),
        compiler_params=_cparams(),
    )(x, w, b)


# ---------------------------------------------------------------------------
# Bilinear 128->256 resize (align_corners=False) + (x+1)/2, one image/channel
# per grid step:  out = (A @ t) @ (0.5*A^T) + 0.5
# ---------------------------------------------------------------------------
def _resize_kernel(t_ref, a_ref, ah_ref, o_ref):
    up = jnp.dot(a_ref[...], t_ref[0, :, :], preferred_element_type=jnp.float32)
    o_ref[0, :, :] = jnp.dot(up.astype(jnp.bfloat16), ah_ref[...],
                             preferred_element_type=jnp.float32) + 0.5


def bilinear_resize_norm(t, A, AhT):
    B, IH, _ = t.shape
    OH = A.shape[0]
    return pl.pallas_call(
        _resize_kernel,
        out_shape=jax.ShapeDtypeStruct((B, OH, OH), jnp.float32),
        grid_spec=pltpu.PrefetchScalarGridSpec(
            num_scalar_prefetch=0,
            grid=(B,),
            in_specs=[pl.BlockSpec((1, IH, IH), lambda i: (i, 0, 0)),
                      pl.BlockSpec((OH, IH), lambda i: (0, 0)),
                      pl.BlockSpec((IH, OH), lambda i: (0, 0))],
            out_specs=pl.BlockSpec((1, OH, OH), lambda i: (i, 0, 0)),
        ),
        compiler_params=_cparams(),
    )(t, A, AhT)


# ---------------------------------------------------------------------------
# XLA glue (small reshapes/transposes between kernels).
# ---------------------------------------------------------------------------
def pad_flatten(img):
    """NHWC -> flattened padded (N*(H+2)*(W+2)+8, C), +8 guard rows."""
    N, H, W, C = img.shape
    xp = jnp.pad(img, ((0, 0), (1, 1), (1, 1), (0, 0)))
    x2d = xp.reshape(N * (H + 2) * (W + 2), C)
    return jnp.pad(x2d, ((0, 8), (0, 0)))


def interleave_phase_major(y, N, H, W):
    """(4, N*H*(W+2), C) phase-major slab output -> (N, 2H, 2W, C)."""
    C = y.shape[-1]
    Wp = W + 2
    y = y.reshape(2, 2, N, H, Wp, C)[:, :, :, :, :W, :]
    return y.transpose(2, 3, 0, 4, 1, 5).reshape(N, 2 * H, 2 * W, C)


def interleave_lane_packed(y, N, H, W):
    """(N*H*(W+2), 4*C) lane-packed slab output -> (N, 2H, 2W, C)."""
    Wp = W + 2
    C = y.shape[-1] // 4
    y = y.reshape(N, H, Wp, 2, 2, C)[:, :, :W]
    return y.transpose(0, 1, 3, 2, 4, 5).reshape(N, 2 * H, 2 * W, C)


# ---------------------------------------------------------------------------
# Weight construction (PyTorch layouts -> kernel layouts), done once at init.
# ---------------------------------------------------------------------------
def build_phase_major_weights(w):
    """(Cin, Cout, 4, 4) -> (4, 4, Cin, Cout) bf16; [2rp+cp, 2a+b]=W[..,kh,kw]."""
    blocks = []
    for rp in (0, 1):
        for cp in (0, 1):
            taps = [w[:, :, 3 - 2 * a - rp, 3 - 2 * b - cp]
                    for a in (0, 1) for b in (0, 1)]
            blocks.append(jnp.stack(taps, 0))
    return jnp.stack(blocks, 0).astype(jnp.bfloat16)


def build_packed3x3_weights(w, cp_pad):
    """(Cin, Cout, 4, 4) -> (1, 9, Cin, 4*cp_pad) bf16, phases packed in lanes."""
    cin, cout = w.shape[0], w.shape[1]
    wt = np.asarray(w, np.float32)
    Wk = np.zeros((1, 9, cin, 4 * cp_pad), np.float32)
    for s in range(3):
        for t in range(3):
            for rp in (0, 1):
                a = s - rp
                if a not in (0, 1):
                    continue
                for cp in (0, 1):
                    b = t - cp
                    if b not in (0, 1):
                        continue
                    ph = 2 * rp + cp
                    Wk[0, 3 * s + t, :, ph * cp_pad:ph * cp_pad + cout] = \
                        wt[:, :, 3 - 2 * a - rp, 3 - 2 * b - cp]
    return jnp.asarray(Wk, jnp.bfloat16)


def _interp_matrix(out_size, in_size):
    o = np.arange(out_size)
    src = np.clip((o + 0.5) * (in_size / out_size) - 0.5, 0.0, None)
    i0 = np.minimum(np.floor(src).astype(np.int64), in_size - 1)
    i1 = np.minimum(i0 + 1, in_size - 1)
    frac = (src - i0).astype(np.float32)
    A = np.zeros((out_size, in_size), np.float32)
    A[o, i0] += 1.0 - frac
    A[o, i1] += frac
    return A


# ---------------------------------------------------------------------------
# Parameters (deterministic synthetic init, already in kernel layouts).
# ---------------------------------------------------------------------------
def init_params(key, input_dim, output_dim, num_classes, embedding_dim, cp4=32):
    keys = jax.random.split(key, 24)
    p = {}
    p["embedding"] = 0.1 * jax.random.normal(
        keys[0], (num_classes, embedding_dim), jnp.float32)
    in_f = input_dim + embedding_dim
    fc_w = 0.02 * jax.random.normal(keys[1], (in_f, 1024 * 16), jnp.float32)
    fc_b = 0.01 * jax.random.normal(keys[2], (1024 * 16,), jnp.float32)
    # permute fc output columns from (c, h, w) to (h, w, c) so the fc output
    # reshapes directly to NHWC; pad K to 128, cast bf16.
    old_idx = (np.arange(1024)[None, None, :] * 16
               + np.arange(4)[:, None, None] * 4
               + np.arange(4)[None, :, None]).reshape(-1)
    p["fc_w"] = jnp.pad(fc_w[:, old_idx],
                        ((0, 128 - in_f), (0, 0))).astype(jnp.bfloat16)
    p["fc_b"] = fc_b[old_idx].reshape(1, -1).astype(jnp.float32)

    chans = [1024, 512, 256, 128, 64, output_dim]
    ki = 3
    for li in range(5):
        cin, cout = chans[li], chans[li + 1]
        w = 0.02 * jax.random.normal(keys[ki], (cin, cout, 4, 4), jnp.float32)
        ki += 1
        bcv = 0.01 * jax.random.normal(keys[ki], (cout,), jnp.float32)
        ki += 1
        if li < 4:
            p[f"conv{li}_w"] = build_phase_major_weights(w)
            # conv bias cancels exactly under training-mode BatchNorm.
            g = 1.0 + 0.1 * jax.random.normal(keys[ki], (cout,), jnp.float32)
            ki += 1
            b = 0.1 * jax.random.normal(keys[ki], (cout,), jnp.float32)
            ki += 1
            p[f"bn{li}_g"] = g.reshape(1, -1)
            p[f"bn{li}_b"] = b.reshape(1, -1)
        else:
            p["conv4_w"] = build_packed3x3_weights(w, cp4)
            bias = np.zeros((1, 4 * cp4), np.float32)
            for ph in range(4):
                bias[0, ph * cp4:ph * cp4 + cout] = np.asarray(bcv)
            p["conv4_b"] = jnp.asarray(bias)
            p["conv4_zero"] = jnp.zeros((1, 4 * cp4), jnp.float32)
    A = _interp_matrix(256, 128)
    p["A"] = jnp.asarray(A, jnp.bfloat16)
    p["AhT"] = jnp.asarray(0.5 * A.T, jnp.bfloat16)
    return p


# ---------------------------------------------------------------------------
# Generator forward.
# ---------------------------------------------------------------------------
_CT = {0: 128, 1: 128, 2: 128, 3: 64}   # per-phase channel tile per layer


def generator_forward(params, noise, class_labels, *, output_dim=3):
    Nb = noise.shape[0]
    emb = params["embedding"][class_labels.astype(jnp.int32)]
    comb = jnp.concatenate([noise, emb], axis=1).astype(jnp.bfloat16)
    x_fc = jnp.zeros((8, 128), jnp.bfloat16).at[:Nb, :comb.shape[1]].set(comb)
    y_fc = fc_layer(x_fc, params["fc_w"], params["fc_b"])          # (8,16384)
    img = y_fc[:Nb].reshape(Nb, 4, 4, 1024)                        # NHWC

    H = W = 4
    for li in range(4):
        x2d = pad_flatten(img)
        y = conv_transpose_layer(x2d, params[f"conv{li}_w"],
                                 params[f"bn{li}_g"], params[f"bn{li}_b"],
                                 N=Nb, H=H, W=W, mode="bn_lrelu", ct=_CT[li])
        img = interleave_phase_major(y, Nb, H, W)
        H, W = 2 * H, 2 * W

    x2d = pad_flatten(img)
    y = conv_transpose_layer(x2d, params["conv4_w"], params["conv4_b"],
                             params["conv4_zero"], N=Nb, H=H, W=W,
                             mode="bias_tanh")
    img = interleave_lane_packed(y[0], Nb, H, W)[..., :output_dim]
    t = img.transpose(0, 3, 1, 2).reshape(Nb * output_dim, 128, 128)
    out = bilinear_resize_norm(t, params["A"], params["AhT"])
    return out.reshape(Nb, output_dim, 256, 256)


# ---------------------------------------------------------------------------
# Startup self-checks against a pure-jnp reference (small shapes).
# ---------------------------------------------------------------------------
def conv_transpose_ref(x_nhwc, w, b):
    N, H, W, Cin = x_nhwc.shape
    Cout = w.shape[1]
    Ho, Wo = 2 * H, 2 * W
    xd = jnp.zeros((N, 2 * H - 1, 2 * W - 1, Cin), jnp.float32)
    xd = xd.at[:, ::2, ::2, :].set(x_nhwc.astype(jnp.float32))
    xpad = jnp.pad(xd, ((0, 0), (2, 2), (2, 2), (0, 0)))
    wf = jnp.flip(w, axis=(2, 3)).astype(jnp.float32)
    out = jnp.zeros((N, Ho, Wo, Cout), jnp.float32)
    for a in range(4):
        for c in range(4):
            out = out + jnp.einsum('nhwi,io->nhwo',
                                   xpad[:, a:a + Ho, c:c + Wo, :],
                                   wf[:, :, a, c])
    return out + b.reshape(1, 1, 1, Cout)


def _layer_self_checks():
    k = jax.random.split(jax.random.PRNGKey(42), 8)
    N, H, W, Cin, Cout = 2, 4, 4, 8, 16
    x = jax.random.normal(k[0], (N, H, W, Cin), jnp.float32)
    xb = x.astype(jnp.bfloat16)

    # phase-major conv + BN(train) + LeakyReLU
    w = 0.1 * jax.random.normal(k[1], (Cin, Cout, 4, 4), jnp.float32)
    b = 0.1 * jax.random.normal(k[2], (Cout,), jnp.float32)
    g = 1.0 + 0.1 * jax.random.normal(k[3], (Cout,), jnp.float32)
    be = 0.1 * jax.random.normal(k[4], (Cout,), jnp.float32)
    conv = conv_transpose_ref(x, w, b)
    mean = conv.mean(axis=(0, 1, 2), keepdims=True)
    var = ((conv - mean) ** 2).mean(axis=(0, 1, 2), keepdims=True)
    ref = (conv - mean) * jax.lax.rsqrt(var + _EPS) * g + be
    ref = jnp.where(ref >= 0, ref, _SLOPE * ref)
    y = conv_transpose_layer(pad_flatten(xb), build_phase_major_weights(w),
                             g.reshape(1, -1), be.reshape(1, -1),
                             N=N, H=H, W=W, mode="bn_lrelu")
    got = interleave_phase_major(y, N, H, W).astype(jnp.float32)
    err = float(jnp.max(jnp.abs(got - ref)))
    assert err < 0.25, f"phase-major conv+BN mismatch: {err}"

    # packed 3x3 conv + tanh (final-layer path)
    Cout2, cp = 3, 32
    w2 = 0.1 * jax.random.normal(k[5], (Cin, Cout2, 4, 4), jnp.float32)
    b2 = 0.1 * jax.random.normal(k[6], (Cout2,), jnp.float32)
    ref2 = jnp.tanh(conv_transpose_ref(x, w2, b2))
    bias = np.zeros((1, 4 * cp), np.float32)
    for ph in range(4):
        bias[0, ph * cp:ph * cp + Cout2] = np.asarray(b2)
    y2 = conv_transpose_layer(pad_flatten(xb), build_packed3x3_weights(w2, cp),
                              jnp.asarray(bias),
                              jnp.zeros((1, 4 * cp), jnp.float32),
                              N=N, H=H, W=W, mode="bias_tanh")
    got2 = interleave_lane_packed(y2[0], N, H, W)[..., :Cout2]
    err2 = float(jnp.max(jnp.abs(got2.astype(jnp.float32) - ref2)))
    assert err2 < 0.1, f"packed conv+tanh mismatch: {err2}"


if __name__ == "__main__":
    input_dim, output_dim, num_classes, embedding_dim = 16, 3, 10, 8
    batch = 2

    _layer_self_checks()

    key = jax.random.PRNGKey(0)
    pkey, nkey, lkey = jax.random.split(key, 3)
    params = init_params(pkey, input_dim, output_dim, num_classes, embedding_dim)
    noise = jax.random.normal(nkey, (batch, input_dim), jnp.float32)
    labels = jax.random.randint(lkey, (batch,), 0, num_classes)

    fwd = jax.jit(generator_forward)
    out = jax.block_until_ready(fwd(params, noise, labels))
    assert out.shape == (batch, output_dim, 256, 256), out.shape
    assert bool(jnp.all(jnp.isfinite(out)))
    print("KERNEL_OK")
</pallas_src>

<mosaic_0001>
module attributes {stable_mosaic.version = 11 : i64} {
  func.func @_convT_kernel(%arg0: i32, %arg1: memref<80x8xbf16, #tpu.memory_space<vmem>>, %arg2: memref<4x4x8x16xbf16, #tpu.memory_space<vmem>>, %arg3: memref<1x16xf32, #tpu.memory_space<vmem>>, %arg4: memref<1x16xf32, #tpu.memory_space<vmem>>, %arg5: memref<4x48x16xbf16, #tpu.memory_space<vmem>>) attributes {dimension_semantics = [#tpu.dimension_semantics<parallel>], iteration_bounds = array<i64: 1>, scalar_prefetch = 0 : i64, scratch_operands = 0 : i64, tpu.core_type = #tpu.core_type<tc>, window_params = [{pipeline_mode = #tpu.pipeline_mode<synchronous>, transform_indices = @transform_0, window_bounds = array<i64: 80, 8>}, {transform_indices = @transform_1, window_bounds = array<i64: 4, 4, 8, 16>}, {transform_indices = @transform_2, window_bounds = array<i64: 1, 16>}, {transform_indices = @transform_3, window_bounds = array<i64: 1, 16>}, {transform_indices = @transform_4, window_bounds = array<i64: 4, 48, 16>}]} {
    %c0 = arith.constant 0 : index
    %c0_0 = arith.constant 0 : index
    %0 = vector.load %arg1[%c0, %c0_0] : memref<80x8xbf16, #tpu.memory_space<vmem>>, vector<24x8xbf16>
    %c0_1 = arith.constant 0 : index
    %c0_2 = arith.constant 0 : index
    %c0_3 = arith.constant 0 : index
    %c0_4 = arith.constant 0 : index
    %1 = vector.load %arg2[%c0_1, %c0_2, %c0_3, %c0_4] : memref<4x4x8x16xbf16, #tpu.memory_space<vmem>>, vector<1x1x8x16xbf16>
    %2 = vector.shape_cast %1 : vector<1x1x8x16xbf16> to vector<8x16xbf16>
    %cst = arith.constant dense<0.000000e+00> : vector<24x16xf32>
    %3 = tpu.matmul %0, %2, %cst {dimension_numbers = #tpu.dot_dimension_numbers<[1], [0], [0], [1], [0, 0, 1, 1], [], []>} : vector<24x8xbf16>, vector<8x16xbf16>, vector<24x16xf32> -> vector<24x16xf32>
    %c1 = arith.constant 1 : index
    %c0_5 = arith.constant 0 : index
    %4 = vector.load %arg1[%c1, %c0_5] : memref<80x8xbf16, #tpu.memory_space<vmem>>, vector<24x8xbf16>
    %c0_6 = arith.constant 0 : index
    %c1_7 = arith.constant 1 : index
    %c0_8 = arith.constant 0 : index
    %c0_9 = arith.constant 0 : index
    %5 = vector.load %arg2[%c0_6, %c1_7, %c0_8, %c0_9] : memref<4x4x8x16xbf16, #tpu.memory_space<vmem>>, vector<1x1x8x16xbf16>
    %6 = vector.shape_cast %5 : vector<1x1x8x16xbf16> to vector<8x16xbf16>
    %cst_10 = arith.constant dense<0.000000e+00> : vector<24x16xf32>
    %7 = tpu.matmul %4, %6, %cst_10 {dimension_numbers = #tpu.dot_dimension_numbers<[1], [0], [0], [1], [0, 0, 1, 1], [], []>} : vector<24x8xbf16>, vector<8x16xbf16>, vector<24x16xf32> -> vector<24x16xf32>
    %8 = arith.addf %3, %7 : vector<24x16xf32>
    %c1_11 = arith.constant 1 : index
    %c0_12 = arith.constant 0 : index
    %c0_13 = arith.constant 0 : index
    %c0_14 = arith.constant 0 : index
    %9 = vector.load %arg2[%c1_11, %c0_12, %c0_13, %c0_14] : memref<4x4x8x16xbf16, #tpu.memory_space<vmem>>, vector<1x1x8x16xbf16>
    %10 = vector.shape_cast %9 : vector<1x1x8x16xbf16> to vector<8x16xbf16>
    %cst_15 = arith.constant dense<0.000000e+00> : vector<24x16xf32>
    %11 = tpu.matmul %4, %10, %cst_15 {dimension_numbers = #tpu.dot_dimension_numbers<[1], [0], [0], [1], [0, 0, 1, 1], [], []>} : vector<24x8xbf16>, vector<8x16xbf16>, vector<24x16xf32> -> vector<24x16xf32>
    %c2 = arith.constant 2 : index
    %c0_16 = arith.constant 0 : index
    %12 = vector.load %arg1[%c2, %c0_16] : memref<80x8xbf16, #tpu.memory_space<vmem>>, vector<24x8xbf16>
    %c1_17 = arith.constant 1 : index
    %c1_18 = arith.constant 1 : index
    %c0_19 = arith.constant 0 : index
    %c0_20 = arith.constant 0 : index
    %13 = vector.load %arg2[%c1_17, %c1_18, %c0_19, %c0_20] : memref<4x4x8x16xbf16, #tpu.memory_space<vmem>>, vector<1x1x8x16xbf16>
    %14 = vector.shape_cast %13 : vector<1x1x8x16xbf16> to vector<8x16xbf16>
    %cst_21 = arith.constant dense<0.000000e+00> : vector<24x16xf32>
    %15 = tpu.matmul %12, %14, %cst_21 {dimension_numbers = #tpu.dot_dimension_numbers<[1], [0], [0], [1], [0, 0, 1, 1], [], []>} : vector<24x8xbf16>, vector<8x16xbf16>, vector<24x16xf32> -> vector<24x16xf32>
    %16 = arith.addf %11, %15 : vector<24x16xf32>
    %c6 = arith.constant 6 : index
    %c0_22 = arith.constant 0 : index
    %17 = vector.load %arg1[%c6, %c0_22] : memref<80x8xbf16, #tpu.memory_space<vmem>>, vector<24x8xbf16>
    %c0_23 = arith.constant 0 : index
    %c2_24 = arith.constant 2 : index
    %c0_25 = arith.constant 0 : index
    %c0_26 = arith.constant 0 : index
    %18 = vector.load %arg2[%c0_23, %c2_24, %c0_25, %c0_26] : memref<4x4x8x16xbf16, #tpu.memory_space<vmem>>, vector<1x1x8x16xbf16>
    %19 = vector.shape_cast %18 : vector<1x1x8x16xbf16> to vector<8x16xbf16>
    %cst_27 = arith.constant dense<0.000000e+00> : vector<24x16xf32>
    %20 = tpu.matmul %17, %19, %cst_27 {dimension_numbers = #tpu.dot_dimension_numbers<[1], [0], [0], [1], [0, 0, 1, 1], [], []>} : vector<24x8xbf16>, vector<8x16xbf16>, vector<24x16xf32> -> vector<24x16xf32>
    %21 = arith.addf %8, %20 : vector<24x16xf32>
    %c2_28 = arith.constant 2 : index
    %c0_29 = arith.constant 0 : index
    %c0_30 = arith.constant 0 : index
    %c0_31 = arith.constant 0 : index
    %22 = vector.load %arg2[%c2_28, %c0_29, %c0_30, %c0_31] : memref<4x4x8x16xbf16, #tpu.memory_space<vmem>>, vector<1x1x8x16xbf16>
    %23 = vector.shape_cast %22 : vector<1x1x8x16xbf16> to vector<8x16xbf16>
    %cst_32 = arith.constant dense<0.000000e+00> : vector<24x16xf32>
    %24 = tpu.matmul %17, %23, %cst_32 {dimension_numbers = #tpu.dot_dimension_numbers<[1], [0], [0], [1], [0, 0, 1, 1], [], []>} : vector<24x8xbf16>, vector<8x16xbf16>, vector<24x16xf32> -> vector<24x16xf32>
    %c7 = arith.constant 7 : index
    %c0_33 = arith.constant 0 : index
    %25 = vector.load %arg1[%c7, %c0_33] : memref<80x8xbf16, #tpu.memory_space<vmem>>, vector<24x8xbf16>
    %c0_34 = arith.constant 0 : index
    %c3 = arith.constant 3 : index
    %c0_35 = arith.constant 0 : index
    %c0_36 = arith.constant 0 : index
    %26 = vector.load %arg2[%c0_34, %c3, %c0_35, %c0_36] : memref<4x4x8x16xbf16, #tpu.memory_space<vmem>>, vector<1x1x8x16xbf16>
    %27 = vector.shape_cast %26 : vector<1x1x8x16xbf16> to vector<8x16xbf16>
    %cst_37 = arith.constant dense<0.000000e+00> : vector<24x16xf32>
    %28 = tpu.matmul %25, %27, %cst_37 {dimension_numbers = #tpu.dot_dimension_numbers<[1], [0], [0], [1], [0, 0, 1, 1], [], []>} : vector<24x8xbf16>, vector<8x16xbf16>, vector<24x16xf32> -> vector<24x16xf32>
    %29 = arith.addf %21, %28 : vector<24x16xf32>
    %c1_38 = arith.constant 1 : index
    %c2_39 = arith.constant 2 : index
    %c0_40 = arith.constant 0 : index
    %c0_41 = arith.constant 0 : index
    %30 = vector.load %arg2[%c1_38, %c2_39, %c0_40, %c0_41] : memref<4x4x8x16xbf16, #tpu.memory_space<vmem>>, vector<1x1x8x16xbf16>
    %31 = vector.shape_cast %30 : vector<1x1x8x16xbf16> to vector<8x16xbf16>
    %cst_42 = arith.constant dense<0.000000e+00> : vector<24x16xf32>
    %32 = tpu.matmul %25, %31, %cst_42 {dimension_numbers = #tpu.dot_dimension_numbers<[1], [0], [0], [1], [0, 0, 1, 1], [], []>} : vector<24x8xbf16>, vector<8x16xbf16>, vector<24x16xf32> -> vector<24x16xf32>
    %33 = arith.addf %16, %32 : vector<24x16xf32>
    %c2_43 = arith.constant 2 : index
    %c1_44 = arith.constant 1 : index
    %c0_45 = arith.constant 0 : index
    %c0_46 = arith.constant 0 : index
    %34 = vector.load %arg2[%c2_43, %c1_44, %c0_45, %c0_46] : memref<4x4x8x16xbf16, #tpu.memory_space<vmem>>, vector<1x1x8x16xbf16>
    %35 = vector.shape_cast %34 : vector<1x1x8x16xbf16> to vector<8x16xbf16>
    %cst_47 = arith.constant dense<0.000000e+00> : vector<24x16xf32>
    %36 = tpu.matmul %25, %35, %cst_47 {dimension_numbers = #tpu.dot_dimension_numbers<[1], [0], [0], [1], [0, 0, 1, 1], [], []>} : vector<24x8xbf16>, vector<8x16xbf16>, vector<24x16xf32> -> vector<24x16xf32>
    %37 = arith.addf %24, %36 : vector<24x16xf32>
    %c3_48 = arith.constant 3 : index
    %c0_49 = arith.constant 0 : index
    %c0_50 = arith.constant 0 : index
    %c0_51 = arith.constant 0 : index
    %38 = vector.load %arg2[%c3_48, %c0_49, %c0_50, %c0_51] : memref<4x4x8x16xbf16, #tpu.memory_space<vmem>>, vector<1x1x8x16xbf16>
    %39 = vector.shape_cast %38 : vector<1x1x8x16xbf16> to vector<8x16xbf16>
    %cst_52 = arith.constant dense<0.000000e+00> : vector<24x16xf32>
    %40 = tpu.matmul %25, %39, %cst_52 {dimension_numbers = #tpu.dot_dimension_numbers<[1], [0], [0], [1], [0, 0, 1, 1], [], []>} : vector<24x8xbf16>, vector<8x16xbf16>, vector<24x16xf32> -> vector<24x16xf32>
    %c8 = arith.constant 8 : index
    %c0_53 = arith.constant 0 : index
    %41 = vector.load %arg1[%c8, %c0_53] : memref<80x8xbf16, #tpu.memory_space<vmem>>, vector<24x8xbf16>
    %c1_54 = arith.constant 1 : index
    %c3_55 = arith.constant 3 : index
    %c0_56 = arith.constant 0 : index
    %c0_57 = arith.constant 0 : index
    %42 = vector.load %arg2[%c1_54, %c3_55, %c0_56, %c0_57] : memref<4x4x8x16xbf16, #tpu.memory_space<vmem>>, vector<1x1x8x16xbf16>
    %43 = vector.shape_cast %42 : vector<1x1x8x16xbf16> to vector<8x16xbf16>
    %cst_58 = arith.constant dense<0.000000e+00> : vector<24x16xf32>
    %44 = tpu.matmul %41, %43, %cst_58 {dimension_numbers = #tpu.dot_dimension_numbers<[1], [0], [0], [1], [0, 0, 1, 1], [], []>} : vector<24x8xbf16>, vector<8x16xbf16>, vector<24x16xf32> -> vector<24x16xf32>
    %45 = arith.addf %33, %44 : vector<24x16xf32>
    %c3_59 = arith.constant 3 : index
    %c1_60 = arith.constant 1 : index
    %c0_61 = arith.constant 0 : index
    %c0_62 = arith.constant 0 : index
    %46 = vector.load %arg2[%c3_59, %c1_60, %c0_61, %c0_62] : memref<4x4x8x16xbf16, #tpu.memory_space<vmem>>, vector<1x1x8x16xbf16>
    %47 = vector.shape_cast %46 : vector<1x1x8x16xbf16> to vector<8x16xbf16>
    %cst_63 = arith.constant dense<0.000000e+00> : vector<24x16xf32>
    %48 = tpu.matmul %41, %47, %cst_63 {dimension_numbers = #tpu.dot_dimension_numbers<[1], [0], [0], [1], [0, 0, 1, 1], [], []>} : vector<24x8xbf16>, vector<8x16xbf16>, vector<24x16xf32> -> vector<24x16xf32>
    %49 = arith.addf %40, %48 : vector<24x16xf32>
    %c12 = arith.constant 12 : index
    %c0_64 = arith.constant 0 : index
    %50 = vector.load %arg1[%c12, %c0_64] : memref<80x8xbf16, #tpu.memory_space<vmem>>, vector<24x8xbf16>
    %c2_65 = arith.constant 2 : index
    %c2_66 = arith.constant 2 : index
    %c0_67 = arith.constant 0 : index
    %c0_68 = arith.constant 0 : index
    %51 = vector.load %arg2[%c2_65, %c2_66, %c0_67, %c0_68] : memref<4x4x8x16xbf16, #tpu.memory_space<vmem>>, vector<1x1x8x16xbf16>
    %52 = vector.shape_cast %51 : vector<1x1x8x16xbf16> to vector<8x16xbf16>
    %cst_69 = arith.constant dense<0.000000e+00> : vector<24x16xf32>
    %53 = tpu.matmul %50, %52, %cst_69 {dimension_numbers = #tpu.dot_dimension_numbers<[1], [0], [0], [1], [0, 0, 1, 1], [], []>} : vector<24x8xbf16>, vector<8x16xbf16>, vector<24x16xf32> -> vector<24x16xf32>
    %54 = arith.addf %37, %53 : vector<24x16xf32>
    %c13 = arith.constant 13 : index
    %c0_70 = arith.constant 0 : index
    %55 = vector.load %arg1[%c13, %c0_70] : memref<80x8xbf16, #tpu.memory_space<vmem>>, vector<24x8xbf16>
    %c2_71 = arith.constant 2 : index
    %c3_72 = arith.constant 3 : index
    %c0_73 = arith.constant 0 : index
    %c0_74 = arith.constant 0 : index
    %56 = vector.load %arg2[%c2_71, %c3_72, %c0_73, %c0_74] : memref<4x4x8x16xbf16, #tpu.memory_space<vmem>>, vector<1x1x8x16xbf16>
    %57 = vector.shape_cast %56 : vector<1x1x8x16xbf16> to vector<8x16xbf16>
    %cst_75 = arith.constant dense<0.000000e+00> : vector<24x16xf32>
    %58 = tpu.matmul %55, %57, %cst_75 {dimension_numbers = #tpu.dot_dimension_numbers<[1], [0], [0], [1], [0, 0, 1, 1], [], []>} : vector<24x8xbf16>, vector<8x16xbf16>, vector<24x16xf32> -> vector<24x16xf32>
    %59 = arith.addf %54, %58 : vector<24x16xf32>
    %c3_76 = arith.constant 3 : index
    %c2_77 = arith.constant 2 : index
    %c0_78 = arith.constant 0 : index
    %c0_79 = arith.constant 0 : index
    %60 = vector.load %arg2[%c3_76, %c2_77, %c0_78, %c0_79] : memref<4x4x8x16xbf16, #tpu.memory_space<vmem>>, vector<1x1x8x16xbf16>
    %61 = vector.shape_cast %60 : vector<1x1x8x16xbf16> to vector<8x16xbf16>
    %cst_80 = arith.constant dense<0.000000e+00> : vector<24x16xf32>
    %62 = tpu.matmul %55, %61, %cst_80 {dimension_numbers = #tpu.dot_dimension_numbers<[1], [0], [0], [1], [0, 0, 1, 1], [], []>} : vector<24x8xbf16>, vector<8x16xbf16>, vector<24x16xf32> -> vector<24x16xf32>
    %63 = arith.addf %49, %62 : vector<24x16xf32>
    %c14 = arith.constant 14 : index
    %c0_81 = arith.constant 0 : index
    %64 = vector.load %arg1[%c14, %c0_81] : memref<80x8xbf16, #tpu.memory_space<vmem>>, vector<24x8xbf16>
    %c3_82 = arith.constant 3 : index
    %c3_83 = arith.constant 3 : index
    %c0_84 = arith.constant 0 : index
    %c0_85 = arith.constant 0 : index
    %65 = vector.load %arg2[%c3_82, %c3_83, %c0_84, %c0_85] : memref<4x4x8x16xbf16, #tpu.memory_space<vmem>>, vector<1x1x8x16xbf16>
    %66 = vector.shape_cast %65 : vector<1x1x8x16xbf16> to vector<8x16xbf16>
    %cst_86 = arith.constant dense<0.000000e+00> : vector<24x16xf32>
    %67 = tpu.matmul %64, %66, %cst_86 {dimension_numbers = #tpu.dot_dimension_numbers<[1], [0], [0], [1], [0, 0, 1, 1], [], []>} : vector<24x8xbf16>, vector<8x16xbf16>, vector<24x16xf32> -> vector<24x16xf32>
    %68 = arith.addf %63, %67 : vector<24x16xf32>
    %c36 = arith.constant 36 : index
    %c0_87 = arith.constant 0 : index
    %69 = vector.load %arg1[%c36, %c0_87] : memref<80x8xbf16, #tpu.memory_space<vmem>>, vector<24x8xbf16>
    %c0_88 = arith.constant 0 : index
    %c0_89 = arith.constant 0 : index
    %c0_90 = arith.constant 0 : index
    %c0_91 = arith.constant 0 : index
    %70 = vector.load %arg2[%c0_88, %c0_89, %c0_90, %c0_91] : memref<4x4x8x16xbf16, #tpu.memory_space<vmem>>, vector<1x1x8x16xbf16>
    %71 = vector.shape_cast %70 : vector<1x1x8x16xbf16> to vector<8x16xbf16>
    %cst_92 = arith.constant dense<0.000000e+00> : vector<24x16xf32>
    %72 = tpu.matmul %69, %71, %cst_92 {dimension_numbers = #tpu.dot_dimension_numbers<[1], [0], [0], [1], [0, 0, 1, 1], [], []>} : vector<24x8xbf16>, vector<8x16xbf16>, vector<24x16xf32> -> vector<24x16xf32>
    %c37 = arith.constant 37 : index
    %c0_93 = arith.constant 0 : index
    %73 = vector.load %arg1[%c37, %c0_93] : memref<80x8xbf16, #tpu.memory_space<vmem>>, vector<24x8xbf16>
    %c0_94 = arith.constant 0 : index
    %c1_95 = arith.constant 1 : index
    %c0_96 = arith.constant 0 : index
    %c0_97 = arith.constant 0 : index
    %74 = vector.load %arg2[%c0_94, %c1_95, %c0_96, %c0_97] : memref<4x4x8x16xbf16, #tpu.memory_space<vmem>>, vector<1x1x8x16xbf16>
    %75 = vector.shape_cast %74 : vector<1x1x8x16xbf16> to vector<8x16xbf16>
    %cst_98 = arith.constant dense<0.000000e+00> : vector<24x16xf32>
    %76 = tpu.matmul %73, %75, %cst_98 {dimension_numbers = #tpu.dot_dimension_numbers<[1], [0], [0], [1], [0, 0, 1, 1], [], []>} : vector<24x8xbf16>, vector<8x16xbf16>, vector<24x16xf32> -> vector<24x16xf32>
    %77 = arith.addf %72, %76 : vector<24x16xf32>
    %c1_99 = arith.constant 1 : index
    %c0_100 = arith.constant 0 : index
    %c0_101 = arith.constant 0 : index
    %c0_102 = arith.constant 0 : index
    %78 = vector.load %arg2[%c1_99, %c0_100, %c0_101, %c0_102] : memref<4x4x8x16xbf16, #tpu.memory_space<vmem>>, vector<1x1x8x16xbf16>
    %79 = vector.shape_cast %78 : vector<1x1x8x16xbf16> to vector<8x16xbf16>
    %cst_103 = arith.constant dense<0.000000e+00> : vector<24x16xf32>
    %80 = tpu.matmul %73, %79, %cst_103 {dimension_numbers = #tpu.dot_dimension_numbers<[1], [0], [0], [1], [0, 0, 1, 1], [], []>} : vector<24x8xbf16>, vector<8x16xbf16>, vector<24x16xf32> -> vector<24x16xf32>
    %c38 = arith.constant 38 : index
    %c0_104 = arith.constant 0 : index
    %81 = vector.load %arg1[%c38, %c0_104] : memref<80x8xbf16, #tpu.memory_space<vmem>>, vector<24x8xbf16>
    %c1_105 = arith.constant 1 : index
    %c1_106 = arith.constant 1 : index
    %c0_107 = arith.constant 0 : index
    %c0_108 = arith.constant 0 : index
    %82 = vector.load %arg2[%c1_105, %c1_106, %c0_107, %c0_108] : memref<4x4x8x16xbf16, #tpu.memory_space<vmem>>, vector<1x1x8x16xbf16>
    %83 = vector.shape_cast %82 : vector<1x1x8x16xbf16> to vector<8x16xbf16>
    %cst_109 = arith.constant dense<0.000000e+00> : vector<24x16xf32>
    %84 = tpu.matmul %81, %83, %cst_109 {dimension_numbers = #tpu.dot_dimension_numbers<[1], [0], [0], [1], [0, 0, 1, 1], [], []>} : vector<24x8xbf16>, vector<8x16xbf16>, vector<24x16xf32> -> vector<24x16xf32>
    %85 = arith.addf %80, %84 : vector<24x16xf32>
    %c42 = arith.constant 42 : index
    %c0_110 = arith.constant 0 : index
    %86 = vector.load %arg1[%c42, %c0_110] : memref<80x8xbf16, #tpu.memory_space<vmem>>, vector<24x8xbf16>
    %c0_111 = arith.constant 0 : index
    %c2_112 = arith.constant 2 : index
    %c0_113 = arith.constant 0 : index
    %c0_114 = arith.constant 0 : index
    %87 = vector.load %arg2[%c0_111, %c2_112, %c0_113, %c0_114] : memref<4x4x8x16xbf16, #tpu.memory_space<vmem>>, vector<1x1x8x16xbf16>
    %88 = vector.shape_cast %87 : vector<1x1x8x16xbf16> to vector<8x16xbf16>
    %cst_115 = arith.constant dense<0.000000e+00> : vector<24x16xf32>
    %89 = tpu.matmul %86, %88, %cst_115 {dimension_numbers = #tpu.dot_dimension_numbers<[1], [0], [0], [1], [0, 0, 1, 1], [], []>} : vector<24x8xbf16>, vector<8x16xbf16>, vector<24x16xf32> -> vector<24x16xf32>
    %90 = arith.addf %77, %89 : vector<24x16xf32>
    %c2_116 = arith.constant 2 : index
    %c0_117 = arith.constant 0 : index
    %c0_118 = arith.constant 0 : index
    %c0_119 = arith.constant 0 : index
    %91 = vector.load %arg2[%c2_116, %c0_117, %c0_118, %c0_119] : memref<4x4x8x16xbf16, #tpu.memory_space<vmem>>, vector<1x1x8x16xbf16>
    %92 = vector.shape_cast %91 : vector<1x1x8x16xbf16> to vector<8x16xbf16>
    %cst_120 = arith.constant dense<0.000000e+00> : vector<24x16xf32>
    %93 = tpu.matmul %86, %92, %cst_120 {dimension_numbers = #tpu.dot_dimension_numbers<[1], [0], [0], [1], [0, 0, 1, 1], [], []>} : vector<24x8xbf16>, vector<8x16xbf16>, vector<24x16xf32> -> vector<24x16xf32>
    %c43 = arith.constant 43 : index
    %c0_121 = arith.constant 0 : index
    %94 = vector.load %arg1[%c43, %c0_121] : memref<80x8xbf16, #tpu.memory_space<vmem>>, vector<24x8xbf16>
    %c0_122 = arith.constant 0 : index
    %c3_123 = arith.constant 3 : index
    %c0_124 = arith.constant 0 : index
    %c0_125 = arith.constant 0 : index
    %95 = vector.load %arg2[%c0_122, %c3_123, %c0_124, %c0_125] : memref<4x4x8x16xbf16, #tpu.memory_space<vmem>>, vector<1x1x8x16xbf16>
    %96 = vector.shape_cast %95 : vector<1x1x8x16xbf16> to vector<8x16xbf16>
    %cst_126 = arith.constant dense<0.000000e+00> : vector<24x16xf32>
    %97 = tpu.matmul %94, %96, %cst_126 {dimension_numbers = #tpu.dot_dimension_numbers<[1], [0], [0], [1], [0, 0, 1, 1], [], []>} : vector<24x8xbf16>, vector<8x16xbf16>, vector<24x16xf32> -> vector<24x16xf32>
    %98 = arith.addf %90, %97 : vector<24x16xf32>
    %c1_127 = arith.constant 1 : index
    %c2_128 = arith.constant 2 : index
    %c0_129 = arith.constant 0 : index
    %c0_130 = arith.constant 0 : index
    %99 = vector.load %arg2[%c1_127, %c2_128, %c0_129, %c0_130] : memref<4x4x8x16xbf16, #tpu.memory_space<vmem>>, vector<1x1x8x16xbf16>
    %100 = vector.shape_cast %99 : vector<1x1x8x16xbf16> to vector<8x16xbf16>
    %cst_131 = arith.constant dense<0.000000e+00> : vector<24x16xf32>
    %101 = tpu.matmul %94, %100, %cst_131 {dimension_numbers = #tpu.dot_dimension_numbers<[1], [0], [0], [1], [0, 0, 1, 1], [], []>} : vector<24x8xbf16>, vector<8x16xbf16>, vector<24x16xf32> -> vector<24x16xf32>
    %102 = arith.addf %85, %101 : vector<24x16xf32>
    %c2_132 = arith.constant 2 : index
    %c1_133 = arith.constant 1 : index
    %c0_134 = arith.constant 0 : index
    %c0_135 = arith.constant 0 : index
    %103 = vector.load %arg2[%c2_132, %c1_133, %c0_134, %c0_135] : memref<4x4x8x16xbf16, #tpu.memory_space<vmem>>, vector<1x1x8x16xbf16>
    %104 = vector.shape_cast %103 : vector<1x1x8x16xbf16> to vector<8x16xbf16>
    %cst_136 = arith.constant dense<0.000000e+00> : vector<24x16xf32>
    %105 = tpu.matmul %94, %104, %cst_136 {dimension_numbers = #tpu.dot_dimension_numbers<[1], [0], [0], [1], [0, 0, 1, 1], [], []>} : vector<24x8xbf16>, vector<8x16xbf16>, vector<24x16xf32> -> vector<24x16xf32>
    %106 = arith.addf %93, %105 : vector<24x16xf32>
    %c3_137 = arith.constant 3 : index
    %c0_138 = arith.constant 0 : index
    %c0_139 = arith.constant 0 : index
    %c0_140 = arith.constant 0 : index
    %107 = vector.load %arg2[%c3_137, %c0_138, %c0_139, %c0_140] : memref<4x4x8x16xbf16, #tpu.memory_space<vmem>>, vector<1x1x8x16xbf16>
    %108 = vector.shape_cast %107 : vector<1x1x8x16xbf16> to vector<8x16xbf16>
    %cst_141 = arith.constant dense<0.000000e+00> : vector<24x16xf32>
    %109 = tpu.matmul %94, %108, %cst_141 {dimension_numbers = #tpu.dot_dimension_numbers<[1], [0], [0], [1], [0, 0, 1, 1], [], []>} : vector<24x8xbf16>, vector<8x16xbf16>, vector<24x16xf32> -> vector<24x16xf32>
    %c44 = arith.constant 44 : index
    %c0_142 = arith.constant 0 : index
    %110 = vector.load %arg1[%c44, %c0_142] : memref<80x8xbf16, #tpu.memory_space<vmem>>, vector<24x8xbf16>
    %c1_143 = arith.constant 1 : index
    %c3_144 = arith.constant 3 : index
    %c0_145 = arith.constant 0 : index
    %c0_146 = arith.constant 0 : index
    %111 = vector.load %arg2[%c1_143, %c3_144, %c0_145, %c0_146] : memref<4x4x8x16xbf16, #tpu.memory_space<vmem>>, vector<1x1x8x16xbf16>
    %112 = vector.shape_cast %111 : vector<1x1x8x16xbf16> to vector<8x16xbf16>
    %cst_147 = arith.constant dense<0.000000e+00> : vector<24x16xf32>
    %113 = tpu.matmul %110, %112, %cst_147 {dimension_numbers = #tpu.dot_dimension_numbers<[1], [0], [0], [1], [0, 0, 1, 1], [], []>} : vector<24x8xbf16>, vector<8x16xbf16>, vector<24x16xf32> -> vector<24x16xf32>
    %114 = arith.addf %102, %113 : vector<24x16xf32>
    %c3_148 = arith.constant 3 : index
    %c1_149 = arith.constant 1 : index
    %c0_150 = arith.constant 0 : index
    %c0_151 = arith.constant 0 : index
    %115 = vector.load %arg2[%c3_148, %c1_149, %c0_150, %c0_151] : memref<4x4x8x16xbf16, #tpu.memory_space<vmem>>, vector<1x1x8x16xbf16>
    %116 = vector.shape_cast %115 : vector<1x1x8x16xbf16> to vector<8x16xbf16>
    %cst_152 = arith.constant dense<0.000000e+00> : vector<24x16xf32>
    %117 = tpu.matmul %110, %116, %cst_152 {dimension_numbers = #tpu.dot_dimension_numbers<[1], [0], [0], [1], [0, 0, 1, 1], [], []>} : vector<24x8xbf16>, vector<8x16xbf16>, vector<24x16xf32> -> vector<24x16xf32>
    %118 = arith.addf %109, %117 : vector<24x16xf32>
    %c48 = arith.constant 48 : index
    %c0_153 = arith.constant 0 : index
    %119 = vector.load %arg1[%c48, %c0_153] : memref<80x8xbf16, #tpu.memory_space<vmem>>, vector<24x8xbf16>
    %c2_154 = arith.constant 2 : index
    %c2_155 = arith.constant 2 : index
    %c0_156 = arith.constant 0 : index
    %c0_157 = arith.constant 0 : index
    %120 = vector.load %arg2[%c2_154, %c2_155, %c0_156, %c0_157] : memref<4x4x8x16xbf16, #tpu.memory_space<vmem>>, vector<1x1x8x16xbf16>
    %121 = vector.shape_cast %120 : vector<1x1x8x16xbf16> to vector<8x16xbf16>
    %cst_158 = arith.constant dense<0.000000e+00> : vector<24x16xf32>
    %122 = tpu.matmul %119, %121, %cst_158 {dimension_numbers = #tpu.dot_dimension_numbers<[1], [0], [0], [1], [0, 0, 1, 1], [], []>} : vector<24x8xbf16>, vector<8x16xbf16>, vector<24x16xf32> -> vector<24x16xf32>
    %123 = arith.addf %106, %122 : vector<24x16xf32>
    %c49 = arith.constant 49 : index
    %c0_159 = arith.constant 0 : index
    %124 = vector.load %arg1[%c49, %c0_159] : memref<80x8xbf16, #tpu.memory_space<vmem>>, vector<24x8xbf16>
    %c2_160 = arith.constant 2 : index
    %c3_161 = arith.constant 3 : index
    %c0_162 = arith.constant 0 : index
    %c0_163 = arith.constant 0 : index
    %125 = vector.load %arg2[%c2_160, %c3_161, %c0_162, %c0_163] : memref<4x4x8x16xbf16, #tpu.memory_space<vmem>>, vector<1x1x8x16xbf16>
    %126 = vector.shape_cast %125 : vector<1x1x8x16xbf16> to vector<8x16xbf16>
    %cst_164 = arith.constant dense<0.000000e+00> : vector<24x16xf32>
    %127 = tpu.matmul %124, %126, %cst_164 {dimension_numbers = #tpu.dot_dimension_numbers<[1], [0], [0], [1], [0, 0, 1, 1], [], []>} : vector<24x8xbf16>, vector<8x16xbf16>, vector<24x16xf32> -> vector<24x16xf32>
    %128 = arith.addf %123, %127 : vector<24x16xf32>
    %c3_165 = arith.constant 3 : index
    %c2_166 = arith.constant 2 : index
    %c0_167 = arith.constant 0 : index
    %c0_168 = arith.constant 0 : index
    %129 = vector.load %arg2[%c3_165, %c2_166, %c0_167, %c0_168] : memref<4x4x8x16xbf16, #tpu.memory_space<vmem>>, vector<1x1x8x16xbf16>
    %130 = vector.shape_cast %129 : vector<1x1x8x16xbf16> to vector<8x16xbf16>
    %cst_169 = arith.constant dense<0.000000e+00> : vector<24x16xf32>
    %131 = tpu.matmul %124, %130, %cst_169 {dimension_numbers = #tpu.dot_dimension_numbers<[1], [0], [0], [1], [0, 0, 1, 1], [], []>} : vector<24x8xbf16>, vector<8x16xbf16>, vector<24x16xf32> -> vector<24x16xf32>
    %132 = arith.addf %118, %131 : vector<24x16xf32>
    %c50 = arith.constant 50 : index
    %c0_170 = arith.constant 0 : index
    %133 = vector.load %arg1[%c50, %c0_170] : memref<80x8xbf16, #tpu.memory_space<vmem>>, vector<24x8xbf16>
    %c3_171 = arith.constant 3 : index
    %c3_172 = arith.constant 3 : index
    %c0_173 = arith.constant 0 : index
    %c0_174 = arith.constant 0 : index
    %134 = vector.load %arg2[%c3_171, %c3_172, %c0_173, %c0_174] : memref<4x4x8x16xbf16, #tpu.memory_space<vmem>>, vector<1x1x8x16xbf16>
    %135 = vector.shape_cast %134 : vector<1x1x8x16xbf16> to vector<8x16xbf16>
    %cst_175 = arith.constant dense<0.000000e+00> : vector<24x16xf32>
    %136 = tpu.matmul %133, %135, %cst_175 {dimension_numbers = #tpu.dot_dimension_numbers<[1], [0], [0], [1], [0, 0, 1, 1], [], []>} : vector<24x8xbf16>, vector<8x16xbf16>, vector<24x16xf32> -> vector<24x16xf32>
    %137 = arith.addf %132, %136 : vector<24x16xf32>
    %138 = tpu.iota {dimensions = array<i32: 0>} : vector<24x1xi32>
    %c6_i32 = arith.constant 6 : i32
    %c0_i32 = arith.constant 0 : i32
    %139 = arith.cmpi eq, %c6_i32, %c0_i32 : i32
    %c1_i32 = arith.constant 1 : i32
    %140 = arith.select %139, %c1_i32, %c6_i32 : i32
    %141 = vector.broadcast %140 : i32 to vector<24x1xi32>
    %142 = arith.remsi %138, %141 : vector<24x1xi32>
    %c0_i32_176 = arith.constant 0 : i32
    %143 = vector.broadcast %c0_i32_176 : i32 to vector<24x1xi32>
    %144 = arith.cmpi ne, %142, %143 : vector<24x1xi32>
    %c0_i32_177 = arith.constant 0 : i32
    %145 = vector.broadcast %c0_i32_177 : i32 to vector<24x1xi32>
    %146 = arith.cmpi slt, %142, %145 : vector<24x1xi32>
    %c0_i32_178 = arith.constant 0 : i32
    %147 = arith.cmpi slt, %140, %c0_i32_178 : i32
    %148 = vector.broadcast %147 : i1 to vector<24x1xi1>
    %149 = vector.broadcast %148 : vector<24x1xi1> to vector<24x1xi1>
    %150 = arith.xori %146, %149 : vector<24x1xi1>
    %151 = arith.andi %150, %144 : vector<24x1xi1>
    %152 = vector.broadcast %140 : i32 to vector<24x1xi32>
    %153 = arith.addi %142, %152 : vector<24x1xi32>
    %154 = arith.select %151, %153, %142 : vector<24x1xi1>, vector<24x1xi32>
    %c4_i32 = arith.constant 4 : i32
    %155 = vector.broadcast %c4_i32 : i32 to vector<24x1xi32>
    %156 = arith.cmpi slt, %154, %155 : vector<24x1xi32>
    %cst_179 = arith.constant 0.000000e+00 : f32
    %157 = vector.shape_cast %156 : vector<24x1xi1> to vector<24x1xi1>
    %158 = vector.broadcast %157 : vector<24x1xi1> to vector<24x16xi1>
    %159 = vector.broadcast %cst_179 : f32 to vector<24x16xf32>
    %160 = arith.select %158, %29, %159 : vector<24x16xi1>, vector<24x16xf32>
    %cst_180 = arith.constant dense<0.000000e+00> : vector<16xf32>
    %161 = vector.multi_reduction <add>, %160, %cst_180 [0] : vector<24x16xf32> to vector<16xf32>
    %162 = vector.shape_cast %161 : vector<16xf32> to vector<1x16xf32>
    %cst_181 = arith.constant 0.000000e+00 : f32
    %163 = vector.shape_cast %156 : vector<24x1xi1> to vector<24x1xi1>
    %164 = vector.broadcast %163 : vector<24x1xi1> to vector<24x16xi1>
    %165 = vector.broadcast %cst_181 : f32 to vector<24x16xf32>
    %166 = arith.select %164, %45, %165 : vector<24x16xi1>, vector<24x16xf32>
    %cst_182 = arith.constant dense<0.000000e+00> : vector<16xf32>
    %167 = vector.multi_reduction <add>, %166, %cst_182 [0] : vector<24x16xf32> to vector<16xf32>
    %168 = vector.shape_cast %167 : vector<16xf32> to vector<1x16xf32>
    %169 = arith.addf %162, %168 : vector<1x16xf32>
    %cst_183 = arith.constant 0.000000e+00 : f32
    %170 = vector.shape_cast %156 : vector<24x1xi1> to vector<24x1xi1>
    %171 = vector.broadcast %170 : vector<24x1xi1> to vector<24x16xi1>
    %172 = vector.broadcast %cst_183 : f32 to vector<24x16xf32>
    %173 = arith.select %171, %59, %172 : vector<24x16xi1>, vector<24x16xf32>
    %cst_184 = arith.constant dense<0.000000e+00> : vector<16xf32>
    %174 = vector.multi_reduction <add>, %173, %cst_184 [0] : vector<24x16xf32> to vector<16xf32>
    %175 = vector.shape_cast %174 : vector<16xf32> to vector<1x16xf32>
    %176 = arith.addf %169, %175 : vector<1x16xf32>
    %cst_185 = arith.constant 0.000000e+00 : f32
    %177 = vector.shape_cast %156 : vector<24x1xi1> to vector<24x1xi1>
    %178 = vector.broadcast %177 : vector<24x1xi1> to vector<24x16xi1>
    %179 = vector.broadcast %cst_185 : f32 to vector<24x16xf32>
    %180 = arith.select %178, %68, %179 : vector<24x16xi1>, vector<24x16xf32>
    %cst_186 = arith.constant dense<0.000000e+00> : vector<16xf32>
    %181 = vector.multi_reduction <add>, %180, %cst_186 [0] : vector<24x16xf32> to vector<16xf32>
    %182 = vector.shape_cast %181 : vector<16xf32> to vector<1x16xf32>
    %183 = arith.addf %176, %182 : vector<1x16xf32>
    %cst_187 = arith.constant 0.000000e+00 : f32
    %184 = vector.shape_cast %156 : vector<24x1xi1> to vector<24x1xi1>
    %185 = vector.broadcast %184 : vector<24x1xi1> to vector<24x16xi1>
    %186 = vector.broadcast %cst_187 : f32 to vector<24x16xf32>
    %187 = arith.select %185, %98, %186 : vector<24x16xi1>, vector<24x16xf32>
    %cst_188 = arith.constant dense<0.000000e+00> : vector<16xf32>
    %188 = vector.multi_reduction <add>, %187, %cst_188 [0] : vector<24x16xf32> to vector<16xf32>
    %189 = vector.shape_cast %188 : vector<16xf32> to vector<1x16xf32>
    %190 = arith.addf %183, %189 : vector<1x16xf32>
    %cst_189 = arith.constant 0.000000e+00 : f32
    %191 = vector.shape_cast %156 : vector<24x1xi1> to vector<24x1xi1>
    %192 = vector.broadcast %191 : vector<24x1xi1> to vector<24x16xi1>
    %193 = vector.broadcast %cst_189 : f32 to vector<24x16xf32>
    %194 = arith.select %192, %114, %193 : vector<24x16xi1>, vector<24x16xf32>
    %cst_190 = arith.constant dense<0.000000e+00> : vector<16xf32>
    %195 = vector.multi_reduction <add>, %194, %cst_190 [0] : vector<24x16xf32> to vector<16xf32>
    %196 = vector.shape_cast %195 : vector<16xf32> to vector<1x16xf32>
    %197 = arith.addf %190, %196 : vector<1x16xf32>
    %cst_191 = arith.constant 0.000000e+00 : f32
    %198 = vector.shape_cast %156 : vector<24x1xi1> to vector<24x1xi1>
    %199 = vector.broadcast %198 : vector<24x1xi1> to vector<24x16xi1>
    %200 = vector.broadcast %cst_191 : f32 to vector<24x16xf32>
    %201 = arith.select %199, %128, %200 : vector<24x16xi1>, vector<24x16xf32>
    %cst_192 = arith.constant dense<0.000000e+00> : vector<16xf32>
    %202 = vector.multi_reduction <add>, %201, %cst_192 [0] : vector<24x16xf32> to vector<16xf32>
    %203 = vector.shape_cast %202 : vector<16xf32> to vector<1x16xf32>
    %204 = arith.addf %197, %203 : vector<1x16xf32>
    %cst_193 = arith.constant 0.000000e+00 : f32
    %205 = vector.shape_cast %156 : vector<24x1xi1> to vector<24x1xi1>
    %206 = vector.broadcast %205 : vector<24x1xi1> to vector<24x16xi1>
    %207 = vector.broadcast %cst_193 : f32 to vector<24x16xf32>
    %208 = arith.select %206, %137, %207 : vector<24x16xi1>, vector<24x16xf32>
    %cst_194 = arith.constant dense<0.000000e+00> : vector<16xf32>
    %209 = vector.multi_reduction <add>, %208, %cst_194 [0] : vector<24x16xf32> to vector<16xf32>
    %210 = vector.shape_cast %209 : vector<16xf32> to vector<1x16xf32>
    %211 = arith.addf %204, %210 : vector<1x16xf32>
    %cst_195 = arith.constant 7.812500e-03 : f32
    %212 = vector.broadcast %cst_195 : f32 to vector<1x16xf32>
    %213 = arith.mulf %211, %212 : vector<1x16xf32>
    %214 = vector.broadcast %213 : vector<1x16xf32> to vector<24x16xf32>
    %215 = arith.subf %29, %214 : vector<24x16xf32>
    %216 = arith.mulf %215, %215 : vector<24x16xf32>
    %cst_196 = arith.constant 0.000000e+00 : f32
    %217 = vector.shape_cast %156 : vector<24x1xi1> to vector<24x1xi1>
    %218 = vector.broadcast %217 : vector<24x1xi1> to vector<24x16xi1>
    %219 = vector.broadcast %cst_196 : f32 to vector<24x16xf32>
    %220 = arith.select %218, %216, %219 : vector<24x16xi1>, vector<24x16xf32>
    %cst_197 = arith.constant dense<0.000000e+00> : vector<16xf32>
    %221 = vector.multi_reduction <add>, %220, %cst_197 [0] : vector<24x16xf32> to vector<16xf32>
    %222 = vector.shape_cast %221 : vector<16xf32> to vector<1x16xf32>
    %223 = vector.broadcast %213 : vector<1x16xf32> to vector<24x16xf32>
    %224 = arith.subf %45, %223 : vector<24x16xf32>
    %225 = arith.mulf %224, %224 : vector<24x16xf32>
    %cst_198 = arith.constant 0.000000e+00 : f32
    %226 = vector.shape_cast %156 : vector<24x1xi1> to vector<24x1xi1>
    %227 = vector.broadcast %226 : vector<24x1xi1> to vector<24x16xi1>
    %228 = vector.broadcast %cst_198 : f32 to vector<24x16xf32>
    %229 = arith.select %227, %225, %228 : vector<24x16xi1>, vector<24x16xf32>
    %cst_199 = arith.constant dense<0.000000e+00> : vector<16xf32>
    %230 = vector.multi_reduction <add>, %229, %cst_199 [0] : vector<24x16xf32> to vector<16xf32>
    %231 = vector.shape_cast %230 : vector<16xf32> to vector<1x16xf32>
    %232 = arith.addf %222, %231 : vector<1x16xf32>
    %233 = vector.broadcast %213 : vector<1x16xf32> to vector<24x16xf32>
    %234 = arith.subf %59, %233 : vector<24x16xf32>
    %235 = arith.mulf %234, %234 : vector<24x16xf32>
    %cst_200 = arith.constant 0.000000e+00 : f32
    %236 = vector.shape_cast %156 : vector<24x1xi1> to vector<24x1xi1>
    %237 = vector.broadcast %236 : vector<24x1xi1> to vector<24x16xi1>
    %238 = vector.broadcast %cst_200 : f32 to vector<24x16xf32>
    %239 = arith.select %237, %235, %238 : vector<24x16xi1>, vector<24x16xf32>
    %cst_201 = arith.constant dense<0.000000e+00> : vector<16xf32>
    %240 = vector.multi_reduction <add>, %239, %cst_201 [0] : vector<24x16xf32> to vector<16xf32>
    %241 = vector.shape_cast %240 : vector<16xf32> to vector<1x16xf32>
    %242 = arith.addf %232, %241 : vector<1x16xf32>
    %243 = vector.broadcast %213 : vector<1x16xf32> to vector<24x16xf32>
    %244 = arith.subf %68, %243 : vector<24x16xf32>
    %245 = arith.mulf %244, %244 : vector<24x16xf32>
    %cst_202 = arith.constant 0.000000e+00 : f32
    %246 = vector.shape_cast %156 : vector<24x1xi1> to vector<24x1xi1>
    %247 = vector.broadcast %246 : vector<24x1xi1> to vector<24x16xi1>
    %248 = vector.broadcast %cst_202 : f32 to vector<24x16xf32>
    %249 = arith.select %247, %245, %248 : vector<24x16xi1>, vector<24x16xf32>
    %cst_203 = arith.constant dense<0.000000e+00> : vector<16xf32>
    %250 = vector.multi_reduction <add>, %249, %cst_203 [0] : vector<24x16xf32> to vector<16xf32>
    %251 = vector.shape_cast %250 : vector<16xf32> to vector<1x16xf32>
    %252 = arith.addf %242, %251 : vector<1x16xf32>
    %253 = vector.broadcast %213 : vector<1x16xf32> to vector<24x16xf32>
    %254 = arith.subf %98, %253 : vector<24x16xf32>
    %255 = arith.mulf %254, %254 : vector<24x16xf32>
    %cst_204 = arith.constant 0.000000e+00 : f32
    %256 = vector.shape_cast %156 : vector<24x1xi1> to vector<24x1xi1>
    %257 = vector.broadcast %256 : vector<24x1xi1> to vector<24x16xi1>
    %258 = vector.broadcast %cst_204 : f32 to vector<24x16xf32>
    %259 = arith.select %257, %255, %258 : vector<24x16xi1>, vector<24x16xf32>
    %cst_205 = arith.constant dense<0.000000e+00> : vector<16xf32>
    %260 = vector.multi_reduction <add>, %259, %cst_205 [0] : vector<24x16xf32> to vector<16xf32>
    %261 = vector.shape_cast %260 : vector<16xf32> to vector<1x16xf32>
    %262 = arith.addf %252, %261 : vector<1x16xf32>
    %263 = vector.broadcast %213 : vector<1x16xf32> to vector<24x16xf32>
    %264 = arith.subf %114, %263 : vector<24x16xf32>
    %265 = arith.mulf %264, %264 : vector<24x16xf32>
    %cst_206 = arith.constant 0.000000e+00 : f32
    %266 = vector.shape_cast %156 : vector<24x1xi1> to vector<24x1xi1>
    %267 = vector.broadcast %266 : vector<24x1xi1> to vector<24x16xi1>
    %268 = vector.broadcast %cst_206 : f32 to vector<24x16xf32>
    %269 = arith.select %267, %265, %268 : vector<24x16xi1>, vector<24x16xf32>
    %cst_207 = arith.constant dense<0.000000e+00> : vector<16xf32>
    %270 = vector.multi_reduction <add>, %269, %cst_207 [0] : vector<24x16xf32> to vector<16xf32>
    %271 = vector.shape_cast %270 : vector<16xf32> to vector<1x16xf32>
    %272 = arith.addf %262, %271 : vector<1x16xf32>
    %273 = vector.broadcast %213 : vector<1x16xf32> to vector<24x16xf32>
    %274 = arith.subf %128, %273 : vector<24x16xf32>
    %275 = arith.mulf %274, %274 : vector<24x16xf32>
    %cst_208 = arith.constant 0.000000e+00 : f32
    %276 = vector.shape_cast %156 : vector<24x1xi1> to vector<24x1xi1>
    %277 = vector.broadcast %276 : vector<24x1xi1> to vector<24x16xi1>
    %278 = vector.broadcast %cst_208 : f32 to vector<24x16xf32>
    %279 = arith.select %277, %275, %278 : vector<24x16xi1>, vector<24x16xf32>
    %cst_209 = arith.constant dense<0.000000e+00> : vector<16xf32>
    %280 = vector.multi_reduction <add>, %279, %cst_209 [0] : vector<24x16xf32> to vector<16xf32>
    %281 = vector.shape_cast %280 : vector<16xf32> to vector<1x16xf32>
    %282 = arith.addf %272, %281 : vector<1x16xf32>
    %283 = vector.broadcast %213 : vector<1x16xf32> to vector<24x16xf32>
    %284 = arith.subf %137, %283 : vector<24x16xf32>
    %285 = arith.mulf %284, %284 : vector<24x16xf32>
    %cst_210 = arith.constant 0.000000e+00 : f32
    %286 = vector.shape_cast %156 : vector<24x1xi1> to vector<24x1xi1>
    %287 = vector.broadcast %286 : vector<24x1xi1> to vector<24x16xi1>
    %288 = vector.broadcast %cst_210 : f32 to vector<24x16xf32>
    %289 = arith.select %287, %285, %288 : vector<24x16xi1>, vector<24x16xf32>
    %cst_211 = arith.constant dense<0.000000e+00> : vector<16xf32>
    %290 = vector.multi_reduction <add>, %289, %cst_211 [0] : vector<24x16xf32> to vector<16xf32>
    %291 = vector.shape_cast %290 : vector<16xf32> to vector<1x16xf32>
    %292 = arith.addf %282, %291 : vector<1x16xf32>
    %cst_212 = arith.constant 7.812500e-03 : f32
    %293 = vector.broadcast %cst_212 : f32 to vector<1x16xf32>
    %294 = arith.mulf %292, %293 : vector<1x16xf32>
    %c0_213 = arith.constant 0 : index
    %c0_214 = arith.constant 0 : index
    %295 = vector.load %arg3[%c0_213, %c0_214] : memref<1x16xf32, #tpu.memory_space<vmem>>, vector<1x16xf32>
    %cst_215 = arith.constant 9.99999974E-6 : f32
    %296 = vector.broadcast %cst_215 : f32 to vector<1x16xf32>
    %297 = arith.addf %294, %296 : vector<1x16xf32>
    %298 = math.rsqrt %297 : vector<1x16xf32>
    %299 = arith.mulf %295, %298 : vector<1x16xf32>
    %c0_216 = arith.constant 0 : index
    %c0_217 = arith.constant 0 : index
    %300 = vector.load %arg4[%c0_216, %c0_217] : memref<1x16xf32, #tpu.memory_space<vmem>>, vector<1x16xf32>
    %301 = arith.mulf %213, %299 : vector<1x16xf32>
    %302 = arith.subf %300, %301 : vector<1x16xf32>
    %303 = vector.broadcast %299 : vector<1x16xf32> to vector<24x16xf32>
    %304 = arith.mulf %29, %303 : vector<24x16xf32>
    %305 = vector.broadcast %302 : vector<1x16xf32> to vector<24x16xf32>
    %306 = arith.addf %304, %305 : vector<24x16xf32>
    %cst_218 = arith.constant 0.000000e+00 : f32
    %307 = vector.broadcast %cst_218 : f32 to vector<24x16xf32>
    %308 = arith.cmpf oge, %306, %307 : vector<24x16xf32>
    %cst_219 = arith.constant 2.000000e-01 : f32
    %309 = vector.broadcast %cst_219 : f32 to vector<24x16xf32>
    %310 = arith.mulf %309, %306 : vector<24x16xf32>
    %311 = arith.select %308, %306, %310 : vector<24x16xi1>, vector<24x16xf32>
    %312 = arith.truncf %311 : vector<24x16xf32> to vector<24x16xbf16>
    %c0_220 = arith.constant 0 : index
    %c0_221 = arith.constant 0 : index
    %c0_222 = arith.constant 0 : index
    %313 = vector.load %arg5[%c0_220, %c0_221, %c0_222] : memref<4x48x16xbf16, #tpu.memory_space<vmem>>, vector<1x24x16xbf16>
    %314 = vector.shape_cast %313 : vector<1x24x16xbf16> to vector<24x16xbf16>
    %315 = vector.shape_cast %312 : vector<24x16xbf16> to vector<1x24x16xbf16>
    tpu.vector_store %arg5[%c0_220, %c0_221, %c0_222], %315 {strides = array<i32>} : memref<4x48x16xbf16, #tpu.memory_space<vmem>>, vector<1x24x16xbf16>,
    %316 = vector.broadcast %299 : vector<1x16xf32> to vector<24x16xf32>
    %317 = arith.mulf %45, %316 : vector<24x16xf32>
    %318 = vector.broadcast %302 : vector<1x16xf32> to vector<24x16xf32>
    %319 = arith.addf %317, %318 : vector<24x16xf32>
    %cst_223 = arith.constant 0.000000e+00 : f32
    %320 = vector.broadcast %cst_223 : f32 to vector<24x16xf32>
    %321 = arith.cmpf oge, %319, %320 : vector<24x16xf32>
    %cst_224 = arith.constant 2.000000e-01 : f32
    %322 = vector.broadcast %cst_224 : f32 to vector<24x16xf32>
    %323 = arith.mulf %322, %319 : vector<24x16xf32>
    %324 = arith.select %321, %319, %323 : vector<24x16xi1>, vector<24x16xf32>
    %325 = arith.truncf %324 : vector<24x16xf32> to vector<24x16xbf16>
    %c1_225 = arith.constant 1 : index
    %c0_226 = arith.constant 0 : index
    %c0_227 = arith.constant 0 : index
    %326 = vector.load %arg5[%c1_225, %c0_226, %c0_227] : memref<4x48x16xbf16, #tpu.memory_space<vmem>>, vector<1x24x16xbf16>
    %327 = vector.shape_cast %326 : vector<1x24x16xbf16> to vector<24x16xbf16>
    %328 = vector.shape_cast %325 : vector<24x16xbf16> to vector<1x24x16xbf16>
    tpu.vector_store %arg5[%c1_225, %c0_226, %c0_227], %328 {strides = array<i32>} : memref<4x48x16xbf16, #tpu.memory_space<vmem>>, vector<1x24x16xbf16>,
    %329 = vector.broadcast %299 : vector<1x16xf32> to vector<24x16xf32>
    %330 = arith.mulf %59, %329 : vector<24x16xf32>
    %331 = vector.broadcast %302 : vector<1x16xf32> to vector<24x16xf32>
    %332 = arith.addf %330, %331 : vector<24x16xf32>
    %cst_228 = arith.constant 0.000000e+00 : f32
    %333 = vector.broadcast %cst_228 : f32 to vector<24x16xf32>
    %334 = arith.cmpf oge, %332, %333 : vector<24x16xf32>
    %cst_229 = arith.constant 2.000000e-01 : f32
    %335 = vector.broadcast %cst_229 : f32 to vector<24x16xf32>
    %336 = arith.mulf %335, %332 : vector<24x16xf32>
    %337 = arith.select %334, %332, %336 : vector<24x16xi1>, vector<24x16xf32>
    %338 = arith.truncf %337 : vector<24x16xf32> to vector<24x16xbf16>
    %c2_230 = arith.constant 2 : index
    %c0_231 = arith.constant 0 : index
    %c0_232 = arith.constant 0 : index
    %339 = vector.load %arg5[%c2_230, %c0_231, %c0_232] : memref<4x48x16xbf16, #tpu.memory_space<vmem>>, vector<1x24x16xbf16>
    %340 = vector.shape_cast %339 : vector<1x24x16xbf16> to vector<24x16xbf16>
    %341 = vector.shape_cast %338 : vector<24x16xbf16> to vector<1x24x16xbf16>
    tpu.vector_store %arg5[%c2_230, %c0_231, %c0_232], %341 {strides = array<i32>} : memref<4x48x16xbf16, #tpu.memory_space<vmem>>, vector<1x24x16xbf16>,
    %342 = vector.broadcast %299 : vector<1x16xf32> to vector<24x16xf32>
    %343 = arith.mulf %68, %342 : vector<24x16xf32>
    %344 = vector.broadcast %302 : vector<1x16xf32> to vector<24x16xf32>
    %345 = arith.addf %343, %344 : vector<24x16xf32>
    %cst_233 = arith.constant 0.000000e+00 : f32
    %346 = vector.broadcast %cst_233 : f32 to vector<24x16xf32>
    %347 = arith.cmpf oge, %345, %346 : vector<24x16xf32>
    %cst_234 = arith.constant 2.000000e-01 : f32
    %348 = vector.broadcast %cst_234 : f32 to vector<24x16xf32>
    %349 = arith.mulf %348, %345 : vector<24x16xf32>
    %350 = arith.select %347, %345, %349 : vector<24x16xi1>, vector<24x16xf32>
    %351 = arith.truncf %350 : vector<24x16xf32> to vector<24x16xbf16>
    %c3_235 = arith.constant 3 : index
    %c0_236 = arith.constant 0 : index
    %c0_237 = arith.constant 0 : index
    %352 = vector.load %arg5[%c3_235, %c0_236, %c0_237] : memref<4x48x16xbf16, #tpu.memory_space<vmem>>, vector<1x24x16xbf16>
    %353 = vector.shape_cast %352 : vector<1x24x16xbf16> to vector<24x16xbf16>
    %354 = vector.shape_cast %351 : vector<24x16xbf16> to vector<1x24x16xbf16>
    tpu.vector_store %arg5[%c3_235, %c0_236, %c0_237], %354 {strides = array<i32>} : memref<4x48x16xbf16, #tpu.memory_space<vmem>>, vector<1x24x16xbf16>,
    %355 = vector.broadcast %299 : vector<1x16xf32> to vector<24x16xf32>
    %356 = arith.mulf %98, %355 : vector<24x16xf32>
    %357 = vector.broadcast %302 : vector<1x16xf32> to vector<24x16xf32>
    %358 = arith.addf %356, %357 : vector<24x16xf32>
    %cst_238 = arith.constant 0.000000e+00 : f32
    %359 = vector.broadcast %cst_238 : f32 to vector<24x16xf32>
    %360 = arith.cmpf oge, %358, %359 : vector<24x16xf32>
    %cst_239 = arith.constant 2.000000e-01 : f32
    %361 = vector.broadcast %cst_239 : f32 to vector<24x16xf32>
    %362 = arith.mulf %361, %358 : vector<24x16xf32>
    %363 = arith.select %360, %358, %362 : vector<24x16xi1>, vector<24x16xf32>
    %364 = arith.truncf %363 : vector<24x16xf32> to vector<24x16xbf16>
    %c0_240 = arith.constant 0 : index
    %c24 = arith.constant 24 : index
    %c0_241 = arith.constant 0 : index
    %365 = vector.load %arg5[%c0_240, %c24, %c0_241] : memref<4x48x16xbf16, #tpu.memory_space<vmem>>, vector<1x24x16xbf16>
    %366 = vector.shape_cast %365 : vector<1x24x16xbf16> to vector<24x16xbf16>
    %367 = vector.shape_cast %364 : vector<24x16xbf16> to vector<1x24x16xbf16>
    tpu.vector_store %arg5[%c0_240, %c24, %c0_241], %367 {strides = array<i32>} : memref<4x48x16xbf16, #tpu.memory_space<vmem>>, vector<1x24x16xbf16>,
    %368 = vector.broadcast %299 : vector<1x16xf32> to vector<24x16xf32>
    %369 = arith.mulf %114, %368 : vector<24x16xf32>
    %370 = vector.broadcast %302 : vector<1x16xf32> to vector<24x16xf32>
    %371 = arith.addf %369, %370 : vector<24x16xf32>
    %cst_242 = arith.constant 0.000000e+00 : f32
    %372 = vector.broadcast %cst_242 : f32 to vector<24x16xf32>
    %373 = arith.cmpf oge, %371, %372 : vector<24x16xf32>
    %cst_243 = arith.constant 2.000000e-01 : f32
    %374 = vector.broadcast %cst_243 : f32 to vector<24x16xf32>
    %375 = arith.mulf %374, %371 : vector<24x16xf32>
    %376 = arith.select %373, %371, %375 : vector<24x16xi1>, vector<24x16xf32>
    %377 = arith.truncf %376 : vector<24x16xf32> to vector<24x16xbf16>
    %c1_244 = arith.constant 1 : index
    %c24_245 = arith.constant 24 : index
    %c0_246 = arith.constant 0 : index
    %378 = vector.load %arg5[%c1_244, %c24_245, %c0_246] : memref<4x48x16xbf16, #tpu.memory_space<vmem>>, vector<1x24x16xbf16>
    %379 = vector.shape_cast %378 : vector<1x24x16xbf16> to vector<24x16xbf16>
    %380 = vector.shape_cast %377 : vector<24x16xbf16> to vector<1x24x16xbf16>
    tpu.vector_store %arg5[%c1_244, %c24_245, %c0_246], %380 {strides = array<i32>} : memref<4x48x16xbf16, #tpu.memory_space<vmem>>, vector<1x24x16xbf16>,
    %381 = vector.broadcast %299 : vector<1x16xf32> to vector<24x16xf32>
    %382 = arith.mulf %128, %381 : vector<24x16xf32>
    %383 = vector.broadcast %302 : vector<1x16xf32> to vector<24x16xf32>
    %384 = arith.addf %382, %383 : vector<24x16xf32>
    %cst_247 = arith.constant 0.000000e+00 : f32
    %385 = vector.broadcast %cst_247 : f32 to vector<24x16xf32>
    %386 = arith.cmpf oge, %384, %385 : vector<24x16xf32>
    %cst_248 = arith.constant 2.000000e-01 : f32
    %387 = vector.broadcast %cst_248 : f32 to vector<24x16xf32>
    %388 = arith.mulf %387, %384 : vector<24x16xf32>
    %389 = arith.select %386, %384, %388 : vector<24x16xi1>, vector<24x16xf32>
    %390 = arith.truncf %389 : vector<24x16xf32> to vector<24x16xbf16>
    %c2_249 = arith.constant 2 : index
    %c24_250 = arith.constant 24 : index
    %c0_251 = arith.constant 0 : index
    %391 = vector.load %arg5[%c2_249, %c24_250, %c0_251] : memref<4x48x16xbf16, #tpu.memory_space<vmem>>, vector<1x24x16xbf16>
    %392 = vector.shape_cast %391 : vector<1x24x16xbf16> to vector<24x16xbf16>
    %393 = vector.shape_cast %390 : vector<24x16xbf16> to vector<1x24x16xbf16>
    tpu.vector_store %arg5[%c2_249, %c24_250, %c0_251], %393 {strides = array<i32>} : memref<4x48x16xbf16, #tpu.memory_space<vmem>>, vector<1x24x16xbf16>,
    %394 = vector.broadcast %299 : vector<1x16xf32> to vector<24x16xf32>
    %395 = arith.mulf %137, %394 : vector<24x16xf32>
    %396 = vector.broadcast %302 : vector<1x16xf32> to vector<24x16xf32>
    %397 = arith.addf %395, %396 : vector<24x16xf32>
    %cst_252 = arith.constant 0.000000e+00 : f32
    %398 = vector.broadcast %cst_252 : f32 to vector<24x16xf32>
    %399 = arith.cmpf oge, %397, %398 : vector<24x16xf32>
    %cst_253 = arith.constant 2.000000e-01 : f32
    %400 = vector.broadcast %cst_253 : f32 to vector<24x16xf32>
    %401 = arith.mulf %400, %397 : vector<24x16xf32>
    %402 = arith.select %399, %397, %401 : vector<24x16xi1>, vector<24x16xf32>
    %403 = arith.truncf %402 : vector<24x16xf32> to vector<24x16xbf16>
    %c3_254 = arith.constant 3 : index
    %c24_255 = arith.constant 24 : index
    %c0_256 = arith.constant 0 : index
    %404 = vector.load %arg5[%c3_254, %c24_255, %c0_256] : memref<4x48x16xbf16, #tpu.memory_space<vmem>>, vector<1x24x16xbf16>
    %405 = vector.shape_cast %404 : vector<1x24x16xbf16> to vector<24x16xbf16>
    %406 = vector.shape_cast %403 : vector<24x16xbf16> to vector<1x24x16xbf16>
    tpu.vector_store %arg5[%c3_254, %c24_255, %c0_256], %406 {strides = array<i32>} : memref<4x48x16xbf16, #tpu.memory_space<vmem>>, vector<1x24x16xbf16>,
    return
  }
  func.func @transform_0(%arg0: i32) -> (i32, i32) {
    %c0_i32 = arith.constant 0 : i32
    %c0_i32_0 = arith.constant 0 : i32
    %c0_i32_1 = arith.constant 0 : i32
    return %c0_i32, %c0_i32_0 : i32, i32
  }
  func.func @transform_1(%arg0: i32) -> (i32, i32, i32, i32) {
    %c0_i32 = arith.constant 0 : i32
    %c0_i32_0 = arith.constant 0 : i32
    %c0_i32_1 = arith.constant 0 : i32
    %c0_i32_2 = arith.constant 0 : i32
    return %c0_i32, %c0_i32_0, %c0_i32_1, %arg0 : i32, i32, i32, i32
  }
  func.func @transform_2(%arg0: i32) -> (i32, i32) {
    %c0_i32 = arith.constant 0 : i32
    %c0_i32_0 = arith.constant 0 : i32
    return %c0_i32, %arg0 : i32, i32
  }
  func.func @transform_3(%arg0: i32) -> (i32, i32) {
    %c0_i32 = arith.constant 0 : i32
    %c0_i32_0 = arith.constant 0 : i32
    return %c0_i32, %arg0 : i32, i32
  }
  func.func @transform_4(%arg0: i32) -> (i32, i32, i32) {
    %c0_i32 = arith.constant 0 : i32
    %c0_i32_0 = arith.constant 0 : i32
    %c0_i32_1 = arith.constant 0 : i32
    return %c0_i32, %c0_i32_0, %arg0 : i32, i32, i32
  }
}

</mosaic_0001>

<llo_original>
// kernel: tpu_custom_call.1
$region0: #{tpu_custom_call.1}
  #allocation0 [shape = 'u32[]', space=smem, size = 0x4, offset = 0x4, fixed_abs, tag = 'smem constant byte address 0x4 - core index']
  #allocation1 [shape = 'u32[144,128]{1,0:T(1,128)}', space=vmem, size = 0x12000, scoped, tag = 'internal scratch']
  %s0 = inlined_call_operand.vmem [shape: bf16[80,8], index: 0, kind: input, shape index: {}]
  %s1 = inlined_call_operand.hbm [shape: bf16[4,4,8,16], index: 1, kind: input, shape index: {}]
  %s2 = inlined_call_operand.vmem [shape: f32[1,16], index: 2, kind: input, shape index: {}]
  %s3 = inlined_call_operand.vmem [shape: f32[1,16], index: 3, kind: input, shape index: {}]
  %s4 = inlined_call_operand.vmem [shape: bf16[4,48,16], index: 4, kind: output, shape index: {}]
  %s5 = sld [smem:[#allocation0]]
  $region30: #{tpu_custom_call.1} parent=0
    _
  %s7 = ssub.s32 1, %s5
  %s8 = scalar_select 0, %s7, %s5
  $region1: #{tpu_custom_call.1} parent=0
    #allocation2 [shape = 'u8[32768]{0}', space=vmem, size = 0x8000, scoped, tag = 'input window, operand 1, single buffered']
    #allocation3 [shape = 's32[1]{0}', space=sflag, size = 0x4, scoped, tag = 'scoped memory for tpu_custom_call.1']
    %9 = vsyncpa [#allocation3], 0
    // Predicated region
    $region2: #{tpu_custom_call.1} parent=1 // pred_check
      _
    $region3: #{tpu_custom_call.1} parent=1 // pred_check_branch
      %11 = sbr.rel (0) target = $region5
    $region4: #{tpu_custom_call.1} parent=1 // pred_region
      _
    $region5: #{tpu_custom_call.1} parent=1 // pred_fallthru
      _
    // Predicated region
    $region6: #{tpu_custom_call.1} parent=1 // pred_check
      _
    $region7: #{tpu_custom_call.1} parent=1 // pred_check_branch
      %13 = sbr.rel (0) target = $region9
    $region8: #{tpu_custom_call.1} parent=1 // pred_region
      %s15 = ssub.s32 1024, 1024
      %16 = vsyncadd [#allocation3], %s15
      %s17 = sshll.u32 [#allocation2], 4
      %s18 = int_to_ptr.vmem [resolvable:$true] %s17
      %23 = dma.hbm_to_vmem [thread:$0]  %s1, 1024, %s18, [#allocation3], 64, 64, 4
    $region9: #{tpu_custom_call.1} parent=1 // pred_fallthru
      _
    // Predicated region
    $region10: #{tpu_custom_call.1} parent=1 // pred_check
      _
    $region11: #{tpu_custom_call.1} parent=1 // pred_check_branch
      %25 = sbr.rel (0) target = $region13
    $region12: #{tpu_custom_call.1} parent=1 // pred_region
      _
    $region13: #{tpu_custom_call.1} parent=1 // pred_fallthru
      _
    // Predicated region
    $region14: #{tpu_custom_call.1} parent=1 // pred_check
      _
    $region15: #{tpu_custom_call.1} parent=1 // pred_check_branch
      %27 = sbr.rel (0) target = $region17
    $region16: #{tpu_custom_call.1} parent=1 // pred_region
      _
    $region17: #{tpu_custom_call.1} parent=1 // pred_fallthru
      _
    // Predicated region
    $region18: #{tpu_custom_call.1} parent=1 // pred_check
      _
    $region19: #{tpu_custom_call.1} parent=1 // pred_check_branch
      %29 = sbr.rel (0) target = $region21
    $region20: #{tpu_custom_call.1} parent=1 // pred_region
      %30 = dma.done [#allocation3], 1024
    $region21: #{tpu_custom_call.1} parent=1 // pred_fallthru
      _
    %v32 = vld [vmem:[%s0] sm:$0xf]
    %v33 = vld [vmem:[%s0 + $0x4] sm:$0xf]
    %v34 = vld [vmem:[%s0 + $0x8] sm:$0xf]
    %v35 = vld [vmem:[#allocation2] sm:$0xf]
    %v36 = vld [vmem:[%s0 + $0xc] sm:$0x1]
    %s37 = scalar_lea.vmem [#allocation2], 4
    %v38 = vld [vmem:[%s37] sm:$0xf]
    %v43 = vunpack.c.l.b16 %v32
    %v44 = vunpack.c.l.b16 %v33
    %v45 = vunpack.c.l.b16 %v34
    %v46 = vunpack.c.l.b16 %v36
    %v47 = vpack.c.b16 %v44, %v43
    %v48 = vpack.c.b16 %v46, %v45
    %vm49 = vsmask.f32 7424
    %v51 = vshrl.u32 %v47, 16
    %v53 = vshll.u32 %v47, 16
    %v55 = vrot.slane %v53, 1
    %v56 = vor.u32 %v51, %v55
    %v58 = vshll.u32 %v48, 16
    %v60 = vrot.slane %v58, 1
    %v61 = vsel %vm49, %v56, %v60
    %v62 = vshrl.u32 %v48, 16
    %v64 = vor.u32 %v62, %v60
    %vm65 = vcmask 64512
    %v67 = vsel %vm65, %v61, 0
    %v70 = vsel %vm65, %v64, 0
    %vm72 = vcmask 1043456
    %v74 = vsel %vm72, %v38, 0
    %76 = vmatprep.subr.bf16.mxu0 0
    %77 = vmatpush1.bf16.msra.mxu0 %v74
    %78 = vmatprep.subr.bf16.mxu0 0
    %79 = vmatpush1.bf16.msra.mxu0 0
    %80 = vmatprep.subr.bf16.mxu0 0
    %81 = vmatpush1.bf16.msra.mxu0 0
    %82 = vmatprep.subr.bf16.mxu0 0
    %83 = vmatpush1.bf16.msra.mxu0 0
    %84 = vmatprep.subr.bf16.mxu0 0
    %85 = vmatpush1.bf16.msra.mxu0 0
    %86 = vmatprep.subr.bf16.mxu0 0
    %87 = vmatpush1.bf16.msra.mxu0 0
    %88 = vmatprep.subr.bf16.mxu0 0
    %89 = vmatpush1.bf16.msra.mxu0 0
    %90 = vmatprep.subr.bf16.mxu0 0
    %91 = vmatpush1.bf16.msra.mxu0 0
    %92 = vmatprep.subr.bf16.mxu0 0
    %93 = vmatpush1.bf16.msra.mxu0 0
    %94 = vmatprep.subr.bf16.mxu0 0
    %95 = vmatpush1.bf16.msra.mxu0 0
    %96 = vmatprep.subr.bf16.mxu0 0
    %97 = vmatpush1.bf16.msra.mxu0 0
    %98 = vmatprep.subr.bf16.mxu0 0
    %99 = vmatpush1.bf16.msra.mxu0 0
    %100 = vmatprep.subr.bf16.mxu0 0
    %101 = vmatpush1.bf16.msra.mxu0 0
    %102 = vmatprep.subr.bf16.mxu0 0
    %103 = vmatpush1.bf16.msra.mxu0 0
    %104 = vmatprep.subr.bf16.mxu0 0
    %105 = vmatpush1.bf16.msra.mxu0 0
    %106 = vmatprep.subr.bf16.mxu0 0
    %107 = vmatpush1.bf16.msra.mxu0 0
    %108 = vmatprep.mubr.bf16.mxu0 0
    %109 = vmatmul.mubr.bf16.gmra.mrb[0].mxu0 %v67
    %v110 = vpop.f32.mrb[0].mxu0
    %v111 = vadd.f32 0.0, %v110
    %v112 = vpop.f32.mrb[0].mxu0
    %v113 = vpop.f32.mrb[0].mxu0
    %v114 = vadd.f32 0.0, %v113
    %v115 = vpop.f32.mrb[0].mxu0
    %116 = vmatprep.mubr.bf16.mxu0 0
    %117 = vmatmul.mubr.bf16.gmra.mrb[0].mxu0 %v70
    %v118 = vpop.f32.mrb[0].mxu0
    %v119 = vadd.f32 0.0, %v118
    %v120 = vpop.f32.mrb[0].mxu0
    %v121 = vpop.f32.mrb[0].mxu0
    %v122 = vpop.f32.mrb[0].mxu0
    %123 = vdwg.mxu0
    %v124 = vpack.c.b16 %v45, %v45
    %v125 = vsel %vm65, %v47, 0
    %v128 = vsel %vm65, %v124, 0
    %v131 = vsel %vm72, %v35, 0
    %133 = vmatprep.subr.bf16.mxu0 0
    %134 = vmatpush1.bf16.msra.mxu0 %v131
    %135 = vmatprep.subr.bf16.mxu0 0
    %136 = vmatpush1.bf16.msra.mxu0 0
    %137 = vmatprep.subr.bf16.mxu0 0
    %138 = vmatpush1.bf16.msra.mxu0 0
    %139 = vmatprep.subr.bf16.mxu0 0
    %140 = vmatpush1.bf16.msra.mxu0 0
    %141 = vmatprep.subr.bf16.mxu0 0
    %142 = vmatpush1.bf16.msra.mxu0 0
    %143 = vmatprep.subr.bf16.mxu0 0
    %144 = vmatpush1.bf16.msra.mxu0 0
    %145 = vmatprep.subr.bf16.mxu0 0
    %146 = vmatpush1.bf16.msra.mxu0 0
    %147 = vmatprep.subr.bf16.mxu0 0
    %148 = vmatpush1.bf16.msra.mxu0 0
    %149 = vmatprep.subr.bf16.mxu0 0
    %150 = vmatpush1.bf16.msra.mxu0 0
    %151 = vmatprep.subr.bf16.mxu0 0
    %152 = vmatpush1.bf16.msra.mxu0 0
    %153 = vmatprep.subr.bf16.mxu0 0
    %154 = vmatpush1.bf16.msra.mxu0 0
    %155 = vmatprep.subr.bf16.mxu0 0
    %156 = vmatpush1.bf16.msra.mxu0 0
    %157 = vmatprep.subr.bf16.mxu0 0
    %158 = vmatpush1.bf16.msra.mxu0 0
    %159 = vmatprep.subr.bf16.mxu0 0
    %160 = vmatpush1.bf16.msra.mxu0 0
    %161 = vmatprep.subr.bf16.mxu0 0
    %162 = vmatpush1.bf16.msra.mxu0 0
    %163 = vmatprep.subr.bf16.mxu0 0
    %164 = vmatpush1.bf16.msra.mxu0 0
    %165 = vmatprep.mubr.bf16.mxu0 0
    %166 = vmatmul.mubr.bf16.gmra.mrb[0].mxu0 %v125
    %v167 = vpop.f32.mrb[0].mxu0
    %v168 = vadd.f32 %v111, %v167
    %v169 = vpop.f32.mrb[0].mxu0
    %v170 = vpop.f32.mrb[0].mxu0
    %v171 = vadd.f32 %v114, %v170
    %v172 = vpop.f32.mrb[0].mxu0
    %173 = vmatprep.mubr.bf16.mxu0 0
    %174 = vmatmul.mubr.bf16.gmra.mrb[0].mxu0 %v128
    %v175 = vpop.f32.mrb[0].mxu0
    %v176 = vadd.f32 %v119, %v175
    %v177 = vpop.f32.mrb[0].mxu0
    %v178 = vpop.f32.mrb[0].mxu0
    %v179 = vpop.f32.mrb[0].mxu0
    %180 = vdwg.mxu0
    %s181 = scalar_lea.vmem [#allocation2], 16
    %v182 = vld [vmem:[%s181] sm:$0xf]
    %v183 = vld [vmem:[%s0] sm:$0xe]
    %s184 = scalar_lea.vmem [#allocation2], 20
    %v185 = vld [vmem:[%s184] sm:$0xf]
    %v187 = vunpack.c.l.b16 %v183
    %v188 = vpack.c.b16 %v44, %v187
    %vm189 = vcmask 1046528
    %v190 = vrot.slane %v188, 1
    %v191 = vrot.slane %v48, 1
    %v192 = vsel %vm189, %v190, %v191
    %v194 = vsel %vm65, %v192, 0
    %v197 = vsel %vm65, %v191, 0
    %v200 = vsel %vm72, %v185, 0
    %202 = vmatprep.subr.bf16.mxu0 0
    %203 = vmatpush1.bf16.msra.mxu0 %v200
    %204 = vmatprep.subr.bf16.mxu0 0
    %205 = vmatpush1.bf16.msra.mxu0 0
    %206 = vmatprep.subr.bf16.mxu0 0
    %207 = vmatpush1.bf16.msra.mxu0 0
    %208 = vmatprep.subr.bf16.mxu0 0
    %209 = vmatpush1.bf16.msra.mxu0 0
    %210 = vmatprep.subr.bf16.mxu0 0
    %211 = vmatpush1.bf16.msra.mxu0 0
    %212 = vmatprep.subr.bf16.mxu0 0
    %213 = vmatpush1.bf16.msra.mxu0 0
    %214 = vmatprep.subr.bf16.mxu0 0
    %215 = vmatpush1.bf16.msra.mxu0 0
    %216 = vmatprep.subr.bf16.mxu0 0
    %217 = vmatpush1.bf16.msra.mxu0 0
    %218 = vmatprep.subr.bf16.mxu0 0
    %219 = vmatpush1.bf16.msra.mxu0 0
    %220 = vmatprep.subr.bf16.mxu0 0
    %221 = vmatpush1.bf16.msra.mxu0 0
    %222 = vmatprep.subr.bf16.mxu0 0
    %223 = vmatpush1.bf16.msra.mxu0 0
    %224 = vmatprep.subr.bf16.mxu0 0
    %225 = vmatpush1.bf16.msra.mxu0 0
    %226 = vmatprep.subr.bf16.mxu0 0
    %227 = vmatpush1.bf16.msra.mxu0 0
    %228 = vmatprep.subr.bf16.mxu0 0
    %229 = vmatpush1.bf16.msra.mxu0 0
    %230 = vmatprep.subr.bf16.mxu0 0
    %231 = vmatpush1.bf16.msra.mxu0 0
    %232 = vmatprep.subr.bf16.mxu0 0
    %233 = vmatpush1.bf16.msra.mxu0 0
    %234 = vmatprep.mubr.bf16.mxu0 0
    %235 = vmatmul.mubr.bf16.gmra.mrb[0].mxu0 %v194
    %v236 = vpop.f32.mrb[0].mxu0
    %v237 = vadd.f32 0.0, %v236
    %v238 = vpop.f32.mrb[0].mxu0
    %v239 = vpop.f32.mrb[0].mxu0
    %v240 = vadd.f32 0.0, %v239
    %v241 = vpop.f32.mrb[0].mxu0
    %242 = vmatprep.mubr.bf16.mxu0 0
    %243 = vmatmul.mubr.bf16.gmra.mrb[0].mxu0 %v197
    %v244 = vpop.f32.mrb[0].mxu0
    %v245 = vadd.f32 0.0, %v244
    %v246 = vpop.f32.mrb[0].mxu0
    %v247 = vpop.f32.mrb[0].mxu0
    %v248 = vpop.f32.mrb[0].mxu0
    %249 = vdwg.mxu0
    %v251 = vsel %vm72, %v182, 0
    %253 = vmatprep.subr.bf16.mxu0 0
    %254 = vmatpush1.bf16.msra.mxu0 %v251
    %255 = vmatprep.subr.bf16.mxu0 0
    %256 = vmatpush1.bf16.msra.mxu0 0
    %257 = vmatprep.subr.bf16.mxu0 0
    %258 = vmatpush1.bf16.msra.mxu0 0
    %259 = vmatprep.subr.bf16.mxu0 0
    %260 = vmatpush1.bf16.msra.mxu0 0
    %261 = vmatprep.subr.bf16.mxu0 0
    %262 = vmatpush1.bf16.msra.mxu0 0
    %263 = vmatprep.subr.bf16.mxu0 0
    %264 = vmatpush1.bf16.msra.mxu0 0
    %265 = vmatprep.subr.bf16.mxu0 0
    %266 = vmatpush1.bf16.msra.mxu0 0
    %267 = vmatprep.subr.bf16.mxu0 0
    %268 = vmatpush1.bf16.msra.mxu0 0
    %269 = vmatprep.subr.bf16.mxu0 0
    %270 = vmatpush1.bf16.msra.mxu0 0
    %271 = vmatprep.subr.bf16.mxu0 0
    %272 = vmatpush1.bf16.msra.mxu0 0
    %273 = vmatprep.subr.bf16.mxu0 0
    %274 = vmatpush1.bf16.msra.mxu0 0
    %275 = vmatprep.subr.bf16.mxu0 0
    %276 = vmatpush1.bf16.msra.mxu0 0
    %277 = vmatprep.subr.bf16.mxu0 0
    %278 = vmatpush1.bf16.msra.mxu0 0
    %279 = vmatprep.subr.bf16.mxu0 0
    %280 = vmatpush1.bf16.msra.mxu0 0
    %281 = vmatprep.subr.bf16.mxu0 0
    %282 = vmatpush1.bf16.msra.mxu0 0
    %283 = vmatprep.subr.bf16.mxu0 0
    %284 = vmatpush1.bf16.msra.mxu0 0
    %285 = vmatprep.mubr.bf16.mxu0 0
    %286 = vmatmul.mubr.bf16.gmra.mrb[0].mxu0 %v67
    %v287 = vpop.f32.mrb[0].mxu0
    %v288 = vadd.f32 %v237, %v287
    %v289 = vpop.f32.mrb[0].mxu0
    %v290 = vpop.f32.mrb[0].mxu0
    %v291 = vadd.f32 %v240, %v290
    %v292 = vpop.f32.mrb[0].mxu0
    %293 = vmatprep.mubr.bf16.mxu0 0
    %294 = vmatmul.mubr.bf16.gmra.mrb[0].mxu0 %v70
    %v295 = vpop.f32.mrb[0].mxu0
    %v296 = vadd.f32 %v245, %v295
    %v297 = vpop.f32.mrb[0].mxu0
    %v298 = vpop.f32.mrb[0].mxu0
    %v299 = vpop.f32.mrb[0].mxu0
    %300 = vdwg.mxu0
    %v301 = vld [vmem:[%s0] sm:$0x8]
    %v302 = vld [vmem:[%s0 + $0xc] sm:$0x7]
    %s303 = scalar_lea.vmem [#allocation2], 8
    %v304 = vld [vmem:[%s303] sm:$0xf]
    %v307 = vunpack.c.l.b16 %v301
    %v308 = vunpack.c.l.b16 %v302
    %v309 = vpack.c.b16 %v44, %v307
    %v310 = vpack.c.b16 %v308, %v45
    %vm311 = vcmask 1044480
    %v312 = vrot.slane %v309, 3
    %v313 = vrot.slane %v310, 3
    %v314 = vsel %vm311, %v312, %v313
    %v316 = vsel %vm65, %v314, 0
    %v319 = vsel %vm65, %v313, 0
    %v322 = vsel %vm72, %v304, 0
    %324 = vmatprep.subr.bf16.mxu0 0
    %325 = vmatpush1.bf16.msra.mxu0 %v322
    %326 = vmatprep.subr.bf16.mxu0 0
    %327 = vmatpush1.bf16.msra.mxu0 0
    %328 = vmatprep.subr.bf16.mxu0 0
    %329 = vmatpush1.bf16.msra.mxu0 0
    %330 = vmatprep.subr.bf16.mxu0 0
    %331 = vmatpush1.bf16.msra.mxu0 0
    %332 = vmatprep.subr.bf16.mxu0 0
    %333 = vmatpush1.bf16.msra.mxu0 0
    %334 = vmatprep.subr.bf16.mxu0 0
    %335 = vmatpush1.bf16.msra.mxu0 0
    %336 = vmatprep.subr.bf16.mxu0 0
    %337 = vmatpush1.bf16.msra.mxu0 0
    %338 = vmatprep.subr.bf16.mxu0 0
    %339 = vmatpush1.bf16.msra.mxu0 0
    %340 = vmatprep.subr.bf16.mxu0 0
    %341 = vmatpush1.bf16.msra.mxu0 0
    %342 = vmatprep.subr.bf16.mxu0 0
    %343 = vmatpush1.bf16.msra.mxu0 0
    %344 = vmatprep.subr.bf16.mxu0 0
    %345 = vmatpush1.bf16.msra.mxu0 0
    %346 = vmatprep.subr.bf16.mxu0 0
    %347 = vmatpush1.bf16.msra.mxu0 0
    %348 = vmatprep.subr.bf16.mxu0 0
    %349 = vmatpush1.bf16.msra.mxu0 0
    %350 = vmatprep.subr.bf16.mxu0 0
    %351 = vmatpush1.bf16.msra.mxu0 0
    %352 = vmatprep.subr.bf16.mxu0 0
    %353 = vmatpush1.bf16.msra.mxu0 0
    %354 = vmatprep.subr.bf16.mxu0 0
    %355 = vmatpush1.bf16.msra.mxu0 0
    %356 = vmatprep.mubr.bf16.mxu0 0
    %357 = vmatmul.mubr.bf16.gmra.mrb[0].mxu0 %v316
    %v358 = vpop.f32.mrb[0].mxu0
    %v359 = vadd.f32 0.0, %v358
    %v360 = vpop.f32.mrb[0].mxu0
    %v361 = vpop.f32.mrb[0].mxu0
    %v362 = vadd.f32 0.0, %v361
    %v363 = vpop.f32.mrb[0].mxu0
    %364 = vmatprep.mubr.bf16.mxu0 0
    %365 = vmatmul.mubr.bf16.gmra.mrb[0].mxu0 %v319
    %v366 = vpop.f32.mrb[0].mxu0
    %v367 = vadd.f32 0.0, %v366
    %v368 = vpop.f32.mrb[0].mxu0
    %v369 = vpop.f32.mrb[0].mxu0
    %v370 = vpop.f32.mrb[0].mxu0
    %371 = vdwg.mxu0
    %v372 = vadd.f32 %v168, %v359
    %v373 = vadd.f32 %v171, %v362
    %v374 = vadd.f32 %v176, %v367
    %s375 = scalar_lea.vmem [#allocation2], 32
    %v376 = vld [vmem:[%s375] sm:$0xf]
    %v377 = vld [vmem:[%s0 + $0xc] sm:$0xf]
    %s378 = scalar_lea.vmem [#allocation2], 12
    %v379 = vld [vmem:[%s378] sm:$0xf]
    %v381 = vunpack.c.l.b16 %v377
    %v382 = vpack.c.b16 %v381, %v45
    %vm383 = vsmask.f32 4352
    %v385 = vshrl.u32 %v309, 16
    %v387 = vrot.slane %v385, 3
    %v388 = vshll.u32 %v309, 16
    %v390 = vrot.slane %v388, 4
    %v391 = vor.u32 %v387, %v390
    %v393 = vshrl.u32 %v382, 16
    %v395 = vrot.slane %v393, 3
    %v396 = vshll.u32 %v382, 16
    %v398 = vrot.slane %v396, 4
    %v399 = vor.u32 %v395, %v398
    %v400 = vsel %vm383, %v391, %v399
    %v402 = vsel %vm65, %v400, 0
    %v405 = vsel %vm65, %v399, 0
    %v408 = vsel %vm72, %v379, 0
    %410 = vmatprep.subr.bf16.mxu0 0
    %411 = vmatpush1.bf16.msra.mxu0 %v408
    %412 = vmatprep.subr.bf16.mxu0 0
    %413 = vmatpush1.bf16.msra.mxu0 0
    %414 = vmatprep.subr.bf16.mxu0 0
    %415 = vmatpush1.bf16.msra.mxu0 0
    %416 = vmatprep.subr.bf16.mxu0 0
    %417 = vmatpush1.bf16.msra.mxu0 0
    %418 = vmatprep.subr.bf16.mxu0 0
    %419 = vmatpush1.bf16.msra.mxu0 0
    %420 = vmatprep.subr.bf16.mxu0 0
    %421 = vmatpush1.bf16.msra.mxu0 0
    %422 = vmatprep.subr.bf16.mxu0 0
    %423 = vmatpush1.bf16.msra.mxu0 0
    %424 = vmatprep.subr.bf16.mxu0 0
    %425 = vmatpush1.bf16.msra.mxu0 0
    %426 = vmatprep.subr.bf16.mxu0 0
    %427 = vmatpush1.bf16.msra.mxu0 0
    %428 = vmatprep.subr.bf16.mxu0 0
    %429 = vmatpush1.bf16.msra.mxu0 0
    %430 = vmatprep.subr.bf16.mxu0 0
    %431 = vmatpush1.bf16.msra.mxu0 0
    %432 = vmatprep.subr.bf16.mxu0 0
    %433 = vmatpush1.bf16.msra.mxu0 0
    %434 = vmatprep.subr.bf16.mxu0 0
    %435 = vmatpush1.bf16.msra.mxu0 0
    %436 = vmatprep.subr.bf16.mxu0 0
    %437 = vmatpush1.bf16.msra.mxu0 0
    %438 = vmatprep.subr.bf16.mxu0 0
    %439 = vmatpush1.bf16.msra.mxu0 0
    %440 = vmatprep.subr.bf16.mxu0 0
    %441 = vmatpush1.bf16.msra.mxu0 0
    %442 = vmatprep.mubr.bf16.mxu0 0
    %443 = vmatmul.mubr.bf16.gmra.mrb[0].mxu0 %v402
    %v444 = vpop.f32.mrb[0].mxu0
    %v445 = vadd.f32 0.0, %v444
    %v446 = vpop.f32.mrb[0].mxu0
    %v447 = vpop.f32.mrb[0].mxu0
    %v448 = vadd.f32 0.0, %v447
    %v449 = vpop.f32.mrb[0].mxu0
    %450 = vmatprep.mubr.bf16.mxu0 0
    %451 = vmatmul.mubr.bf16.gmra.mrb[0].mxu0 %v405
    %v452 = vpop.f32.mrb[0].mxu0
    %v453 = vadd.f32 0.0, %v452
    %v454 = vpop.f32.mrb[0].mxu0
    %v455 = vpop.f32.mrb[0].mxu0
    %v456 = vpop.f32.mrb[0].mxu0
    %457 = vdwg.mxu0
    %v458 = vadd.f32 %v372, %v445
    %v459 = vadd.f32 %v373, %v448
    %v460 = vadd.f32 %v374, %v453
    %s461 = scalar_lea.vmem [#allocation2], 24
    %v462 = vld [vmem:[%s461] sm:$0xf]
    %v464 = vsel %vm72, %v462, 0
    %466 = vmatprep.subr.bf16.mxu0 0
    %467 = vmatpush1.bf16.msra.mxu0 %v464
    %468 = vmatprep.subr.bf16.mxu0 0
    %469 = vmatpush1.bf16.msra.mxu0 0
    %470 = vmatprep.subr.bf16.mxu0 0
    %471 = vmatpush1.bf16.msra.mxu0 0
    %472 = vmatprep.subr.bf16.mxu0 0
    %473 = vmatpush1.bf16.msra.mxu0 0
    %474 = vmatprep.subr.bf16.mxu0 0
    %475 = vmatpush1.bf16.msra.mxu0 0
    %476 = vmatprep.subr.bf16.mxu0 0
    %477 = vmatpush1.bf16.msra.mxu0 0
    %478 = vmatprep.subr.bf16.mxu0 0
    %479 = vmatpush1.bf16.msra.mxu0 0
    %480 = vmatprep.subr.bf16.mxu0 0
    %481 = vmatpush1.bf16.msra.mxu0 0
    %482 = vmatprep.subr.bf16.mxu0 0
    %483 = vmatpush1.bf16.msra.mxu0 0
    %484 = vmatprep.subr.bf16.mxu0 0
    %485 = vmatpush1.bf16.msra.mxu0 0
    %486 = vmatprep.subr.bf16.mxu0 0
    %487 = vmatpush1.bf16.msra.mxu0 0
    %488 = vmatprep.subr.bf16.mxu0 0
    %489 = vmatpush1.bf16.msra.mxu0 0
    %490 = vmatprep.subr.bf16.mxu0 0
    %491 = vmatpush1.bf16.msra.mxu0 0
    %492 = vmatprep.subr.bf16.mxu0 0
    %493 = vmatpush1.bf16.msra.mxu0 0
    %494 = vmatprep.subr.bf16.mxu0 0
    %495 = vmatpush1.bf16.msra.mxu0 0
    %496 = vmatprep.subr.bf16.mxu0 0
    %497 = vmatpush1.bf16.msra.mxu0 0
    %498 = vmatprep.mubr.bf16.mxu0 0
    %499 = vmatmul.mubr.bf16.gmra.mrb[0].mxu0 %v402
    %v500 = vpop.f32.mrb[0].mxu0
    %v501 = vadd.f32 0.0, %v500
    %v502 = vpop.f32.mrb[0].mxu0
    %v503 = vpop.f32.mrb[0].mxu0
    %v504 = vadd.f32 0.0, %v503
    %v505 = vpop.f32.mrb[0].mxu0
    %506 = vmatprep.mubr.bf16.mxu0 0
    %507 = vmatmul.mubr.bf16.gmra.mrb[0].mxu0 %v405
    %v508 = vpop.f32.mrb[0].mxu0
    %v509 = vadd.f32 0.0, %v508
    %v510 = vpop.f32.mrb[0].mxu0
    %v511 = vpop.f32.mrb[0].mxu0
    %v512 = vpop.f32.mrb[0].mxu0
    %513 = vdwg.mxu0
    %v514 = vadd.f32 %v288, %v501
    %v515 = vadd.f32 %v291, %v504
    %v516 = vadd.f32 %v296, %v509
    %s517 = scalar_lea.vmem [#allocation2], 36
    %v518 = vld [vmem:[%s517] sm:$0xf]
    %v520 = vsel %vm72, %v518, 0
    %522 = vmatprep.subr.bf16.mxu0 0
    %523 = vmatpush1.bf16.msra.mxu0 %v520
    %524 = vmatprep.subr.bf16.mxu0 0
    %525 = vmatpush1.bf16.msra.mxu0 0
    %526 = vmatprep.subr.bf16.mxu0 0
    %527 = vmatpush1.bf16.msra.mxu0 0
    %528 = vmatprep.subr.bf16.mxu0 0
    %529 = vmatpush1.bf16.msra.mxu0 0
    %530 = vmatprep.subr.bf16.mxu0 0
    %531 = vmatpush1.bf16.msra.mxu0 0
    %532 = vmatprep.subr.bf16.mxu0 0
    %533 = vmatpush1.bf16.msra.mxu0 0
    %534 = vmatprep.subr.bf16.mxu0 0
    %535 = vmatpush1.bf16.msra.mxu0 0
    %536 = vmatprep.subr.bf16.mxu0 0
    %537 = vmatpush1.bf16.msra.mxu0 0
    %538 = vmatprep.subr.bf16.mxu0 0
    %539 = vmatpush1.bf16.msra.mxu0 0
    %540 = vmatprep.subr.bf16.mxu0 0
    %541 = vmatpush1.bf16.msra.mxu0 0
    %542 = vmatprep.subr.bf16.mxu0 0
    %543 = vmatpush1.bf16.msra.mxu0 0
    %544 = vmatprep.subr.bf16.mxu0 0
    %545 = vmatpush1.bf16.msra.mxu0 0
    %546 = vmatprep.subr.bf16.mxu0 0
    %547 = vmatpush1.bf16.msra.mxu0 0
    %548 = vmatprep.subr.bf16.mxu0 0
    %549 = vmatpush1.bf16.msra.mxu0 0
    %550 = vmatprep.subr.bf16.mxu0 0
    %551 = vmatpush1.bf16.msra.mxu0 0
    %552 = vmatprep.subr.bf16.mxu0 0
    %553 = vmatpush1.bf16.msra.mxu0 0
    %554 = vmatprep.mubr.bf16.mxu0 0
    %555 = vmatmul.mubr.bf16.gmra.mrb[0].mxu0 %v402
    %v556 = vpop.f32.mrb[0].mxu0
    %v557 = vadd.f32 0.0, %v556
    %v558 = vpop.f32.mrb[0].mxu0
    %v559 = vpop.f32.mrb[0].mxu0
    %v560 = vadd.f32 0.0, %v559
    %v561 = vpop.f32.mrb[0].mxu0
    %562 = vmatprep.mubr.bf16.mxu0 0
    %563 = vmatmul.mubr.bf16.gmra.mrb[0].mxu0 %v405
    %v564 = vpop.f32.mrb[0].mxu0
    %v565 = vadd.f32 0.0, %v564
    %v566 = vpop.f32.mrb[0].mxu0
    %v567 = vpop.f32.mrb[0].mxu0
    %v568 = vpop.f32.mrb[0].mxu0
    %569 = vdwg.mxu0
    %v571 = vsel %vm72, %v376, 0
    %573 = vmatprep.subr.bf16.mxu0 0
    %574 = vmatpush1.bf16.msra.mxu0 %v571
    %575 = vmatprep.subr.bf16.mxu0 0
    %576 = vmatpush1.bf16.msra.mxu0 0
    %577 = vmatprep.subr.bf16.mxu0 0
    %578 = vmatpush1.bf16.msra.mxu0 0
    %579 = vmatprep.subr.bf16.mxu0 0
    %580 = vmatpush1.bf16.msra.mxu0 0
    %581 = vmatprep.subr.bf16.mxu0 0
    %582 = vmatpush1.bf16.msra.mxu0 0
    %583 = vmatprep.subr.bf16.mxu0 0
    %584 = vmatpush1.bf16.msra.mxu0 0
    %585 = vmatprep.subr.bf16.mxu0 0
    %586 = vmatpush1.bf16.msra.mxu0 0
    %587 = vmatprep.subr.bf16.mxu0 0
    %588 = vmatpush1.bf16.msra.mxu0 0
    %589 = vmatprep.subr.bf16.mxu0 0
    %590 = vmatpush1.bf16.msra.mxu0 0
    %591 = vmatprep.subr.bf16.mxu0 0
    %592 = vmatpush1.bf16.msra.mxu0 0
    %593 = vmatprep.subr.bf16.mxu0 0
    %594 = vmatpush1.bf16.msra.mxu0 0
    %595 = vmatprep.subr.bf16.mxu0 0
    %596 = vmatpush1.bf16.msra.mxu0 0
    %597 = vmatprep.subr.bf16.mxu0 0
    %598 = vmatpush1.bf16.msra.mxu0 0
    %599 = vmatprep.subr.bf16.mxu0 0
    %600 = vmatpush1.bf16.msra.mxu0 0
    %601 = vmatprep.subr.bf16.mxu0 0
    %602 = vmatpush1.bf16.msra.mxu0 0
    %603 = vmatprep.subr.bf16.mxu0 0
    %604 = vmatpush1.bf16.msra.mxu0 0
    %605 = vmatprep.mubr.bf16.mxu0 0
    %606 = vmatmul.mubr.bf16.gmra.mrb[0].mxu0 %v316
    %v607 = vpop.f32.mrb[0].mxu0
    %v608 = vadd.f32 %v557, %v607
    %v609 = vpop.f32.mrb[0].mxu0
    %v610 = vpop.f32.mrb[0].mxu0
    %v611 = vadd.f32 %v560, %v610
    %v612 = vpop.f32.mrb[0].mxu0
    %613 = vmatprep.mubr.bf16.mxu0 0
    %614 = vmatmul.mubr.bf16.gmra.mrb[0].mxu0 %v319
    %v615 = vpop.f32.mrb[0].mxu0
    %v616 = vadd.f32 %v565, %v615
    %v617 = vpop.f32.mrb[0].mxu0
    %v618 = vpop.f32.mrb[0].mxu0
    %v619 = vpop.f32.mrb[0].mxu0
    %620 = vdwg.mxu0
    %s621 = scalar_lea.vmem [#allocation2], 48
    %v622 = vld [vmem:[%s621] sm:$0xf]
    %s623 = scalar_lea.vmem [#allocation2], 28
    %v624 = vld [vmem:[%s623] sm:$0xf]
    %v625 = vpack.c.b16 %v45, %v44
    %v626 = vpack.c.b16 %v381, %v381
    %v628 = vsel %vm65, %v625, 0
    %v631 = vsel %vm65, %v626, 0
    %v634 = vsel %vm72, %v624, 0
    %636 = vmatprep.subr.bf16.mxu0 0
    %637 = vmatpush1.bf16.msra.mxu0 %v634
    %638 = vmatprep.subr.bf16.mxu0 0
    %639 = vmatpush1.bf16.msra.mxu0 0
    %640 = vmatprep.subr.bf16.mxu0 0
    %641 = vmatpush1.bf16.msra.mxu0 0
    %642 = vmatprep.subr.bf16.mxu0 0
    %643 = vmatpush1.bf16.msra.mxu0 0
    %644 = vmatprep.subr.bf16.mxu0 0
    %645 = vmatpush1.bf16.msra.mxu0 0
    %646 = vmatprep.subr.bf16.mxu0 0
    %647 = vmatpush1.bf16.msra.mxu0 0
    %648 = vmatprep.subr.bf16.mxu0 0
    %649 = vmatpush1.bf16.msra.mxu0 0
    %650 = vmatprep.subr.bf16.mxu0 0
    %651 = vmatpush1.bf16.msra.mxu0 0
    %652 = vmatprep.subr.bf16.mxu0 0
    %653 = vmatpush1.bf16.msra.mxu0 0
    %654 = vmatprep.subr.bf16.mxu0 0
    %655 = vmatpush1.bf16.msra.mxu0 0
    %656 = vmatprep.subr.bf16.mxu0 0
    %657 = vmatpush1.bf16.msra.mxu0 0
    %658 = vmatprep.subr.bf16.mxu0 0
    %659 = vmatpush1.bf16.msra.mxu0 0
    %660 = vmatprep.subr.bf16.mxu0 0
    %661 = vmatpush1.bf16.msra.mxu0 0
    %662 = vmatprep.subr.bf16.mxu0 0
    %663 = vmatpush1.bf16.msra.mxu0 0
    %664 = vmatprep.subr.bf16.mxu0 0
    %665 = vmatpush1.bf16.msra.mxu0 0
    %666 = vmatprep.subr.bf16.mxu0 0
    %667 = vmatpush1.bf16.msra.mxu0 0
    %668 = vmatprep.mubr.bf16.mxu0 0
    %669 = vmatmul.mubr.bf16.gmra.mrb[0].mxu0 %v628
    %v670 = vpop.f32.mrb[0].mxu0
    %v671 = vadd.f32 0.0, %v670
    %v672 = vpop.f32.mrb[0].mxu0
    %v673 = vpop.f32.mrb[0].mxu0
    %v674 = vadd.f32 0.0, %v673
    %v675 = vpop.f32.mrb[0].mxu0
    %676 = vmatprep.mubr.bf16.mxu0 0
    %677 = vmatmul.mubr.bf16.gmra.mrb[0].mxu0 %v631
    %v678 = vpop.f32.mrb[0].mxu0
    %v679 = vadd.f32 0.0, %v678
    %v680 = vpop.f32.mrb[0].mxu0
    %v681 = vpop.f32.mrb[0].mxu0
    %v682 = vpop.f32.mrb[0].mxu0
    %683 = vdwg.mxu0
    %v684 = vadd.f32 %v514, %v671
    %v685 = vadd.f32 %v515, %v674
    %v686 = vadd.f32 %v516, %v679
    %s687 = scalar_lea.vmem [#allocation2], 52
    %v688 = vld [vmem:[%s687] sm:$0xf]
    %v690 = vsel %vm72, %v688, 0
    %692 = vmatprep.subr.bf16.mxu0 0
    %693 = vmatpush1.bf16.msra.mxu0 %v690
    %694 = vmatprep.subr.bf16.mxu0 0
    %695 = vmatpush1.bf16.msra.mxu0 0
    %696 = vmatprep.subr.bf16.mxu0 0
    %697 = vmatpush1.bf16.msra.mxu0 0
    %698 = vmatprep.subr.bf16.mxu0 0
    %699 = vmatpush1.bf16.msra.mxu0 0
    %700 = vmatprep.subr.bf16.mxu0 0
    %701 = vmatpush1.bf16.msra.mxu0 0
    %702 = vmatprep.subr.bf16.mxu0 0
    %703 = vmatpush1.bf16.msra.mxu0 0
    %704 = vmatprep.subr.bf16.mxu0 0
    %705 = vmatpush1.bf16.msra.mxu0 0
    %706 = vmatprep.subr.bf16.mxu0 0
    %707 = vmatpush1.bf16.msra.mxu0 0
    %708 = vmatprep.subr.bf16.mxu0 0
    %709 = vmatpush1.bf16.msra.mxu0 0
    %710 = vmatprep.subr.bf16.mxu0 0
    %711 = vmatpush1.bf16.msra.mxu0 0
    %712 = vmatprep.subr.bf16.mxu0 0
    %713 = vmatpush1.bf16.msra.mxu0 0
    %714 = vmatprep.subr.bf16.mxu0 0
    %715 = vmatpush1.bf16.msra.mxu0 0
    %716 = vmatprep.subr.bf16.mxu0 0
    %717 = vmatpush1.bf16.msra.mxu0 0
    %718 = vmatprep.subr.bf16.mxu0 0
    %719 = vmatpush1.bf16.msra.mxu0 0
    %720 = vmatprep.subr.bf16.mxu0 0
    %721 = vmatpush1.bf16.msra.mxu0 0
    %722 = vmatprep.subr.bf16.mxu0 0
    %723 = vmatpush1.bf16.msra.mxu0 0
    %724 = vmatprep.mubr.bf16.mxu0 0
    %725 = vmatmul.mubr.bf16.gmra.mrb[0].mxu0 %v628
    %v726 = vpop.f32.mrb[0].mxu0
    %v727 = vadd.f32 0.0, %v726
    %v728 = vpop.f32.mrb[0].mxu0
    %v729 = vpop.f32.mrb[0].mxu0
    %v730 = vadd.f32 0.0, %v729
    %v731 = vpop.f32.mrb[0].mxu0
    %732 = vmatprep.mubr.bf16.mxu0 0
    %733 = vmatmul.mubr.bf16.gmra.mrb[0].mxu0 %v631
    %v734 = vpop.f32.mrb[0].mxu0
    %v735 = vadd.f32 0.0, %v734
    %v736 = vpop.f32.mrb[0].mxu0
    %v737 = vpop.f32.mrb[0].mxu0
    %v738 = vpop.f32.mrb[0].mxu0
    %739 = vdwg.mxu0
    %v741 = vsel %vm72, %v622, 0
    %743 = vmatprep.subr.bf16.mxu0 0
    %744 = vmatpush1.bf16.msra.mxu0 %v741
    %745 = vmatprep.subr.bf16.mxu0 0
    %746 = vmatpush1.bf16.msra.mxu0 0
    %747 = vmatprep.subr.bf16.mxu0 0
    %748 = vmatpush1.bf16.msra.mxu0 0
    %749 = vmatprep.subr.bf16.mxu0 0
    %750 = vmatpush1.bf16.msra.mxu0 0
    %751 = vmatprep.subr.bf16.mxu0 0
    %752 = vmatpush1.bf16.msra.mxu0 0
    %753 = vmatprep.subr.bf16.mxu0 0
    %754 = vmatpush1.bf16.msra.mxu0 0
    %755 = vmatprep.subr.bf16.mxu0 0
    %756 = vmatpush1.bf16.msra.mxu0 0
    %757 = vmatprep.subr.bf16.mxu0 0
    %758 = vmatpush1.bf16.msra.mxu0 0
    %759 = vmatprep.subr.bf16.mxu0 0
    %760 = vmatpush1.bf16.msra.mxu0 0
    %761 = vmatprep.subr.bf16.mxu0 0
    %762 = vmatpush1.bf16.msra.mxu0 0
    %763 = vmatprep.subr.bf16.mxu0 0
    %764 = vmatpush1.bf16.msra.mxu0 0
    %765 = vmatprep.subr.bf16.mxu0 0
    %766 = vmatpush1.bf16.msra.mxu0 0
    %767 = vmatprep.subr.bf16.mxu0 0
    %768 = vmatpush1.bf16.msra.mxu0 0
    %769 = vmatprep.subr.bf16.mxu0 0
    %770 = vmatpush1.bf16.msra.mxu0 0
    %771 = vmatprep.subr.bf16.mxu0 0
    %772 = vmatpush1.bf16.msra.mxu0 0
    %773 = vmatprep.subr.bf16.mxu0 0
    %774 = vmatpush1.bf16.msra.mxu0 0
    %775 = vmatprep.mubr.bf16.mxu0 0
    %776 = vmatmul.mubr.bf16.gmra.mrb[0].mxu0 %v402
    %v777 = vpop.f32.mrb[0].mxu0
    %v778 = vadd.f32 %v727, %v777
    %v779 = vpop.f32.mrb[0].mxu0
    %v780 = vpop.f32.mrb[0].mxu0
    %v781 = vadd.f32 %v730, %v780
    %v782 = vpop.f32.mrb[0].mxu0
    %783 = vmatprep.mubr.bf16.mxu0 0
    %784 = vmatmul.mubr.bf16.gmra.mrb[0].mxu0 %v405
    %v785 = vpop.f32.mrb[0].mxu0
    %v786 = vadd.f32 %v735, %v785
    %v787 = vpop.f32.mrb[0].mxu0
    %v788 = vpop.f32.mrb[0].mxu0
    %v789 = vpop.f32.mrb[0].mxu0
    %790 = vdwg.mxu0
    %v791 = vld [vmem:[%s0 + $0x4] sm:$0xc]
    %v792 = vld [vmem:[%s0 + $0x8] sm:$0xf]
    %v793 = vld [vmem:[%s0 + $0xc] sm:$0xf]
    %v794 = vld [vmem:[%s0 + $0x10] sm:$0x3]
    %s795 = scalar_lea.vmem [#allocation2], 40
    %v796 = vld [vmem:[%s795] sm:$0xf]
    %v801 = vunpack.c.l.b16 %v791
    %v802 = vunpack.c.l.b16 %v792
    %v803 = vunpack.c.l.b16 %v793
    %v804 = vunpack.c.l.b16 %v794
    %v805 = vpack.c.b16 %v802, %v801
    %v806 = vpack.c.b16 %v804, %v803
    %vm807 = vcmask 1045504
    %v808 = vrot.slane %v805, 2
    %v809 = vrot.slane %v806, 2
    %v810 = vsel %vm807, %v808, %v809
    %v812 = vsel %vm65, %v810, 0
    %v815 = vsel %vm65, %v809, 0
    %v818 = vsel %vm72, %v796, 0
    %820 = vmatprep.subr.bf16.mxu0 0
    %821 = vmatpush1.bf16.msra.mxu0 %v818
    %822 = vmatprep.subr.bf16.mxu0 0
    %823 = vmatpush1.bf16.msra.mxu0 0
    %824 = vmatprep.subr.bf16.mxu0 0
    %825 = vmatpush1.bf16.msra.mxu0 0
    %826 = vmatprep.subr.bf16.mxu0 0
    %827 = vmatpush1.bf16.msra.mxu0 0
    %828 = vmatprep.subr.bf16.mxu0 0
    %829 = vmatpush1.bf16.msra.mxu0 0
    %830 = vmatprep.subr.bf16.mxu0 0
    %831 = vmatpush1.bf16.msra.mxu0 0
    %832 = vmatprep.subr.bf16.mxu0 0
    %833 = vmatpush1.bf16.msra.mxu0 0
    %834 = vmatprep.subr.bf16.mxu0 0
    %835 = vmatpush1.bf16.msra.mxu0 0
    %836 = vmatprep.subr.bf16.mxu0 0
    %837 = vmatpush1.bf16.msra.mxu0 0
    %838 = vmatprep.subr.bf16.mxu0 0
    %839 = vmatpush1.bf16.msra.mxu0 0
    %840 = vmatprep.subr.bf16.mxu0 0
    %841 = vmatpush1.bf16.msra.mxu0 0
    %842 = vmatprep.subr.bf16.mxu0 0
    %843 = vmatpush1.bf16.msra.mxu0 0
    %844 = vmatprep.subr.bf16.mxu0 0
    %845 = vmatpush1.bf16.msra.mxu0 0
    %846 = vmatprep.subr.bf16.mxu0 0
    %847 = vmatpush1.bf16.msra.mxu0 0
    %848 = vmatprep.subr.bf16.mxu0 0
    %849 = vmatpush1.bf16.msra.mxu0 0
    %850 = vmatprep.subr.bf16.mxu0 0
    %851 = vmatpush1.bf16.msra.mxu0 0
    %852 = vmatprep.mubr.bf16.mxu0 0
    %853 = vmatmul.mubr.bf16.gmra.mrb[0].mxu0 %v812
    %v854 = vpop.f32.mrb[0].mxu0
    %v855 = vadd.f32 0.0, %v854
    %v856 = vpop.f32.mrb[0].mxu0
    %v857 = vpop.f32.mrb[0].mxu0
    %v858 = vadd.f32 0.0, %v857
    %v859 = vpop.f32.mrb[0].mxu0
    %860 = vmatprep.mubr.bf16.mxu0 0
    %861 = vmatmul.mubr.bf16.gmra.mrb[0].mxu0 %v815
    %v862 = vpop.f32.mrb[0].mxu0
    %v863 = vadd.f32 0.0, %v862
    %v864 = vpop.f32.mrb[0].mxu0
    %v865 = vpop.f32.mrb[0].mxu0
    %v866 = vpop.f32.mrb[0].mxu0
    %867 = vdwg.mxu0
    %v868 = vadd.f32 %v608, %v855
    %v869 = vadd.f32 %v611, %v858
    %v870 = vadd.f32 %v616, %v863
    %v871 = vld [vmem:[%s0 + $0x10] sm:$0x7]
    %s872 = scalar_lea.vmem [#allocation2], 44
    %v873 = vld [vmem:[%s872] sm:$0xf]
    %v875 = vunpack.c.l.b16 %v871
    %v876 = vpack.c.b16 %v875, %v803
    %vm877 = vsmask.f32 5376
    %v879 = vshrl.u32 %v805, 16
    %v881 = vrot.slane %v879, 2
    %v882 = vshll.u32 %v805, 16
    %v884 = vrot.slane %v882, 3
    %v885 = vor.u32 %v881, %v884
    %v887 = vshrl.u32 %v876, 16
    %v889 = vrot.slane %v887, 2
    %v890 = vshll.u32 %v876, 16
    %v892 = vrot.slane %v890, 3
    %v893 = vor.u32 %v889, %v892
    %v894 = vsel %vm877, %v885, %v893
    %v896 = vsel %vm65, %v894, 0
    %v899 = vsel %vm65, %v893, 0
    %v902 = vsel %vm72, %v873, 0
    %904 = vmatprep.subr.bf16.mxu0 0
    %905 = vmatpush1.bf16.msra.mxu0 %v902
    %906 = vmatprep.subr.bf16.mxu0 0
    %907 = vmatpush1.bf16.msra.mxu0 0
    %908 = vmatprep.subr.bf16.mxu0 0
    %909 = vmatpush1.bf16.msra.mxu0 0
    %910 = vmatprep.subr.bf16.mxu0 0
    %911 = vmatpush1.bf16.msra.mxu0 0
    %912 = vmatprep.subr.bf16.mxu0 0
    %913 = vmatpush1.bf16.msra.mxu0 0
    %914 = vmatprep.subr.bf16.mxu0 0
    %915 = vmatpush1.bf16.msra.mxu0 0
    %916 = vmatprep.subr.bf16.mxu0 0
    %917 = vmatpush1.bf16.msra.mxu0 0
    %918 = vmatprep.subr.bf16.mxu0 0
    %919 = vmatpush1.bf16.msra.mxu0 0
    %920 = vmatprep.subr.bf16.mxu0 0
    %921 = vmatpush1.bf16.msra.mxu0 0
    %922 = vmatprep.subr.bf16.mxu0 0
    %923 = vmatpush1.bf16.msra.mxu0 0
    %924 = vmatprep.subr.bf16.mxu0 0
    %925 = vmatpush1.bf16.msra.mxu0 0
    %926 = vmatprep.subr.bf16.mxu0 0
    %927 = vmatpush1.bf16.msra.mxu0 0
    %928 = vmatprep.subr.bf16.mxu0 0
    %929 = vmatpush1.bf16.msra.mxu0 0
    %930 = vmatprep.subr.bf16.mxu0 0
    %931 = vmatpush1.bf16.msra.mxu0 0
    %932 = vmatprep.subr.bf16.mxu0 0
    %933 = vmatpush1.bf16.msra.mxu0 0
    %934 = vmatprep.subr.bf16.mxu0 0
    %935 = vmatpush1.bf16.msra.mxu0 0
    %936 = vmatprep.mubr.bf16.mxu0 0
    %937 = vmatmul.mubr.bf16.gmra.mrb[0].mxu0 %v896
    %v938 = vpop.f32.mrb[0].mxu0
    %v939 = vadd.f32 0.0, %v938
    %v940 = vpop.f32.mrb[0].mxu0
    %v941 = vpop.f32.mrb[0].mxu0
    %v942 = vadd.f32 0.0, %v941
    %v943 = vpop.f32.mrb[0].mxu0
    %944 = vmatprep.mubr.bf16.mxu0 0
    %945 = vmatmul.mubr.bf16.gmra.mrb[0].mxu0 %v899
    %v946 = vpop.f32.mrb[0].mxu0
    %v947 = vadd.f32 0.0, %v946
    %v948 = vpop.f32.mrb[0].mxu0
    %v949 = vpop.f32.mrb[0].mxu0
    %v950 = vpop.f32.mrb[0].mxu0
    %951 = vdwg.mxu0
    %v952 = vadd.f32 %v868, %v939
    %v953 = vadd.f32 %v869, %v942
    %v954 = vadd.f32 %v870, %v947
    %s955 = scalar_lea.vmem [#allocation2], 56
    %v956 = vld [vmem:[%s955] sm:$0xf]
    %v958 = vsel %vm72, %v956, 0
    %960 = vmatprep.subr.bf16.mxu0 0
    %961 = vmatpush1.bf16.msra.mxu0 %v958
    %962 = vmatprep.subr.bf16.mxu0 0
    %963 = vmatpush1.bf16.msra.mxu0 0
    %964 = vmatprep.subr.bf16.mxu0 0
    %965 = vmatpush1.bf16.msra.mxu0 0
    %966 = vmatprep.subr.bf16.mxu0 0
    %967 = vmatpush1.bf16.msra.mxu0 0
    %968 = vmatprep.subr.bf16.mxu0 0
    %969 = vmatpush1.bf16.msra.mxu0 0
    %970 = vmatprep.subr.bf16.mxu0 0
    %971 = vmatpush1.bf16.msra.mxu0 0
    %972 = vmatprep.subr.bf16.mxu0 0
    %973 = vmatpush1.bf16.msra.mxu0 0
    %974 = vmatprep.subr.bf16.mxu0 0
    %975 = vmatpush1.bf16.msra.mxu0 0
    %976 = vmatprep.subr.bf16.mxu0 0
    %977 = vmatpush1.bf16.msra.mxu0 0
    %978 = vmatprep.subr.bf16.mxu0 0
    %979 = vmatpush1.bf16.msra.mxu0 0
    %980 = vmatprep.subr.bf16.mxu0 0
    %981 = vmatpush1.bf16.msra.mxu0 0
    %982 = vmatprep.subr.bf16.mxu0 0
    %983 = vmatpush1.bf16.msra.mxu0 0
    %984 = vmatprep.subr.bf16.mxu0 0
    %985 = vmatpush1.bf16.msra.mxu0 0
    %986 = vmatprep.subr.bf16.mxu0 0
    %987 = vmatpush1.bf16.msra.mxu0 0
    %988 = vmatprep.subr.bf16.mxu0 0
    %989 = vmatpush1.bf16.msra.mxu0 0
    %990 = vmatprep.subr.bf16.mxu0 0
    %991 = vmatpush1.bf16.msra.mxu0 0
    %992 = vmatprep.mubr.bf16.mxu0 0
    %993 = vmatmul.mubr.bf16.gmra.mrb[0].mxu0 %v896
    %v994 = vpop.f32.mrb[0].mxu0
    %v995 = vadd.f32 0.0, %v994
    %v996 = vpop.f32.mrb[0].mxu0
    %v997 = vpop.f32.mrb[0].mxu0
    %v998 = vadd.f32 0.0, %v997
    %v999 = vpop.f32.mrb[0].mxu0
    %1000 = vmatprep.mubr.bf16.mxu0 0
    %1001 = vmatmul.mubr.bf16.gmra.mrb[0].mxu0 %v899
    %v1002 = vpop.f32.mrb[0].mxu0
    %v1003 = vadd.f32 0.0, %v1002
    %v1004 = vpop.f32.mrb[0].mxu0
    %v1005 = vpop.f32.mrb[0].mxu0
    %v1006 = vpop.f32.mrb[0].mxu0
    %1007 = vdwg.mxu0
    %v1008 = vadd.f32 %v778, %v995
    %v1009 = vadd.f32 %v781, %v998
    %v1010 = vadd.f32 %v786, %v1003
    %v1011 = vld [vmem:[%s0 + $0x4] sm:$0x8]
    %s1012 = scalar_lea.vmem [#allocation2], 60
    %v1013 = vld [vmem:[%s1012] sm:$0xf]
    %v1015 = vunpack.c.l.b16 %v1011
    %v1016 = vpack.c.b16 %v802, %v1015
    %v1017 = vrot.slane %v1016, 3
    %v1018 = vrot.slane %v876, 3
    %v1019 = vsel %vm311, %v1017, %v1018
    %v1021 = vsel %vm65, %v1019, 0
    %v1024 = vsel %vm65, %v1018, 0
    %v1027 = vsel %vm72, %v1013, 0
    %1029 = vmatprep.subr.bf16.mxu0 0
    %1030 = vmatpush1.bf16.msra.mxu0 %v1027
    %1031 = vmatprep.subr.bf16.mxu0 0
    %1032 = vmatpush1.bf16.msra.mxu0 0
    %1033 = vmatprep.subr.bf16.mxu0 0
    %1034 = vmatpush1.bf16.msra.mxu0 0
    %1035 = vmatprep.subr.bf16.mxu0 0
    %1036 = vmatpush1.bf16.msra.mxu0 0
    %1037 = vmatprep.subr.bf16.mxu0 0
    %1038 = vmatpush1.bf16.msra.mxu0 0
    %1039 = vmatprep.subr.bf16.mxu0 0
    %1040 = vmatpush1.bf16.msra.mxu0 0
    %1041 = vmatprep.subr.bf16.mxu0 0
    %1042 = vmatpush1.bf16.msra.mxu0 0
    %1043 = vmatprep.subr.bf16.mxu0 0
    %1044 = vmatpush1.bf16.msra.mxu0 0
    %1045 = vmatprep.subr.bf16.mxu0 0
    %1046 = vmatpush1.bf16.msra.mxu0 0
    %1047 = vmatprep.subr.bf16.mxu0 0
    %1048 = vmatpush1.bf16.msra.mxu0 0
    %1049 = vmatprep.subr.bf16.mxu0 0
    %1050 = vmatpush1.bf16.msra.mxu0 0
    %1051 = vmatprep.subr.bf16.mxu0 0
    %1052 = vmatpush1.bf16.msra.mxu0 0
    %1053 = vmatprep.subr.bf16.mxu0 0
    %1054 = vmatpush1.bf16.msra.mxu0 0
    %1055 = vmatprep.subr.bf16.mxu0 0
    %1056 = vmatpush1.bf16.msra.mxu0 0
    %1057 = vmatprep.subr.bf16.mxu0 0
    %1058 = vmatpush1.bf16.msra.mxu0 0
    %1059 = vmatprep.subr.bf16.mxu0 0
    %1060 = vmatpush1.bf16.msra.mxu0 0
    %1061 = vmatprep.mubr.bf16.mxu0 0
    %1062 = vmatmul.mubr.bf16.gmra.mrb[0].mxu0 %v1021
    %v1063 = vpop.f32.mrb[0].mxu0
    %v1064 = vadd.f32 0.0, %v1063
    %v1065 = vpop.f32.mrb[0].mxu0
    %v1066 = vpop.f32.mrb[0].mxu0
    %v1067 = vadd.f32 0.0, %v1066
    %v1068 = vpop.f32.mrb[0].mxu0
    %1069 = vmatprep.mubr.bf16.mxu0 0
    %1070 = vmatmul.mubr.bf16.gmra.mrb[0].mxu0 %v1024
    %v1071 = vpop.f32.mrb[0].mxu0
    %v1072 = vadd.f32 0.0, %v1071
    %v1073 = vpop.f32.mrb[0].mxu0
    %v1074 = vpop.f32.mrb[0].mxu0
    %v1075 = vpop.f32.mrb[0].mxu0
    %1076 = vdwg.mxu0
    %v1077 = vadd.f32 %v1008, %v1064
    %v1078 = vadd.f32 %v1009, %v1067
    %v1079 = vadd.f32 %v1010, %v1072
    %v1080 = vld [vmem:[%s0 + $0x10] sm:$0xc]
    %v1081 = vld [vmem:[%s0 + $0x14] sm:$0xf]
    %v1082 = vld [vmem:[%s0 + $0x18] sm:$0xf]
    %v1083 = vld [vmem:[%s0 + $0x1c] sm:$0x3]
    %v1084 = vld [vmem:[%s0 + $0x1c] sm:$0x7]
    %v1089 = vunpack.c.l.b16 %v1080
    %v1090 = vunpack.c.l.b16 %v1081
    %v1091 = vunpack.c.l.b16 %v1082
    %v1092 = vunpack.c.l.b16 %v1084
    %v1093 = vpack.c.b16 %v1090, %v1089
    %v1094 = vpack.c.b16 %v1092, %v1091
    %v1096 = vshrl.u32 %v1093, 16
    %v1098 = vrot.slane %v1096, 2
    %v1099 = vshll.u32 %v1093, 16
    %v1101 = vrot.slane %v1099, 3
    %v1102 = vor.u32 %v1098, %v1101
    %v1104 = vshrl.u32 %v1094, 16
    %v1106 = vrot.slane %v1104, 2
    %v1107 = vshll.u32 %v1094, 16
    %v1109 = vrot.slane %v1107, 3
    %v1110 = vor.u32 %v1106, %v1109
    %v1111 = vsel %vm877, %v1102, %v1110
    %v1113 = vsel %vm65, %v1111, 0
    %v1116 = vsel %vm65, %v1110, 0
    %1118 = vmatprep.subr.bf16.mxu0 0
    %1119 = vmatpush1.bf16.msra.mxu0 %v74
    %1120 = vmatprep.subr.bf16.mxu0 0
    %1121 = vmatpush1.bf16.msra.mxu0 0
    %1122 = vmatprep.subr.bf16.mxu0 0
    %1123 = vmatpush1.bf16.msra.mxu0 0
    %1124 = vmatprep.subr.bf16.mxu0 0
    %1125 = vmatpush1.bf16.msra.mxu0 0
    %1126 = vmatprep.subr.bf16.mxu0 0
    %1127 = vmatpush1.bf16.msra.mxu0 0
    %1128 = vmatprep.subr.bf16.mxu0 0
    %1129 = vmatpush1.bf16.msra.mxu0 0
    %1130 = vmatprep.subr.bf16.mxu0 0
    %1131 = vmatpush1.bf16.msra.mxu0 0
    %1132 = vmatprep.subr.bf16.mxu0 0
    %1133 = vmatpush1.bf16.msra.mxu0 0
    %1134 = vmatprep.subr.bf16.mxu0 0
    %1135 = vmatpush1.bf16.msra.mxu0 0
    %1136 = vmatprep.subr.bf16.mxu0 0
    %1137 = vmatpush1.bf16.msra.mxu0 0
    %1138 = vmatprep.subr.bf16.mxu0 0
    %1139 = vmatpush1.bf16.msra.mxu0 0
    %1140 = vmatprep.subr.bf16.mxu0 0
    %1141 = vmatpush1.bf16.msra.mxu0 0
    %1142 = vmatprep.subr.bf16.mxu0 0
    %1143 = vmatpush1.bf16.msra.mxu0 0
    %1144 = vmatprep.subr.bf16.mxu0 0
    %1145 = vmatpush1.bf16.msra.mxu0 0
    %1146 = vmatprep.subr.bf16.mxu0 0
    %1147 = vmatpush1.bf16.msra.mxu0 0
    %1148 = vmatprep.subr.bf16.mxu0 0
    %1149 = vmatpush1.bf16.msra.mxu0 0
    %1150 = vmatprep.mubr.bf16.mxu0 0
    %1151 = vmatmul.mubr.bf16.gmra.mrb[0].mxu0 %v1113
    %v1152 = vpop.f32.mrb[0].mxu0
    %v1153 = vadd.f32 0.0, %v1152
    %v1154 = vpop.f32.mrb[0].mxu0
    %v1155 = vpop.f32.mrb[0].mxu0
    %v1156 = vadd.f32 0.0, %v1155
    %v1157 = vpop.f32.mrb[0].mxu0
    %1158 = vmatprep.mubr.bf16.mxu0 0
    %1159 = vmatmul.mubr.bf16.gmra.mrb[0].mxu0 %v1116
    %v1160 = vpop.f32.mrb[0].mxu0
    %v1161 = vadd.f32 0.0, %v1160
    %v1162 = vpop.f32.mrb[0].mxu0
    %v1163 = vpop.f32.mrb[0].mxu0
    %v1164 = vpop.f32.mrb[0].mxu0
    %1165 = vdwg.mxu0
    %v1167 = vunpack.c.l.b16 %v1083
    %v1168 = vpack.c.b16 %v1167, %v1091
    %v1169 = vrot.slane %v1093, 2
    %v1170 = vrot.slane %v1168, 2
    %v1171 = vsel %vm807, %v1169, %v1170
    %v1173 = vsel %vm65, %v1171, 0
    %v1176 = vsel %vm65, %v1170, 0
    %1178 = vmatprep.subr.bf16.mxu0 0
    %1179 = vmatpush1.bf16.msra.mxu0 %v131
    %1180 = vmatprep.subr.bf16.mxu0 0
    %1181 = vmatpush1.bf16.msra.mxu0 0
    %1182 = vmatprep.subr.bf16.mxu0 0
    %1183 = vmatpush1.bf16.msra.mxu0 0
    %1184 = vmatprep.subr.bf16.mxu0 0
    %1185 = vmatpush1.bf16.msra.mxu0 0
    %1186 = vmatprep.subr.bf16.mxu0 0
    %1187 = vmatpush1.bf16.msra.mxu0 0
    %1188 = vmatprep.subr.bf16.mxu0 0
    %1189 = vmatpush1.bf16.msra.mxu0 0
    %1190 = vmatprep.subr.bf16.mxu0 0
    %1191 = vmatpush1.bf16.msra.mxu0 0
    %1192 = vmatprep.subr.bf16.mxu0 0
    %1193 = vmatpush1.bf16.msra.mxu0 0
    %1194 = vmatprep.subr.bf16.mxu0 0
    %1195 = vmatpush1.bf16.msra.mxu0 0
    %1196 = vmatprep.subr.bf16.mxu0 0
    %1197 = vmatpush1.bf16.msra.mxu0 0
    %1198 = vmatprep.subr.bf16.mxu0 0
    %1199 = vmatpush1.bf16.msra.mxu0 0
    %1200 = vmatprep.subr.bf16.mxu0 0
    %1201 = vmatpush1.bf16.msra.mxu0 0
    %1202 = vmatprep.subr.bf16.mxu0 0
    %1203 = vmatpush1.bf16.msra.mxu0 0
    %1204 = vmatprep.subr.bf16.mxu0 0
    %1205 = vmatpush1.bf16.msra.mxu0 0
    %1206 = vmatprep.subr.bf16.mxu0 0
    %1207 = vmatpush1.bf16.msra.mxu0 0
    %1208 = vmatprep.subr.bf16.mxu0 0
    %1209 = vmatpush1.bf16.msra.mxu0 0
    %1210 = vmatprep.mubr.bf16.mxu0 0
    %1211 = vmatmul.mubr.bf16.gmra.mrb[0].mxu0 %v1173
    %v1212 = vpop.f32.mrb[0].mxu0
    %v1213 = vadd.f32 %v1153, %v1212
    %v1214 = vpop.f32.mrb[0].mxu0
    %v1215 = vpop.f32.mrb[0].mxu0
    %v1216 = vadd.f32 %v1156, %v1215
    %v1217 = vpop.f32.mrb[0].mxu0
    %1218 = vmatprep.mubr.bf16.mxu0 0
    %1219 = vmatmul.mubr.bf16.gmra.mrb[0].mxu0 %v1176
    %v1220 = vpop.f32.mrb[0].mxu0
    %v1221 = vadd.f32 %v1161, %v1220
    %v1222 = vpop.f32.mrb[0].mxu0
    %v1223 = vpop.f32.mrb[0].mxu0
    %v1224 = vpop.f32.mrb[0].mxu0
    %1225 = vdwg.mxu0
    %v1226 = vld [vmem:[%s0 + $0x10] sm:$0x8]
    %v1228 = vunpack.c.l.b16 %v1226
    %v1229 = vpack.c.b16 %v1090, %v1228
    %v1230 = vrot.slane %v1229, 3
    %v1231 = vrot.slane %v1094, 3
    %v1232 = vsel %vm311, %v1230, %v1231
    %v1234 = vsel %vm65, %v1232, 0
    %v1237 = vsel %vm65, %v1231, 0
    %1239 = vmatprep.subr.bf16.mxu0 0
    %1240 = vmatpush1.bf16.msra.mxu0 %v200
    %1241 = vmatprep.subr.bf16.mxu0 0
    %1242 = vmatpush1.bf16.msra.mxu0 0
    %1243 = vmatprep.subr.bf16.mxu0 0
    %1244 = vmatpush1.bf16.msra.mxu0 0
    %1245 = vmatprep.subr.bf16.mxu0 0
    %1246 = vmatpush1.bf16.msra.mxu0 0
    %1247 = vmatprep.subr.bf16.mxu0 0
    %1248 = vmatpush1.bf16.msra.mxu0 0
    %1249 = vmatprep.subr.bf16.mxu0 0
    %1250 = vmatpush1.bf16.msra.mxu0 0
    %1251 = vmatprep.subr.bf16.mxu0 0
    %1252 = vmatpush1.bf16.msra.mxu0 0
    %1253 = vmatprep.subr.bf16.mxu0 0
    %1254 = vmatpush1.bf16.msra.mxu0 0
    %1255 = vmatprep.subr.bf16.mxu0 0
    %1256 = vmatpush1.bf16.msra.mxu0 0
    %1257 = vmatprep.subr.bf16.mxu0 0
    %1258 = vmatpush1.bf16.msra.mxu0 0
    %1259 = vmatprep.subr.bf16.mxu0 0
    %1260 = vmatpush1.bf16.msra.mxu0 0
    %1261 = vmatprep.subr.bf16.mxu0 0
    %1262 = vmatpush1.bf16.msra.mxu0 0
    %1263 = vmatprep.subr.bf16.mxu0 0
    %1264 = vmatpush1.bf16.msra.mxu0 0
    %1265 = vmatprep.subr.bf16.mxu0 0
    %1266 = vmatpush1.bf16.msra.mxu0 0
    %1267 = vmatprep.subr.bf16.mxu0 0
    %1268 = vmatpush1.bf16.msra.mxu0 0
    %1269 = vmatprep.subr.bf16.mxu0 0
    %1270 = vmatpush1.bf16.msra.mxu0 0
    %1271 = vmatprep.mubr.bf16.mxu0 0
    %1272 = vmatmul.mubr.bf16.gmra.mrb[0].mxu0 %v1234
    %v1273 = vpop.f32.mrb[0].mxu0
    %v1274 = vadd.f32 0.0, %v1273
    %v1275 = vpop.f32.mrb[0].mxu0
    %v1276 = vpop.f32.mrb[0].mxu0
    %v1277 = vadd.f32 0.0, %v1276
    %v1278 = vpop.f32.mrb[0].mxu0
    %1279 = vmatprep.mubr.bf16.mxu0 0
    %1280 = vmatmul.mubr.bf16.gmra.mrb[0].mxu0 %v1237
    %v1281 = vpop.f32.mrb[0].mxu0
    %v1282 = vadd.f32 0.0, %v1281
    %v1283 = vpop.f32.mrb[0].mxu0
    %v1284 = vpop.f32.mrb[0].mxu0
    %v1285 = vpop.f32.mrb[0].mxu0
    %1286 = vdwg.mxu0
    %1287 = vmatprep.subr.bf16.mxu0 0
    %1288 = vmatpush1.bf16.msra.mxu0 %v251
    %1289 = vmatprep.subr.bf16.mxu0 0
    %1290 = vmatpush1.bf16.msra.mxu0 0
    %1291 = vmatprep.subr.bf16.mxu0 0
    %1292 = vmatpush1.bf16.msra.mxu0 0
    %1293 = vmatprep.subr.bf16.mxu0 0
    %1294 = vmatpush1.bf16.msra.mxu0 0
    %1295 = vmatprep.subr.bf16.mxu0 0
    %1296 = vmatpush1.bf16.msra.mxu0 0
    %1297 = vmatprep.subr.bf16.mxu0 0
    %1298 = vmatpush1.bf16.msra.mxu0 0
    %1299 = vmatprep.subr.bf16.mxu0 0
    %1300 = vmatpush1.bf16.msra.mxu0 0
    %1301 = vmatprep.subr.bf16.mxu0 0
    %1302 = vmatpush1.bf16.msra.mxu0 0
    %1303 = vmatprep.subr.bf16.mxu0 0
    %1304 = vmatpush1.bf16.msra.mxu0 0
    %1305 = vmatprep.subr.bf16.mxu0 0
    %1306 = vmatpush1.bf16.msra.mxu0 0
    %1307 = vmatprep.subr.bf16.mxu0 0
    %1308 = vmatpush1.bf16.msra.mxu0 0
    %1309 = vmatprep.subr.bf16.mxu0 0
    %1310 = vmatpush1.bf16.msra.mxu0 0
    %1311 = vmatprep.subr.bf16.mxu0 0
    %1312 = vmatpush1.bf16.msra.mxu0 0
    %1313 = vmatprep.subr.bf16.mxu0 0
    %1314 = vmatpush1.bf16.msra.mxu0 0
    %1315 = vmatprep.subr.bf16.mxu0 0
    %1316 = vmatpush1.bf16.msra.mxu0 0
    %1317 = vmatprep.subr.bf16.mxu0 0
    %1318 = vmatpush1.bf16.msra.mxu0 0
    %1319 = vmatprep.mubr.bf16.mxu0 0
    %1320 = vmatmul.mubr.bf16.gmra.mrb[0].mxu0 %v1113
    %v1321 = vpop.f32.mrb[0].mxu0
    %v1322 = vadd.f32 %v1274, %v1321
    %v1323 = vpop.f32.mrb[0].mxu0
    %v1324 = vpop.f32.mrb[0].mxu0
    %v1325 = vadd.f32 %v1277, %v1324
    %v1326 = vpop.f32.mrb[0].mxu0
    %1327 = vmatprep.mubr.bf16.mxu0 0
    %1328 = vmatmul.mubr.bf16.gmra.mrb[0].mxu0 %v1116
    %v1329 = vpop.f32.mrb[0].mxu0
    %v1330 = vadd.f32 %v1282, %v1329
    %v1331 = vpop.f32.mrb[0].mxu0
    %v1332 = vpop.f32.mrb[0].mxu0
    %v1333 = vpop.f32.mrb[0].mxu0
    %1334 = vdwg.mxu0
    %v1335 = vld [vmem:[%s0 + $0x14] sm:$0xe]
    %v1336 = vld [vmem:[%s0 + $0x18] sm:$0xf]
    %v1337 = vld [vmem:[%s0 + $0x1c] sm:$0xf]
    %v1338 = vld [vmem:[%s0 + $0x20] sm:$0x1]
    %v1343 = vunpack.c.l.b16 %v1335
    %v1344 = vunpack.c.l.b16 %v1336
    %v1345 = vunpack.c.l.b16 %v1337
    %v1346 = vunpack.c.l.b16 %v1338
    %v1347 = vpack.c.b16 %v1344, %v1343
    %v1348 = vpack.c.b16 %v1346, %v1345
    %v1349 = vrot.slane %v1347, 1
    %v1350 = vrot.slane %v1348, 1
    %v1351 = vsel %vm189, %v1349, %v1350
    %v1353 = vsel %vm65, %v1351, 0
    %v1356 = vsel %vm65, %v1350, 0
    %1358 = vmatprep.subr.bf16.mxu0 0
    %1359 = vmatpush1.bf16.msra.mxu0 %v322
    %1360 = vmatprep.subr.bf16.mxu0 0
    %1361 = vmatpush1.bf16.msra.mxu0 0
    %1362 = vmatprep.subr.bf16.mxu0 0
    %1363 = vmatpush1.bf16.msra.mxu0 0
    %1364 = vmatprep.subr.bf16.mxu0 0
    %1365 = vmatpush1.bf16.msra.mxu0 0
    %1366 = vmatprep.subr.bf16.mxu0 0
    %1367 = vmatpush1.bf16.msra.mxu0 0
    %1368 = vmatprep.subr.bf16.mxu0 0
    %1369 = vmatpush1.bf16.msra.mxu0 0
    %1370 = vmatprep.subr.bf16.mxu0 0
    %1371 = vmatpush1.bf16.msra.mxu0 0
    %1372 = vmatprep.subr.bf16.mxu0 0
    %1373 = vmatpush1.bf16.msra.mxu0 0
    %1374 = vmatprep.subr.bf16.mxu0 0
    %1375 = vmatpush1.bf16.msra.mxu0 0
    %1376 = vmatprep.subr.bf16.mxu0 0
    %1377 = vmatpush1.bf16.msra.mxu0 0
    %1378 = vmatprep.subr.bf16.mxu0 0
    %1379 = vmatpush1.bf16.msra.mxu0 0
    %1380 = vmatprep.subr.bf16.mxu0 0
    %1381 = vmatpush1.bf16.msra.mxu0 0
    %1382 = vmatprep.subr.bf16.mxu0 0
    %1383 = vmatpush1.bf16.msra.mxu0 0
    %1384 = vmatprep.subr.bf16.mxu0 0
    %1385 = vmatpush1.bf16.msra.mxu0 0
    %1386 = vmatprep.subr.bf16.mxu0 0
    %1387 = vmatpush1.bf16.msra.mxu0 0
    %1388 = vmatprep.subr.bf16.mxu0 0
    %1389 = vmatpush1.bf16.msra.mxu0 0
    %1390 = vmatprep.mubr.bf16.mxu0 0
    %1391 = vmatmul.mubr.bf16.gmra.mrb[0].mxu0 %v1353
    %v1392 = vpop.f32.mrb[0].mxu0
    %v1393 = vadd.f32 0.0, %v1392
    %v1394 = vpop.f32.mrb[0].mxu0
    %v1395 = vpop.f32.mrb[0].mxu0
    %v1396 = vadd.f32 0.0, %v1395
    %v1397 = vpop.f32.mrb[0].mxu0
    %1398 = vmatprep.mubr.bf16.mxu0 0
    %1399 = vmatmul.mubr.bf16.gmra.mrb[0].mxu0 %v1356
    %v1400 = vpop.f32.mrb[0].mxu0
    %v1401 = vadd.f32 0.0, %v1400
    %v1402 = vpop.f32.mrb[0].mxu0
    %v1403 = vpop.f32.mrb[0].mxu0
    %v1404 = vpop.f32.mrb[0].mxu0
    %1405 = vdwg.mxu0
    %v1406 = vadd.f32 %v1213, %v1393
    %v1407 = vadd.f32 %v1216, %v1396
    %v1408 = vadd.f32 %v1221, %v1401
    %v1409 = vld [vmem:[%s0 + $0x20] sm:$0x3]
    %v1411 = vunpack.c.l.b16 %v1409
    %v1412 = vpack.c.b16 %v1411, %v1345
    %vm1413 = vsmask.f32 6400
    %v1415 = vshrl.u32 %v1347, 16
    %v1417 = vrot.slane %v1415, 1
    %v1418 = vshll.u32 %v1347, 16
    %v1420 = vrot.slane %v1418, 2
    %v1421 = vor.u32 %v1417, %v1420
    %v1423 = vshrl.u32 %v1412, 16
    %v1425 = vrot.slane %v1423, 1
    %v1426 = vshll.u32 %v1412, 16
    %v1428 = vrot.slane %v1426, 2
    %v1429 = vor.u32 %v1425, %v1428
    %v1430 = vsel %vm1413, %v1421, %v1429
    %v1432 = vsel %vm65, %v1430, 0
    %v1435 = vsel %vm65, %v1429, 0
    %1437 = vmatprep.subr.bf16.mxu0 0
    %1438 = vmatpush1.bf16.msra.mxu0 %v408
    %1439 = vmatprep.subr.bf16.mxu0 0
    %1440 = vmatpush1.bf16.msra.mxu0 0
    %1441 = vmatprep.subr.bf16.mxu0 0
    %1442 = vmatpush1.bf16.msra.mxu0 0
    %1443 = vmatprep.subr.bf16.mxu0 0
    %1444 = vmatpush1.bf16.msra.mxu0 0
    %1445 = vmatprep.subr.bf16.mxu0 0
    %1446 = vmatpush1.bf16.msra.mxu0 0
    %1447 = vmatprep.subr.bf16.mxu0 0
    %1448 = vmatpush1.bf16.msra.mxu0 0
    %1449 = vmatprep.subr.bf16.mxu0 0
    %1450 = vmatpush1.bf16.msra.mxu0 0
    %1451 = vmatprep.subr.bf16.mxu0 0
    %1452 = vmatpush1.bf16.msra.mxu0 0
    %1453 = vmatprep.subr.bf16.mxu0 0
    %1454 = vmatpush1.bf16.msra.mxu0 0
    %1455 = vmatprep.subr.bf16.mxu0 0
    %1456 = vmatpush1.bf16.msra.mxu0 0
    %1457 = vmatprep.subr.bf16.mxu0 0
    %1458 = vmatpush1.bf16.msra.mxu0 0
    %1459 = vmatprep.subr.bf16.mxu0 0
    %1460 = vmatpush1.bf16.msra.mxu0 0
    %1461 = vmatprep.subr.bf16.mxu0 0
    %1462 = vmatpush1.bf16.msra.mxu0 0
    %1463 = vmatprep.subr.bf16.mxu0 0
    %1464 = vmatpush1.bf16.msra.mxu0 0
    %1465 = vmatprep.subr.bf16.mxu0 0
    %1466 = vmatpush1.bf16.msra.mxu0 0
    %1467 = vmatprep.subr.bf16.mxu0 0
    %1468 = vmatpush1.bf16.msra.mxu0 0
    %1469 = vmatprep.mubr.bf16.mxu0 0
    %1470 = vmatmul.mubr.bf16.gmra.mrb[0].mxu0 %v1432
    %v1471 = vpop.f32.mrb[0].mxu0
    %v1472 = vadd.f32 0.0, %v1471
    %v1473 = vpop.f32.mrb[0].mxu0
    %v1474 = vpop.f32.mrb[0].mxu0
    %v1475 = vadd.f32 0.0, %v1474
    %v1476 = vpop.f32.mrb[0].mxu0
    %1477 = vmatprep.mubr.bf16.mxu0 0
    %1478 = vmatmul.mubr.bf16.gmra.mrb[0].mxu0 %v1435
    %v1479 = vpop.f32.mrb[0].mxu0
    %v1480 = vadd.f32 0.0, %v1479
    %v1481 = vpop.f32.mrb[0].mxu0
    %v1482 = vpop.f32.mrb[0].mxu0
    %v1483 = vpop.f32.mrb[0].mxu0
    %1484 = vdwg.mxu0
    %v1485 = vadd.f32 %v1406, %v1472
    %v1486 = vadd.f32 %v1407, %v1475
    %v1487 = vadd.f32 %v1408, %v1480
    %1488 = vmatprep.subr.bf16.mxu0 0
    %1489 = vmatpush1.bf16.msra.mxu0 %v464
    %1490 = vmatprep.subr.bf16.mxu0 0
    %1491 = vmatpush1.bf16.msra.mxu0 0
    %1492 = vmatprep.subr.bf16.mxu0 0
    %1493 = vmatpush1.bf16.msra.mxu0 0
    %1494 = vmatprep.subr.bf16.mxu0 0
    %1495 = vmatpush1.bf16.msra.mxu0 0
    %1496 = vmatprep.subr.bf16.mxu0 0
    %1497 = vmatpush1.bf16.msra.mxu0 0
    %1498 = vmatprep.subr.bf16.mxu0 0
    %1499 = vmatpush1.bf16.msra.mxu0 0
    %1500 = vmatprep.subr.bf16.mxu0 0
    %1501 = vmatpush1.bf16.msra.mxu0 0
    %1502 = vmatprep.subr.bf16.mxu0 0
    %1503 = vmatpush1.bf16.msra.mxu0 0
    %1504 = vmatprep.subr.bf16.mxu0 0
    %1505 = vmatpush1.bf16.msra.mxu0 0
    %1506 = vmatprep.subr.bf16.mxu0 0
    %1507 = vmatpush1.bf16.msra.mxu0 0
    %1508 = vmatprep.subr.bf16.mxu0 0
    %1509 = vmatpush1.bf16.msra.mxu0 0
    %1510 = vmatprep.subr.bf16.mxu0 0
    %1511 = vmatpush1.bf16.msra.mxu0 0
    %1512 = vmatprep.subr.bf16.mxu0 0
    %1513 = vmatpush1.bf16.msra.mxu0 0
    %1514 = vmatprep.subr.bf16.mxu0 0
    %1515 = vmatpush1.bf16.msra.mxu0 0
    %1516 = vmatprep.subr.bf16.mxu0 0
    %1517 = vmatpush1.bf16.msra.mxu0 0
    %1518 = vmatprep.subr.bf16.mxu0 0
    %1519 = vmatpush1.bf16.msra.mxu0 0
    %1520 = vmatprep.mubr.bf16.mxu0 0
    %1521 = vmatmul.mubr.bf16.gmra.mrb[0].mxu0 %v1432
    %v1522 = vpop.f32.mrb[0].mxu0
    %v1523 = vadd.f32 0.0, %v1522
    %v1524 = vpop.f32.mrb[0].mxu0
    %v1525 = vpop.f32.mrb[0].mxu0
    %v1526 = vadd.f32 0.0, %v1525
    %v1527 = vpop.f32.mrb[0].mxu0
    %1528 = vmatprep.mubr.bf16.mxu0 0
    %1529 = vmatmul.mubr.bf16.gmra.mrb[0].mxu0 %v1435
    %v1530 = vpop.f32.mrb[0].mxu0
    %v1531 = vadd.f32 0.0, %v1530
    %v1532 = vpop.f32.mrb[0].mxu0
    %v1533 = vpop.f32.mrb[0].mxu0
    %v1534 = vpop.f32.mrb[0].mxu0
    %1535 = vdwg.mxu0
    %v1536 = vadd.f32 %v1322, %v1523
    %v1537 = vadd.f32 %v1325, %v1526
    %v1538 = vadd.f32 %v1330, %v1531
    %1539 = vmatprep.subr.bf16.mxu0 0
    %1540 = vmatpush1.bf16.msra.mxu0 %v520
    %1541 = vmatprep.subr.bf16.mxu0 0
    %1542 = vmatpush1.bf16.msra.mxu0 0
    %1543 = vmatprep.subr.bf16.mxu0 0
    %1544 = vmatpush1.bf16.msra.mxu0 0
    %1545 = vmatprep.subr.bf16.mxu0 0
    %1546 = vmatpush1.bf16.msra.mxu0 0
    %1547 = vmatprep.subr.bf16.mxu0 0
    %1548 = vmatpush1.bf16.msra.mxu0 0
    %1549 = vmatprep.subr.bf16.mxu0 0
    %1550 = vmatpush1.bf16.msra.mxu0 0
    %1551 = vmatprep.subr.bf16.mxu0 0
    %1552 = vmatpush1.bf16.msra.mxu0 0
    %1553 = vmatprep.subr.bf16.mxu0 0
    %1554 = vmatpush1.bf16.msra.mxu0 0
    %1555 = vmatprep.subr.bf16.mxu0 0
    %1556 = vmatpush1.bf16.msra.mxu0 0
    %1557 = vmatprep.subr.bf16.mxu0 0
    %1558 = vmatpush1.bf16.msra.mxu0 0
    %1559 = vmatprep.subr.bf16.mxu0 0
    %1560 = vmatpush1.bf16.msra.mxu0 0
    %1561 = vmatprep.subr.bf16.mxu0 0
    %1562 = vmatpush1.bf16.msra.mxu0 0
    %1563 = vmatprep.subr.bf16.mxu0 0
    %1564 = vmatpush1.bf16.msra.mxu0 0
    %1565 = vmatprep.subr.bf16.mxu0 0
    %1566 = vmatpush1.bf16.msra.mxu0 0
    %1567 = vmatprep.subr.bf16.mxu0 0
    %1568 = vmatpush1.bf16.msra.mxu0 0
    %1569 = vmatprep.subr.bf16.mxu0 0
    %1570 = vmatpush1.bf16.msra.mxu0 0
    %1571 = vmatprep.mubr.bf16.mxu0 0
    %1572 = vmatmul.mubr.bf16.gmra.mrb[0].mxu0 %v1432
    %v1573 = vpop.f32.mrb[0].mxu0
    %v1574 = vadd.f32 0.0, %v1573
    %v1575 = vpop.f32.mrb[0].mxu0
    %v1576 = vpop.f32.mrb[0].mxu0
    %v1577 = vadd.f32 0.0, %v1576
    %v1578 = vpop.f32.mrb[0].mxu0
    %1579 = vmatprep.mubr.bf16.mxu0 0
    %1580 = vmatmul.mubr.bf16.gmra.mrb[0].mxu0 %v1435
    %v1581 = vpop.f32.mrb[0].mxu0
    %v1582 = vadd.f32 0.0, %v1581
    %v1583 = vpop.f32.mrb[0].mxu0
    %v1584 = vpop.f32.mrb[0].mxu0
    %v1585 = vpop.f32.mrb[0].mxu0
    %1586 = vdwg.mxu0
    %1587 = vmatprep.subr.bf16.mxu0 0
    %1588 = vmatpush1.bf16.msra.mxu0 %v571
    %1589 = vmatprep.subr.bf16.mxu0 0
    %1590 = vmatpush1.bf16.msra.mxu0 0
    %1591 = vmatprep.subr.bf16.mxu0 0
    %1592 = vmatpush1.bf16.msra.mxu0 0
    %1593 = vmatprep.subr.bf16.mxu0 0
    %1594 = vmatpush1.bf16.msra.mxu0 0
    %1595 = vmatprep.subr.bf16.mxu0 0
    %1596 = vmatpush1.bf16.msra.mxu0 0
    %1597 = vmatprep.subr.bf16.mxu0 0
    %1598 = vmatpush1.bf16.msra.mxu0 0
    %1599 = vmatprep.subr.bf16.mxu0 0
    %1600 = vmatpush1.bf16.msra.mxu0 0
    %1601 = vmatprep.subr.bf16.mxu0 0
    %1602 = vmatpush1.bf16.msra.mxu0 0
    %1603 = vmatprep.subr.bf16.mxu0 0
    %1604 = vmatpush1.bf16.msra.mxu0 0
    %1605 = vmatprep.subr.bf16.mxu0 0
    %1606 = vmatpush1.bf16.msra.mxu0 0
    %1607 = vmatprep.subr.bf16.mxu0 0
    %1608 = vmatpush1.bf16.msra.mxu0 0
    %1609 = vmatprep.subr.bf16.mxu0 0
    %1610 = vmatpush1.bf16.msra.mxu0 0
    %1611 = vmatprep.subr.bf16.mxu0 0
    %1612 = vmatpush1.bf16.msra.mxu0 0
    %1613 = vmatprep.subr.bf16.mxu0 0
    %1614 = vmatpush1.bf16.msra.mxu0 0
    %1615 = vmatprep.subr.bf16.mxu0 0
    %1616 = vmatpush1.bf16.msra.mxu0 0
    %1617 = vmatprep.subr.bf16.mxu0 0
    %1618 = vmatpush1.bf16.msra.mxu0 0
    %1619 = vmatprep.mubr.bf16.mxu0 0
    %1620 = vmatmul.mubr.bf16.gmra.mrb[0].mxu0 %v1353
    %v1621 = vpop.f32.mrb[0].mxu0
    %v1622 = vadd.f32 %v1574, %v1621
    %v1623 = vpop.f32.mrb[0].mxu0
    %v1624 = vpop.f32.mrb[0].mxu0
    %v1625 = vadd.f32 %v1577, %v1624
    %v1626 = vpop.f32.mrb[0].mxu0
    %1627 = vmatprep.mubr.bf16.mxu0 0
    %1628 = vmatmul.mubr.bf16.gmra.mrb[0].mxu0 %v1356
    %v1629 = vpop.f32.mrb[0].mxu0
    %v1630 = vadd.f32 %v1582, %v1629
    %v1631 = vpop.f32.mrb[0].mxu0
    %v1632 = vpop.f32.mrb[0].mxu0
    %v1633 = vpop.f32.mrb[0].mxu0
    %1634 = vdwg.mxu0
    %v1635 = vld [vmem:[%s0 + $0x14] sm:$0xc]
    %v1637 = vunpack.c.l.b16 %v1635
    %v1638 = vpack.c.b16 %v1344, %v1637
    %v1639 = vrot.slane %v1638, 2
    %v1640 = vrot.slane %v1412, 2
    %v1641 = vsel %vm807, %v1639, %v1640
    %v1643 = vsel %vm65, %v1641, 0
    %v1646 = vsel %vm65, %v1640, 0
    %1648 = vmatprep.subr.bf16.mxu0 0
    %1649 = vmatpush1.bf16.msra.mxu0 %v634
    %1650 = vmatprep.subr.bf16.mxu0 0
    %1651 = vmatpush1.bf16.msra.mxu0 0
    %1652 = vmatprep.subr.bf16.mxu0 0
    %1653 = vmatpush1.bf16.msra.mxu0 0
    %1654 = vmatprep.subr.bf16.mxu0 0
    %1655 = vmatpush1.bf16.msra.mxu0 0
    %1656 = vmatprep.subr.bf16.mxu0 0
    %1657 = vmatpush1.bf16.msra.mxu0 0
    %1658 = vmatprep.subr.bf16.mxu0 0
    %1659 = vmatpush1.bf16.msra.mxu0 0
    %1660 = vmatprep.subr.bf16.mxu0 0
    %1661 = vmatpush1.bf16.msra.mxu0 0
    %1662 = vmatprep.subr.bf16.mxu0 0
    %1663 = vmatpush1.bf16.msra.mxu0 0
    %1664 = vmatprep.subr.bf16.mxu0 0
    %1665 = vmatpush1.bf16.msra.mxu0 0
    %1666 = vmatprep.subr.bf16.mxu0 0
    %1667 = vmatpush1.bf16.msra.mxu0 0
    %1668 = vmatprep.subr.bf16.mxu0 0
    %1669 = vmatpush1.bf16.msra.mxu0 0
    %1670 = vmatprep.subr.bf16.mxu0 0
    %1671 = vmatpush1.bf16.msra.mxu0 0
    %1672 = vmatprep.subr.bf16.mxu0 0
    %1673 = vmatpush1.bf16.msra.mxu0 0
    %1674 = vmatprep.subr.bf16.mxu0 0
    %1675 = vmatpush1.bf16.msra.mxu0 0
    %1676 = vmatprep.subr.bf16.mxu0 0
    %1677 = vmatpush1.bf16.msra.mxu0 0
    %1678 = vmatprep.subr.bf16.mxu0 0
    %1679 = vmatpush1.bf16.msra.mxu0 0
    %1680 = vmatprep.mubr.bf16.mxu0 0
    %1681 = vmatmul.mubr.bf16.gmra.mrb[0].mxu0 %v1643
    %v1682 = vpop.f32.mrb[0].mxu0
    %v1683 = vadd.f32 0.0, %v1682
    %v1684 = vpop.f32.mrb[0].mxu0
    %v1685 = vpop.f32.mrb[0].mxu0
    %v1686 = vadd.f32 0.0, %v1685
    %v1687 = vpop.f32.mrb[0].mxu0
    %1688 = vmatprep.mubr.bf16.mxu0 0
    %1689 = vmatmul.mubr.bf16.gmra.mrb[0].mxu0 %v1646
    %v1690 = vpop.f32.mrb[0].mxu0
    %v1691 = vadd.f32 0.0, %v1690
    %v1692 = vpop.f32.mrb[0].mxu0
    %v1693 = vpop.f32.mrb[0].mxu0
    %v1694 = vpop.f32.mrb[0].mxu0
    %1695 = vdwg.mxu0
    %v1696 = vadd.f32 %v1536, %v1683
    %v1697 = vadd.f32 %v1537, %v1686
    %v1698 = vadd.f32 %v1538, %v1691
    %1699 = vmatprep.subr.bf16.mxu0 0
    %1700 = vmatpush1.bf16.msra.mxu0 %v690
    %1701 = vmatprep.subr.bf16.mxu0 0
    %1702 = vmatpush1.bf16.msra.mxu0 0
    %1703 = vmatprep.subr.bf16.mxu0 0
    %1704 = vmatpush1.bf16.msra.mxu0 0
    %1705 = vmatprep.subr.bf16.mxu0 0
    %1706 = vmatpush1.bf16.msra.mxu0 0
    %1707 = vmatprep.subr.bf16.mxu0 0
    %1708 = vmatpush1.bf16.msra.mxu0 0
    %1709 = vmatprep.subr.bf16.mxu0 0
    %1710 = vmatpush1.bf16.msra.mxu0 0
    %1711 = vmatprep.subr.bf16.mxu0 0
    %1712 = vmatpush1.bf16.msra.mxu0 0
    %1713 = vmatprep.subr.bf16.mxu0 0
    %1714 = vmatpush1.bf16.msra.mxu0 0
    %1715 = vmatprep.subr.bf16.mxu0 0
    %1716 = vmatpush1.bf16.msra.mxu0 0
    %1717 = vmatprep.subr.bf16.mxu0 0
    %1718 = vmatpush1.bf16.msra.mxu0 0
    %1719 = vmatprep.subr.bf16.mxu0 0
    %1720 = vmatpush1.bf16.msra.mxu0 0
    %1721 = vmatprep.subr.bf16.mxu0 0
    %1722 = vmatpush1.bf16.msra.mxu0 0
    %1723 = vmatprep.subr.bf16.mxu0 0
    %1724 = vmatpush1.bf16.msra.mxu0 0
    %1725 = vmatprep.subr.bf16.mxu0 0
    %1726 = vmatpush1.bf16.msra.mxu0 0
    %1727 = vmatprep.subr.bf16.mxu0 0
    %1728 = vmatpush1.bf16.msra.mxu0 0
    %1729 = vmatprep.subr.bf16.mxu0 0
    %1730 = vmatpush1.bf16.msra.mxu0 0
    %1731 = vmatprep.mubr.bf16.mxu0 0
    %1732 = vmatmul.mubr.bf16.gmra.mrb[0].mxu0 %v1643
    %v1733 = vpop.f32.mrb[0].mxu0
    %v1734 = vadd.f32 0.0, %v1733
    %v1735 = vpop.f32.mrb[0].mxu0
    %v1736 = vpop.f32.mrb[0].mxu0
    %v1737 = vadd.f32 0.0, %v1736
    %v1738 = vpop.f32.mrb[0].mxu0
    %1739 = vmatprep.mubr.bf16.mxu0 0
    %1740 = vmatmul.mubr.bf16.gmra.mrb[0].mxu0 %v1646
    %v1741 = vpop.f32.mrb[0].mxu0
    %v1742 = vadd.f32 0.0, %v1741
    %v1743 = vpop.f32.mrb[0].mxu0
    %v1744 = vpop.f32.mrb[0].mxu0
    %v1745 = vpop.f32.mrb[0].mxu0
    %1746 = vdwg.mxu0
    %1747 = vmatprep.subr.bf16.mxu0 0
    %1748 = vmatpush1.bf16.msra.mxu0 %v741
    %1749 = vmatprep.subr.bf16.mxu0 0
    %1750 = vmatpush1.bf16.msra.mxu0 0
    %1751 = vmatprep.subr.bf16.mxu0 0
    %1752 = vmatpush1.bf16.msra.mxu0 0
    %1753 = vmatprep.subr.bf16.mxu0 0
    %1754 = vmatpush1.bf16.msra.mxu0 0
    %1755 = vmatprep.subr.bf16.mxu0 0
    %1756 = vmatpush1.bf16.msra.mxu0 0
    %1757 = vmatprep.subr.bf16.mxu0 0
    %1758 = vmatpush1.bf16.msra.mxu0 0
    %1759 = vmatprep.subr.bf16.mxu0 0
    %1760 = vmatpush1.bf16.msra.mxu0 0
    %1761 = vmatprep.subr.bf16.mxu0 0
    %1762 = vmatpush1.bf16.msra.mxu0 0
    %1763 = vmatprep.subr.bf16.mxu0 0
    %1764 = vmatpush1.bf16.msra.mxu0 0
    %1765 = vmatprep.subr.bf16.mxu0 0
    %1766 = vmatpush1.bf16.msra.mxu0 0
    %1767 = vmatprep.subr.bf16.mxu0 0
    %1768 = vmatpush1.bf16.msra.mxu0 0
    %1769 = vmatprep.subr.bf16.mxu0 0
    %1770 = vmatpush1.bf16.msra.mxu0 0
    %1771 = vmatprep.subr.bf16.mxu0 0
    %1772 = vmatpush1.bf16.msra.mxu0 0
    %1773 = vmatprep.subr.bf16.mxu0 0
    %1774 = vmatpush1.bf16.msra.mxu0 0
    %1775 = vmatprep.subr.bf16.mxu0 0
    %1776 = vmatpush1.bf16.msra.mxu0 0
    %1777 = vmatprep.subr.bf16.mxu0 0
    %1778 = vmatpush1.bf16.msra.mxu0 0
    %1779 = vmatprep.mubr.bf16.mxu0 0
    %1780 = vmatmul.mubr.bf16.gmra.mrb[0].mxu0 %v1432
    %v1781 = vpop.f32.mrb[0].mxu0
    %v1782 = vadd.f32 %v1734, %v1781
    %v1783 = vpop.f32.mrb[0].mxu0
    %v1784 = vpop.f32.mrb[0].mxu0
    %v1785 = vadd.f32 %v1737, %v1784
    %v1786 = vpop.f32.mrb[0].mxu0
    %1787 = vmatprep.mubr.bf16.mxu0 0
    %1788 = vmatmul.mubr.bf16.gmra.mrb[0].mxu0 %v1435
    %v1789 = vpop.f32.mrb[0].mxu0
    %v1790 = vadd.f32 %v1742, %v1789
    %v1791 = vpop.f32.mrb[0].mxu0
    %v1792 = vpop.f32.mrb[0].mxu0
    %v1793 = vpop.f32.mrb[0].mxu0
    %1794 = vdwg.mxu0
    %v1795 = vld [vmem:[%s0 + $0x20] sm:$0xf]
    %v1797 = vunpack.c.l.b16 %v1795
    %v1798 = vpack.c.b16 %v1345, %v1344
    %v1799 = vpack.c.b16 %v1797, %v1797
    %v1801 = vsel %vm65, %v1798, 0
    %v1804 = vsel %vm65, %v1799, 0
    %1806 = vmatprep.subr.bf16.mxu0 0
    %1807 = vmatpush1.bf16.msra.mxu0 %v818
    %1808 = vmatprep.subr.bf16.mxu0 0
    %1809 = vmatpush1.bf16.msra.mxu0 0
    %1810 = vmatprep.subr.bf16.mxu0 0
    %1811 = vmatpush1.bf16.msra.mxu0 0
    %1812 = vmatprep.subr.bf16.mxu0 0
    %1813 = vmatpush1.bf16.msra.mxu0 0
    %1814 = vmatprep.subr.bf16.mxu0 0
    %1815 = vmatpush1.bf16.msra.mxu0 0
    %1816 = vmatprep.subr.bf16.mxu0 0
    %1817 = vmatpush1.bf16.msra.mxu0 0
    %1818 = vmatprep.subr.bf16.mxu0 0
    %1819 = vmatpush1.bf16.msra.mxu0 0
    %1820 = vmatprep.subr.bf16.mxu0 0
    %1821 = vmatpush1.bf16.msra.mxu0 0
    %1822 = vmatprep.subr.bf16.mxu0 0
    %1823 = vmatpush1.bf16.msra.mxu0 0
    %1824 = vmatprep.subr.bf16.mxu0 0
    %1825 = vmatpush1.bf16.msra.mxu0 0
    %1826 = vmatprep.subr.bf16.mxu0 0
    %1827 = vmatpush1.bf16.msra.mxu0 0
    %1828 = vmatprep.subr.bf16.mxu0 0
    %1829 = vmatpush1.bf16.msra.mxu0 0
    %1830 = vmatprep.subr.bf16.mxu0 0
    %1831 = vmatpush1.bf16.msra.mxu0 0
    %1832 = vmatprep.subr.bf16.mxu0 0
    %1833 = vmatpush1.bf16.msra.mxu0 0
    %1834 = vmatprep.subr.bf16.mxu0 0
    %1835 = vmatpush1.bf16.msra.mxu0 0
    %1836 = vmatprep.subr.bf16.mxu0 0
    %1837 = vmatpush1.bf16.msra.mxu0 0
    %1838 = vmatprep.mubr.bf16.mxu0 0
    %1839 = vmatmul.mubr.bf16.gmra.mrb[0].mxu0 %v1801
    %v1840 = vpop.f32.mrb[0].mxu0
    %v1841 = vadd.f32 0.0, %v1840
    %v1842 = vpop.f32.mrb[0].mxu0
    %v1843 = vpop.f32.mrb[0].mxu0
    %v1844 = vadd.f32 0.0, %v1843
    %v1845 = vpop.f32.mrb[0].mxu0
    %1846 = vmatprep.mubr.bf16.mxu0 0
    %1847 = vmatmul.mubr.bf16.gmra.mrb[0].mxu0 %v1804
    %v1848 = vpop.f32.mrb[0].mxu0
    %v1849 = vadd.f32 0.0, %v1848
    %v1850 = vpop.f32.mrb[0].mxu0
    %v1851 = vpop.f32.mrb[0].mxu0
    %v1852 = vpop.f32.mrb[0].mxu0
    %1853 = vdwg.mxu0
    %v1854 = vadd.f32 %v1622, %v1841
    %v1855 = vadd.f32 %v1625, %v1844
    %v1856 = vadd.f32 %v1630, %v1849
    %v1857 = vld [vmem:[%s0 + $0x18] sm:$0xf]
    %v1858 = vld [vmem:[%s0 + $0x1c] sm:$0xf]
    %v1859 = vld [vmem:[%s0 + $0x20] sm:$0xf]
    %v1860 = vld [vmem:[%s0 + $0x24] sm:$0x1]
    %v1865 = vunpack.c.l.b16 %v1857
    %v1866 = vunpack.c.l.b16 %v1858
    %v1867 = vunpack.c.l.b16 %v1859
    %v1868 = vunpack.c.l.b16 %v1860
    %v1869 = vpack.c.b16 %v1866, %v1865
    %v1870 = vpack.c.b16 %v1868, %v1867
    %v1872 = vshrl.u32 %v1869, 16
    %v1874 = vshll.u32 %v1869, 16
    %v1876 = vrot.slane %v1874, 1
    %v1877 = vor.u32 %v1872, %v1876
    %v1879 = vshll.u32 %v1870, 16
    %v1881 = vrot.slane %v1879, 1
    %v1882 = vsel %vm49, %v1877, %v1881
    %v1883 = vshrl.u32 %v1870, 16
    %v1885 = vor.u32 %v1883, %v1881
    %v1887 = vsel %vm65, %v1882, 0
    %v1890 = vsel %vm65, %v1885, 0
    %1892 = vmatprep.subr.bf16.mxu0 0
    %1893 = vmatpush1.bf16.msra.mxu0 %v902
    %1894 = vmatprep.subr.bf16.mxu0 0
    %1895 = vmatpush1.bf16.msra.mxu0 0
    %1896 = vmatprep.subr.bf16.mxu0 0
    %1897 = vmatpush1.bf16.msra.mxu0 0
    %1898 = vmatprep.subr.bf16.mxu0 0
    %1899 = vmatpush1.bf16.msra.mxu0 0
    %1900 = vmatprep.subr.bf16.mxu0 0
    %1901 = vmatpush1.bf16.msra.mxu0 0
    %1902 = vmatprep.subr.bf16.mxu0 0
    %1903 = vmatpush1.bf16.msra.mxu0 0
    %1904 = vmatprep.subr.bf16.mxu0 0
    %1905 = vmatpush1.bf16.msra.mxu0 0
    %1906 = vmatprep.subr.bf16.mxu0 0
    %1907 = vmatpush1.bf16.msra.mxu0 0
    %1908 = vmatprep.subr.bf16.mxu0 0
    %1909 = vmatpush1.bf16.msra.mxu0 0
    %1910 = vmatprep.subr.bf16.mxu0 0
    %1911 = vmatpush1.bf16.msra.mxu0 0
    %1912 = vmatprep.subr.bf16.mxu0 0
    %1913 = vmatpush1.bf16.msra.mxu0 0
    %1914 = vmatprep.subr.bf16.mxu0 0
    %1915 = vmatpush1.bf16.msra.mxu0 0
    %1916 = vmatprep.subr.bf16.mxu0 0
    %1917 = vmatpush1.bf16.msra.mxu0 0
    %1918 = vmatprep.subr.bf16.mxu0 0
    %1919 = vmatpush1.bf16.msra.mxu0 0
    %1920 = vmatprep.subr.bf16.mxu0 0
    %1921 = vmatpush1.bf16.msra.mxu0 0
    %1922 = vmatprep.subr.bf16.mxu0 0
    %1923 = vmatpush1.bf16.msra.mxu0 0
    %1924 = vmatprep.mubr.bf16.mxu0 0
    %1925 = vmatmul.mubr.bf16.gmra.mrb[0].mxu0 %v1887
    %v1926 = vpop.f32.mrb[0].mxu0
    %v1927 = vadd.f32 0.0, %v1926
    %v1928 = vpop.f32.mrb[0].mxu0
    %v1929 = vpop.f32.mrb[0].mxu0
    %v1930 = vadd.f32 0.0, %v1929
    %v1931 = vpop.f32.mrb[0].mxu0
    %1932 = vmatprep.mubr.bf16.mxu0 0
    %1933 = vmatmul.mubr.bf16.gmra.mrb[0].mxu0 %v1890
    %v1934 = vpop.f32.mrb[0].mxu0
    %v1935 = vadd.f32 0.0, %v1934
    %v1936 = vpop.f32.mrb[0].mxu0
    %v1937 = vpop.f32.mrb[0].mxu0
    %v1938 = vpop.f32.mrb[0].mxu0
    %1939 = vdwg.mxu0
    %v1940 = vadd.f32 %v1854, %v1927
    %v1941 = vadd.f32 %v1855, %v1930
    %v1942 = vadd.f32 %v1856, %v1935
    %1943 = vmatprep.subr.bf16.mxu0 0
    %1944 = vmatpush1.bf16.msra.mxu0 %v958
    %1945 = vmatprep.subr.bf16.mxu0 0
    %1946 = vmatpush1.bf16.msra.mxu0 0
    %1947 = vmatprep.subr.bf16.mxu0 0
    %1948 = vmatpush1.bf16.msra.mxu0 0
    %1949 = vmatprep.subr.bf16.mxu0 0
    %1950 = vmatpush1.bf16.msra.mxu0 0
    %1951 = vmatprep.subr.bf16.mxu0 0
    %1952 = vmatpush1.bf16.msra.mxu0 0
    %1953 = vmatprep.subr.bf16.mxu0 0
    %1954 = vmatpush1.bf16.msra.mxu0 0
    %1955 = vmatprep.subr.bf16.mxu0 0
    %1956 = vmatpush1.bf16.msra.mxu0 0
    %1957 = vmatprep.subr.bf16.mxu0 0
    %1958 = vmatpush1.bf16.msra.mxu0 0
    %1959 = vmatprep.subr.bf16.mxu0 0
    %1960 = vmatpush1.bf16.msra.mxu0 0
    %1961 = vmatprep.subr.bf16.mxu0 0
    %1962 = vmatpush1.bf16.msra.mxu0 0
    %1963 = vmatprep.subr.bf16.mxu0 0
    %1964 = vmatpush1.bf16.msra.mxu0 0
    %1965 = vmatprep.subr.bf16.mxu0 0
    %1966 = vmatpush1.bf16.msra.mxu0 0
    %1967 = vmatprep.subr.bf16.mxu0 0
    %1968 = vmatpush1.bf16.msra.mxu0 0
    %1969 = vmatprep.subr.bf16.mxu0 0
    %1970 = vmatpush1.bf16.msra.mxu0 0
    %1971 = vmatprep.subr.bf16.mxu0 0
    %1972 = vmatpush1.bf16.msra.mxu0 0
    %1973 = vmatprep.subr.bf16.mxu0 0
    %1974 = vmatpush1.bf16.msra.mxu0 0
    %1975 = vmatprep.mubr.bf16.mxu0 0
    %1976 = vmatmul.mubr.bf16.gmra.mrb[0].mxu0 %v1887
    %v1977 = vpop.f32.mrb[0].mxu0
    %v1978 = vadd.f32 0.0, %v1977
    %v1979 = vpop.f32.mrb[0].mxu0
    %v1980 = vpop.f32.mrb[0].mxu0
    %v1981 = vadd.f32 0.0, %v1980
    %v1982 = vpop.f32.mrb[0].mxu0
    %1983 = vmatprep.mubr.bf16.mxu0 0
    %1984 = vmatmul.mubr.bf16.gmra.mrb[0].mxu0 %v1890
    %v1985 = vpop.f32.mrb[0].mxu0
    %v1986 = vadd.f32 0.0, %v1985
    %v1987 = vpop.f32.mrb[0].mxu0
    %v1988 = vpop.f32.mrb[0].mxu0
    %v1989 = vpop.f32.mrb[0].mxu0
    %1990 = vdwg.mxu0
    %v1991 = vadd.f32 %v1782, %v1978
    %v1992 = vadd.f32 %v1785, %v1981
    %v1993 = vadd.f32 %v1790, %v1986
    %v1994 = vld [vmem:[%s0 + $0x18] sm:$0xe]
    %v1996 = vunpack.c.l.b16 %v1994
    %v1997 = vpack.c.b16 %v1866, %v1996
    %v1998 = vrot.slane %v1997, 1
    %v1999 = vrot.slane %v1870, 1
    %v2000 = vsel %vm189, %v1998, %v1999
    %v2002 = vsel %vm65, %v2000, 0
    %v2005 = vsel %vm65, %v1999, 0
    %2007 = vmatprep.subr.bf16.mxu0 0
    %2008 = vmatpush1.bf16.msra.mxu0 %v1027
    %2009 = vmatprep.subr.bf16.mxu0 0
    %2010 = vmatpush1.bf16.msra.mxu0 0
    %2011 = vmatprep.subr.bf16.mxu0 0
    %2012 = vmatpush1.bf16.msra.mxu0 0
    %2013 = vmatprep.subr.bf16.mxu0 0
    %2014 = vmatpush1.bf16.msra.mxu0 0
    %2015 = vmatprep.subr.bf16.mxu0 0
    %2016 = vmatpush1.bf16.msra.mxu0 0
    %2017 = vmatprep.subr.bf16.mxu0 0
    %2018 = vmatpush1.bf16.msra.mxu0 0
    %2019 = vmatprep.subr.bf16.mxu0 0
    %2020 = vmatpush1.bf16.msra.mxu0 0
    %2021 = vmatprep.subr.bf16.mxu0 0
    %2022 = vmatpush1.bf16.msra.mxu0 0
    %2023 = vmatprep.subr.bf16.mxu0 0
    %2024 = vmatpush1.bf16.msra.mxu0 0
    %2025 = vmatprep.subr.bf16.mxu0 0
    %2026 = vmatpush1.bf16.msra.mxu0 0
    %2027 = vmatprep.subr.bf16.mxu0 0
    %2028 = vmatpush1.bf16.msra.mxu0 0
    %2029 = vmatprep.subr.bf16.mxu0 0
    %2030 = vmatpush1.bf16.msra.mxu0 0
    %2031 = vmatprep.subr.bf16.mxu0 0
    %2032 = vmatpush1.bf16.msra.mxu0 0
    %2033 = vmatprep.subr.bf16.mxu0 0
    %2034 = vmatpush1.bf16.msra.mxu0 0
    %2035 = vmatprep.subr.bf16.mxu0 0
    %2036 = vmatpush1.bf16.msra.mxu0 0
    %2037 = vmatprep.subr.bf16.mxu0 0
    %2038 = vmatpush1.bf16.msra.mxu0 0
    %2039 = vmatprep.mubr.bf16.mxu0 0
    %2040 = vmatmul.mubr.bf16.gmra.mrb[0].mxu0 %v2002
    %v2041 = vpop.f32.mrb[0].mxu0
    %v2042 = vadd.f32 0.0, %v2041
    %v2043 = vpop.f32.mrb[0].mxu0
    %v2044 = vpop.f32.mrb[0].mxu0
    %v2045 = vadd.f32 0.0, %v2044
    %v2046 = vpop.f32.mrb[0].mxu0
    %2047 = vmatprep.mubr.bf16.mxu0 0
    %2048 = vmatmul.mubr.bf16.gmra.mrb[0].mxu0 %v2005
    %v2049 = vpop.f32.mrb[0].mxu0
    %v2050 = vadd.f32 0.0, %v2049
    %v2051 = vpop.f32.mrb[0].mxu0
    %v2052 = vpop.f32.mrb[0].mxu0
    %v2053 = vpop.f32.mrb[0].mxu0
    %2054 = vdwg.mxu0
    %v2055 = vadd.f32 %v1991, %v2042
    %v2056 = vadd.f32 %v1992, %v2045
    %v2057 = vadd.f32 %v1993, %v2050
    %v2058 = vlaneseq
    %v2059 = vshrl.u32 %v2058, 7
    %v2060 = vadd.s32 %v2059, 8
    %v2061 = vadd.s32 %v2059, 16
    %vm2062 = vcmp.lt.s32.totalorder %v2059, 0
    %v2063 = vsub.s32 0, %v2059
    %v2064 = vsel %vm2062, %v2063, %v2059
    %v2065 = vmul.u32.u64.compose %v2064, 2863311531
    %v2066 = vextract.low.u32 %v2065
    %v2067 = vextract.high.u32 %v2065
    %v2068 = vshrl.u32 %v2067, 2
    %v2069 = vmul.u32 %v2068, 6
    %v2070 = vsub.s32 %v2064, %v2069
    %v2071 = vsub.s32 0, %v2070
    %v2072 = vsel %vm2062, %v2071, %v2070
    %vm2073 = vcmp.lt.s32.totalorder %v2060, 0
    %v2074 = vsub.s32 0, %v2060
    %v2075 = vsel %vm2073, %v2074, %v2060
    %v2076 = vmul.u32.u64.compose %v2075, 2863311531
    %v2077 = vextract.low.u32 %v2076
    %v2078 = vextract.high.u32 %v2076
    %v2079 = vshrl.u32 %v2078, 2
    %v2080 = vmul.u32 %v2079, 6
    %v2081 = vsub.s32 %v2075, %v2080
    %v2082 = vsub.s32 0, %v2081
    %v2083 = vsel %vm2073, %v2082, %v2081
    %vm2084 = vcmp.lt.s32.totalorder %v2061, 0
    %v2085 = vsub.s32 0, %v2061
    %v2086 = vsel %vm2084, %v2085, %v2061
    %v2087 = vmul.u32.u64.compose %v2086, 2863311531
    %v2088 = vextract.low.u32 %v2087
    %v2089 = vextract.high.u32 %v2087
    %v2090 = vshrl.u32 %v2089, 2
    %v2091 = vmul.u32 %v2090, 6
    %v2092 = vsub.s32 %v2086, %v2091
    %v2093 = vsub.s32 0, %v2092
    %v2094 = vsel %vm2084, %v2093, %v2092
    %vm2095 = vcmp.ne.s32.totalorder %v2072, 0
    %vm2096 = vcmp.ne.s32.totalorder %v2083, 0
    %vm2097 = vcmp.ne.s32.totalorder %v2094, 0
    %vm2098 = vcmp.lt.s32.totalorder %v2072, 0
    %vm2099 = vcmp.lt.s32.totalorder %v2083, 0
    %vm2100 = vcmp.lt.s32.totalorder %v2094, 0
    %vm2101 = vmand %vm2098, %vm2095
    %vm2102 = vmand %vm2099, %vm2096
    %vm2103 = vmand %vm2100, %vm2097
    %v2104 = vadd.s32 %v2072, 6
    %v2105 = vadd.s32 %v2083, 6
    %v2106 = vadd.s32 %v2094, 6
    %v2107 = vsel %vm2101, %v2104, %v2072
    %v2108 = vsel %vm2102, %v2105, %v2083
    %v2109 = vsel %vm2103, %v2106, %v2094
    %vm2110 = vcmp.lt.s32.totalorder %v2107, 4
    %vm2111 = vcmp.lt.s32.totalorder %v2108, 4
    %vm2112 = vcmp.lt.s32.totalorder %v2109, 4
    %v2113 = vsel %vm2110, 1, 0
    %v2114 = vsel %vm2111, 1, 0
    %v2115 = vsel %vm2112, 1, 0
    %vm2116 = vcmp.eq.s32.totalorder %v2113, 1
    %vm2117 = vcmp.eq.s32.totalorder %v2114, 1
    %vm2118 = vcmp.eq.s32.totalorder %v2115, 1
    %v2119 = vsel %vm2116, %v458, 0.0
    %v2120 = vsel %vm2117, %v459, 0.0
    %v2121 = vsel %vm2118, %v460, 0.0
    %vm2122 = vcmask 130048
    %v2123 = vsel %vm2122, %v2119, 0.0
    %v2124 = vsel %vm2122, %v2120, 0.0
    %v2125 = vadd.f32 %v2123, %v2124
    %v2126 = vsel %vm2122, %v2121, 0.0
    %v2127 = vadd.f32 %v2125, %v2126
    %v2128 = vrot.slane %v2127, 4
    %v2129 = vadd.f32 %v2127, %v2128
    %v2130 = vrot.slane %v2129, 2
    %v2131 = vadd.f32 %v2129, %v2130
    %v2132 = vrot.slane %v2131, 1
    %v2133 = vadd.f32 %v2131, %v2132
    %v2134 = vsel %vm2116, %v684, 0.0
    %v2135 = vsel %vm2117, %v685, 0.0
    %v2136 = vsel %vm2118, %v686, 0.0
    %v2137 = vsel %vm2122, %v2134, 0.0
    %v2138 = vsel %vm2122, %v2135, 0.0
    %v2139 = vadd.f32 %v2137, %v2138
    %v2140 = vsel %vm2122, %v2136, 0.0
    %v2141 = vadd.f32 %v2139, %v2140
    %v2142 = vrot.slane %v2141, 4
    %v2143 = vadd.f32 %v2141, %v2142
    %v2144 = vrot.slane %v2143, 2
    %v2145 = vadd.f32 %v2143, %v2144
    %v2146 = vrot.slane %v2145, 1
    %v2147 = vadd.f32 %v2145, %v2146
    %v2148 = vadd.f32 %v2133, %v2147
    %v2149 = vsel %vm2116, %v952, 0.0
    %v2150 = vsel %vm2117, %v953, 0.0
    %v2151 = vsel %vm2118, %v954, 0.0
    %v2152 = vsel %vm2122, %v2149, 0.0
    %v2153 = vsel %vm2122, %v2150, 0.0
    %v2154 = vadd.f32 %v2152, %v2153
    %v2155 = vsel %vm2122, %v2151, 0.0
    %v2156 = vadd.f32 %v2154, %v2155
    %v2157 = vrot.slane %v2156, 4
    %v2158 = vadd.f32 %v2156, %v2157
    %v2159 = vrot.slane %v2158, 2
    %v2160 = vadd.f32 %v2158, %v2159
    %v2161 = vrot.slane %v2160, 1
    %v2162 = vadd.f32 %v2160, %v2161
    %v2163 = vadd.f32 %v2148, %v2162
    %v2164 = vsel %vm2116, %v1077, 0.0
    %v2165 = vsel %vm2117, %v1078, 0.0
    %v2166 = vsel %vm2118, %v1079, 0.0
    %v2167 = vsel %vm2122, %v2164, 0.0
    %v2168 = vsel %vm2122, %v2165, 0.0
    %v2169 = vadd.f32 %v2167, %v2168
    %v2170 = vsel %vm2122, %v2166, 0.0
    %v2171 = vadd.f32 %v2169, %v2170
    %v2172 = vrot.slane %v2171, 4
    %v2173 = vadd.f32 %v2171, %v2172
    %v2174 = vrot.slane %v2173, 2
    %v2175 = vadd.f32 %v2173, %v2174
    %v2176 = vrot.slane %v2175, 1
    %v2177 = vadd.f32 %v2175, %v2176
    %v2178 = vadd.f32 %v2163, %v2177
    %v2179 = vsel %vm2116, %v1485, 0.0
    %v2180 = vsel %vm2117, %v1486, 0.0
    %v2181 = vsel %vm2118, %v1487, 0.0
    %v2182 = vsel %vm2122, %v2179, 0.0
    %v2183 = vsel %vm2122, %v2180, 0.0
    %v2184 = vadd.f32 %v2182, %v2183
    %v2185 = vsel %vm2122, %v2181, 0.0
    %v2186 = vadd.f32 %v2184, %v2185
    %v2187 = vrot.slane %v2186, 4
    %v2188 = vadd.f32 %v2186, %v2187
    %v2189 = vrot.slane %v2188, 2
    %v2190 = vadd.f32 %v2188, %v2189
    %v2191 = vrot.slane %v2190, 1
    %v2192 = vadd.f32 %v2190, %v2191
    %v2193 = vadd.f32 %v2178, %v2192
    %v2194 = vsel %vm2116, %v1696, 0.0
    %v2195 = vsel %vm2117, %v1697, 0.0
    %v2196 = vsel %vm2118, %v1698, 0.0
    %v2197 = vsel %vm2122, %v2194, 0.0
    %v2198 = vsel %vm2122, %v2195, 0.0
    %v2199 = vadd.f32 %v2197, %v2198
    %v2200 = vsel %vm2122, %v2196, 0.0
    %v2201 = vadd.f32 %v2199, %v2200
    %v2202 = vrot.slane %v2201, 4
    %v2203 = vadd.f32 %v2201, %v2202
    %v2204 = vrot.slane %v2203, 2
    %v2205 = vadd.f32 %v2203, %v2204
    %v2206 = vrot.slane %v2205, 1
    %v2207 = vadd.f32 %v2205, %v2206
    %v2208 = vadd.f32 %v2193, %v2207
    %v2209 = vsel %vm2116, %v1940, 0.0
    %v2210 = vsel %vm2117, %v1941, 0.0
    %v2211 = vsel %vm2118, %v1942, 0.0
    %v2212 = vsel %vm2122, %v2209, 0.0
    %v2213 = vsel %vm2122, %v2210, 0.0
    %v2214 = vadd.f32 %v2212, %v2213
    %v2215 = vsel %vm2122, %v2211, 0.0
    %v2216 = vadd.f32 %v2214, %v2215
    %v2217 = vrot.slane %v2216, 4
    %v2218 = vadd.f32 %v2216, %v2217
    %v2219 = vrot.slane %v2218, 2
    %v2220 = vadd.f32 %v2218, %v2219
    %v2221 = vrot.slane %v2220, 1
    %v2222 = vadd.f32 %v2220, %v2221
    %v2223 = vadd.f32 %v2208, %v2222
    %v2224 = vsel %vm2116, %v2055, 0.0
    %v2225 = vsel %vm2117, %v2056, 0.0
    %v2226 = vsel %vm2118, %v2057, 0.0
    %v2227 = vsel %vm2122, %v2224, 0.0
    %v2228 = vsel %vm2122, %v2225, 0.0
    %v2229 = vadd.f32 %v2227, %v2228
    %v2230 = vsel %vm2122, %v2226, 0.0
    %v2231 = vadd.f32 %v2229, %v2230
    %v2232 = vrot.slane %v2231, 4
    %v2233 = vadd.f32 %v2231, %v2232
    %v2234 = vrot.slane %v2233, 2
    %v2235 = vadd.f32 %v2233, %v2234
    %v2236 = vrot.slane %v2235, 1
    %v2237 = vadd.f32 %v2235, %v2236
    %v2238 = vadd.f32 %v2223, %v2237
    %v2239 = vmul.f32 %v2238, 0.0078125
    %v2240 = vsub.f32 %v458, %v2239
    %v2241 = vsub.f32 %v459, %v2239
    %v2242 = vsub.f32 %v460, %v2239
    %v2243 = vmul.f32 %v2240, %v2240
    %v2244 = vmul.f32 %v2241, %v2241
    %v2245 = vmul.f32 %v2242, %v2242
    %v2246 = vsel %vm2116, %v2243, 0.0
    %v2247 = vsel %vm2117, %v2244, 0.0
    %v2248 = vsel %vm2118, %v2245, 0.0
    %v2249 = vsel %vm2122, %v2246, 0.0
    %v2250 = vsel %vm2122, %v2247, 0.0
    %v2251 = vadd.f32 %v2249, %v2250
    %v2252 = vsel %vm2122, %v2248, 0.0
    %v2253 = vadd.f32 %v2251, %v2252
    %v2254 = vrot.slane %v2253, 4
    %v2255 = vadd.f32 %v2253, %v2254
    %v2256 = vrot.slane %v2255, 2
    %v2257 = vadd.f32 %v2255, %v2256
    %v2258 = vrot.slane %v2257, 1
    %v2259 = vadd.f32 %v2257, %v2258
    %v2260 = vsub.f32 %v684, %v2239
    %v2261 = vsub.f32 %v685, %v2239
    %v2262 = vsub.f32 %v686, %v2239
    %v2263 = vmul.f32 %v2260, %v2260
    %v2264 = vmul.f32 %v2261, %v2261
    %v2265 = vmul.f32 %v2262, %v2262
    %v2266 = vsel %vm2116, %v2263, 0.0
    %v2267 = vsel %vm2117, %v2264, 0.0
    %v2268 = vsel %vm2118, %v2265, 0.0
    %v2269 = vsel %vm2122, %v2266, 0.0
    %v2270 = vsel %vm2122, %v2267, 0.0
    %v2271 = vadd.f32 %v2269, %v2270
    %v2272 = vsel %vm2122, %v2268, 0.0
    %v2273 = vadd.f32 %v2271, %v2272
    %v2274 = vrot.slane %v2273, 4
    %v2275 = vadd.f32 %v2273, %v2274
    %v2276 = vrot.slane %v2275, 2
    %v2277 = vadd.f32 %v2275, %v2276
    %v2278 = vrot.slane %v2277, 1
    %v2279 = vadd.f32 %v2277, %v2278
    %v2280 = vadd.f32 %v2259, %v2279
    %v2281 = vsub.f32 %v952, %v2239
    %v2282 = vsub.f32 %v953, %v2239
    %v2283 = vsub.f32 %v954, %v2239
    %v2284 = vmul.f32 %v2281, %v2281
    %v2285 = vmul.f32 %v2282, %v2282
    %v2286 = vmul.f32 %v2283, %v2283
    %v2287 = vsel %vm2116, %v2284, 0.0
    %v2288 = vsel %vm2117, %v2285, 0.0
    %v2289 = vsel %vm2118, %v2286, 0.0
    %v2290 = vsel %vm2122, %v2287, 0.0
    %v2291 = vsel %vm2122, %v2288, 0.0
    %v2292 = vadd.f32 %v2290, %v2291
    %v2293 = vsel %vm2122, %v2289, 0.0
    %v2294 = vadd.f32 %v2292, %v2293
    %v2295 = vrot.slane %v2294, 4
    %v2296 = vadd.f32 %v2294, %v2295
    %v2297 = vrot.slane %v2296, 2
    %v2298 = vadd.f32 %v2296, %v2297
    %v2299 = vrot.slane %v2298, 1
    %v2300 = vadd.f32 %v2298, %v2299
    %v2301 = vadd.f32 %v2280, %v2300
    %v2302 = vsub.f32 %v1077, %v2239
    %v2303 = vsub.f32 %v1078, %v2239
    %v2304 = vsub.f32 %v1079, %v2239
    %v2305 = vmul.f32 %v2302, %v2302
    %v2306 = vmul.f32 %v2303, %v2303
    %v2307 = vmul.f32 %v2304, %v2304
    %v2308 = vsel %vm2116, %v2305, 0.0
    %v2309 = vsel %vm2117, %v2306, 0.0
    %v2310 = vsel %vm2118, %v2307, 0.0
    %v2311 = vsel %vm2122, %v2308, 0.0
    %v2312 = vsel %vm2122, %v2309, 0.0
    %v2313 = vadd.f32 %v2311, %v2312
    %v2314 = vsel %vm2122, %v2310, 0.0
    %v2315 = vadd.f32 %v2313, %v2314
    %v2316 = vrot.slane %v2315, 4
    %v2317 = vadd.f32 %v2315, %v2316
    %v2318 = vrot.slane %v2317, 2
    %v2319 = vadd.f32 %v2317, %v2318
    %v2320 = vrot.slane %v2319, 1
    %v2321 = vadd.f32 %v2319, %v2320
    %v2322 = vadd.f32 %v2301, %v2321
    %v2323 = vsub.f32 %v1485, %v2239
    %v2324 = vsub.f32 %v1486, %v2239
    %v2325 = vsub.f32 %v1487, %v2239
    %v2326 = vmul.f32 %v2323, %v2323
    %v2327 = vmul.f32 %v2324, %v2324
    %v2328 = vmul.f32 %v2325, %v2325
    %v2329 = vsel %vm2116, %v2326, 0.0
    %v2330 = vsel %vm2117, %v2327, 0.0
    %v2331 = vsel %vm2118, %v2328, 0.0
    %v2332 = vsel %vm2122, %v2329, 0.0
    %v2333 = vsel %vm2122, %v2330, 0.0
    %v2334 = vadd.f32 %v2332, %v2333
    %v2335 = vsel %vm2122, %v2331, 0.0
    %v2336 = vadd.f32 %v2334, %v2335
    %v2337 = vrot.slane %v2336, 4
    %v2338 = vadd.f32 %v2336, %v2337
    %v2339 = vrot.slane %v2338, 2
    %v2340 = vadd.f32 %v2338, %v2339
    %v2341 = vrot.slane %v2340, 1
    %v2342 = vadd.f32 %v2340, %v2341
    %v2343 = vadd.f32 %v2322, %v2342
    %v2344 = vsub.f32 %v1696, %v2239
    %v2345 = vsub.f32 %v1697, %v2239
    %v2346 = vsub.f32 %v1698, %v2239
    %v2347 = vmul.f32 %v2344, %v2344
    %v2348 = vmul.f32 %v2345, %v2345
    %v2349 = vmul.f32 %v2346, %v2346
    %v2350 = vsel %vm2116, %v2347, 0.0
    %v2351 = vsel %vm2117, %v2348, 0.0
    %v2352 = vsel %vm2118, %v2349, 0.0
    %v2353 = vsel %vm2122, %v2350, 0.0
    %v2354 = vsel %vm2122, %v2351, 0.0
    %v2355 = vadd.f32 %v2353, %v2354
    %v2356 = vsel %vm2122, %v2352, 0.0
    %v2357 = vadd.f32 %v2355, %v2356
    %v2358 = vrot.slane %v2357, 4
    %v2359 = vadd.f32 %v2357, %v2358
    %v2360 = vrot.slane %v2359, 2
    %v2361 = vadd.f32 %v2359, %v2360
    %v2362 = vrot.slane %v2361, 1
    %v2363 = vadd.f32 %v2361, %v2362
    %v2364 = vadd.f32 %v2343, %v2363
    %v2365 = vsub.f32 %v1940, %v2239
    %v2366 = vsub.f32 %v1941, %v2239
    %v2367 = vsub.f32 %v1942, %v2239
    %v2368 = vmul.f32 %v2365, %v2365
    %v2369 = vmul.f32 %v2366, %v2366
    %v2370 = vmul.f32 %v2367, %v2367
    %v2371 = vsel %vm2116, %v2368, 0.0
    %v2372 = vsel %vm2117, %v2369, 0.0
    %v2373 = vsel %vm2118, %v2370, 0.0
    %v2374 = vsel %vm2122, %v2371, 0.0
    %v2375 = vsel %vm2122, %v2372, 0.0
    %v2376 = vadd.f32 %v2374, %v2375
    %v2377 = vsel %vm2122, %v2373, 0.0
    %v2378 = vadd.f32 %v2376, %v2377
    %v2379 = vrot.slane %v2378, 4
    %v2380 = vadd.f32 %v2378, %v2379
    %v2381 = vrot.slane %v2380, 2
    %v2382 = vadd.f32 %v2380, %v2381
    %v2383 = vrot.slane %v2382, 1
    %v2384 = vadd.f32 %v2382, %v2383
    %v2385 = vadd.f32 %v2364, %v2384
    %v2386 = vsub.f32 %v2055, %v2239
    %v2387 = vsub.f32 %v2056, %v2239
    %v2388 = vsub.f32 %v2057, %v2239
    %v2389 = vmul.f32 %v2386, %v2386
    %v2390 = vmul.f32 %v2387, %v2387
    %v2391 = vmul.f32 %v2388, %v2388
    %v2392 = vsel %vm2116, %v2389, 0.0
    %v2393 = vsel %vm2117, %v2390, 0.0
    %v2394 = vsel %vm2118, %v2391, 0.0
    %v2395 = vsel %vm2122, %v2392, 0.0
    %v2396 = vsel %vm2122, %v2393, 0.0
    %v2397 = vadd.f32 %v2395, %v2396
    %v2398 = vsel %vm2122, %v2394, 0.0
    %v2399 = vadd.f32 %v2397, %v2398
    %v2400 = vrot.slane %v2399, 4
    %v2401 = vadd.f32 %v2399, %v2400
    %v2402 = vrot.slane %v2401, 2
    %v2403 = vadd.f32 %v2401, %v2402
    %v2404 = vrot.slane %v2403, 1
    %v2405 = vadd.f32 %v2403, %v2404
    %v2406 = vadd.f32 %v2385, %v2405
    %v2407 = vmul.f32 %v2406, 0.0078125
    %v2408 = vld [vmem:[%s2] sm:$0x1]
    %v2409 = vadd.f32 %v2407, 1e-05
    %v2410 = vrsqrt.pop %v2409
    %v2411 = vmul.f32 %v2408, %v2410
    %v2412 = vld [vmem:[%s3] sm:$0x1]
    %v2413 = vmul.f32 %v2239, %v2411
    %v2414 = vsub.f32 %v2412, %v2413
    %v2416 = vlaneseq
    %v2417 = vshrl.u32 %v2416, 7
    %v2418 = vsub.s32 0, %v2417
    %v2419 = vrot.slane %v2411, %v2418
    %v2421 = vmul.f32 %v458, %v2419
    %v2422 = vmul.f32 %v459, %v2419
    %v2423 = vmul.f32 %v460, %v2419
    %v2425 = vlaneseq
    %v2426 = vshrl.u32 %v2425, 7
    %v2427 = vsub.s32 0, %v2426
    %v2428 = vrot.slane %v2414, %v2427
    %v2430 = vadd.f32 %v2421, %v2428
    %v2431 = vadd.f32 %v2422, %v2428
    %v2432 = vadd.f32 %v2423, %v2428
    %vm2433 = vcmp.ge.f32.partialorder %v2430, 0.0
    %vm2434 = vcmp.ge.f32.partialorder %v2431, 0.0
    %vm2435 = vcmp.ge.f32.partialorder %v2432, 0.0
    %v2436 = vmul.f32 %v2430, 0.2
    %v2437 = vmul.f32 %v2431, 0.2
    %v2438 = vmul.f32 %v2432, 0.2
    %v2439 = vsel %vm2433, %v2430, %v2436
    %v2440 = vsel %vm2434, %v2431, %v2437
    %v2441 = vsel %vm2435, %v2432, %v2438
    %v2442 = vpack.c.bf16 %v2440, %v2439
    %v2443 = vpack.c.bf16 %v2441, %v2441
    %v2446 = vunpack.c.l.b16 %v2442
    %v2447 = vunpack.c.h.b16 %v2442
    %v2448 = vunpack.c.l.b16 %v2443
    %v2449 = vpack.c.b16 %v2446, %v2446
    %v2450 = vpack.c.b16 %v2447, %v2447
    %v2451 = vpack.c.b16 %v2448, %v2448
    %vm2455 = vcmask 125952
    %2456 = vst.msk [vmem:[%s4] sm:$0xf] %vm2455, %v2449
    %2457 = vst.msk [vmem:[%s4 + $0x4] sm:$0xf] %vm2455, %v2450
    %2458 = vst.msk [vmem:[%s4 + $0x8] sm:$0xf] %vm2455, %v2451
    %v2459 = vmul.f32 %v684, %v2419
    %v2460 = vmul.f32 %v685, %v2419
    %v2461 = vmul.f32 %v686, %v2419
    %v2462 = vadd.f32 %v2459, %v2428
    %v2463 = vadd.f32 %v2460, %v2428
    %v2464 = vadd.f32 %v2461, %v2428
    %vm2465 = vcmp.ge.f32.partialorder %v2462, 0.0
    %vm2466 = vcmp.ge.f32.partialorder %v2463, 0.0
    %vm2467 = vcmp.ge.f32.partialorder %v2464, 0.0
    %v2468 = vmul.f32 %v2462, 0.2
    %v2469 = vmul.f32 %v2463, 0.2
    %v2470 = vmul.f32 %v2464, 0.2
    %v2471 = vsel %vm2465, %v2462, %v2468
    %v2472 = vsel %vm2466, %v2463, %v2469
    %v2473 = vsel %vm2467, %v2464, %v2470
    %v2474 = vpack.c.bf16 %v2472, %v2471
    %v2475 = vpack.c.bf16 %v2473, %v2473
    %v2478 = vunpack.c.l.b16 %v2474
    %v2479 = vunpack.c.h.b16 %v2474
    %v2480 = vunpack.c.l.b16 %v2475
    %v2481 = vpack.c.b16 %v2478, %v2478
    %v2482 = vpack.c.b16 %v2479, %v2479
    %v2483 = vpack.c.b16 %v2480, %v2480
    %s2487 = scalar_lea.vmem %s4, 24
    %2488 = vst.msk [vmem:[%s2487] sm:$0xf] %vm2455, %v2481
    %2489 = vst.msk [vmem:[%s2487 + $0x4] sm:$0xf] %vm2455, %v2482
    %2490 = vst.msk [vmem:[%s2487 + $0x8] sm:$0xf] %vm2455, %v2483
    %v2491 = vmul.f32 %v952, %v2419
    %v2492 = vmul.f32 %v953, %v2419
    %v2493 = vmul.f32 %v954, %v2419
    %v2494 = vadd.f32 %v2491, %v2428
    %v2495 = vadd.f32 %v2492, %v2428
    %v2496 = vadd.f32 %v2493, %v2428
    %vm2497 = vcmp.ge.f32.partialorder %v2494, 0.0
    %vm2498 = vcmp.ge.f32.partialorder %v2495, 0.0
    %vm2499 = vcmp.ge.f32.partialorder %v2496, 0.0
    %v2500 = vmul.f32 %v2494, 0.2
    %v2501 = vmul.f32 %v2495, 0.2
    %v2502 = vmul.f32 %v2496, 0.2
    %v2503 = vsel %vm2497, %v2494, %v2500
    %v2504 = vsel %vm2498, %v2495, %v2501
    %v2505 = vsel %vm2499, %v2496, %v2502
    %v2506 = vpack.c.bf16 %v2504, %v2503
    %v2507 = vpack.c.bf16 %v2505, %v2505
    %v2510 = vunpack.c.l.b16 %v2506
    %v2511 = vunpack.c.h.b16 %v2506
    %v2512 = vunpack.c.l.b16 %v2507
    %v2513 = vpack.c.b16 %v2510, %v2510
    %v2514 = vpack.c.b16 %v2511, %v2511
    %v2515 = vpack.c.b16 %v2512, %v2512
    %s2519 = scalar_lea.vmem %s4, 48
    %2520 = vst.msk [vmem:[%s2519] sm:$0xf] %vm2455, %v2513
    %2521 = vst.msk [vmem:[%s2519 + $0x4] sm:$0xf] %vm2455, %v2514
    %2522 = vst.msk [vmem:[%s2519 + $0x8] sm:$0xf] %vm2455, %v2515
    %v2523 = vmul.f32 %v1077, %v2419
    %v2524 = vmul.f32 %v1078, %v2419
    %v2525 = vmul.f32 %v1079, %v2419
    %v2526 = vadd.f32 %v2523, %v2428
    %v2527 = vadd.f32 %v2524, %v2428
    %v2528 = vadd.f32 %v2525, %v2428
    %vm2529 = vcmp.ge.f32.partialorder %v2526, 0.0
    %vm2530 = vcmp.ge.f32.partialorder %v2527, 0.0
    %vm2531 = vcmp.ge.f32.partialorder %v2528, 0.0
    %v2532 = vmul.f32 %v2526, 0.2
    %v2533 = vmul.f32 %v2527, 0.2
    %v2534 = vmul.f32 %v2528, 0.2
    %v2535 = vsel %vm2529, %v2526, %v2532
    %v2536 = vsel %vm2530, %v2527, %v2533
    %v2537 = vsel %vm2531, %v2528, %v2534
    %v2538 = vpack.c.bf16 %v2536, %v2535
    %v2539 = vpack.c.bf16 %v2537, %v2537
    %v2542 = vunpack.c.l.b16 %v2538
    %v2543 = vunpack.c.h.b16 %v2538
    %v2544 = vunpack.c.l.b16 %v2539
    %v2545 = vpack.c.b16 %v2542, %v2542
    %v2546 = vpack.c.b16 %v2543, %v2543
    %v2547 = vpack.c.b16 %v2544, %v2544
    %s2551 = scalar_lea.vmem %s4, 72
    %2552 = vst.msk [vmem:[%s2551] sm:$0xf] %vm2455, %v2545
    %2553 = vst.msk [vmem:[%s2551 + $0x4] sm:$0xf] %vm2455, %v2546
    %2554 = vst.msk [vmem:[%s2551 + $0x8] sm:$0xf] %vm2455, %v2547
    %v2555 = vmul.f32 %v1485, %v2419
    %v2556 = vmul.f32 %v1486, %v2419
    %v2557 = vmul.f32 %v1487, %v2419
    %v2558 = vadd.f32 %v2555, %v2428
    %v2559 = vadd.f32 %v2556, %v2428
    %v2560 = vadd.f32 %v2557, %v2428
    %vm2561 = vcmp.ge.f32.partialorder %v2558, 0.0
    %vm2562 = vcmp.ge.f32.partialorder %v2559, 0.0
    %vm2563 = vcmp.ge.f32.partialorder %v2560, 0.0
    %v2564 = vmul.f32 %v2558, 0.2
    %v2565 = vmul.f32 %v2559, 0.2
    %v2566 = vmul.f32 %v2560, 0.2
    %v2567 = vsel %vm2561, %v2558, %v2564
    %v2568 = vsel %vm2562, %v2559, %v2565
    %v2569 = vsel %vm2563, %v2560, %v2566
    %v2570 = vpack.c.bf16 %v2568, %v2567
    %v2571 = vpack.c.bf16 %v2569, %v2569
    %v2574 = vunpack.c.l.b16 %v2570
    %v2575 = vunpack.c.h.b16 %v2570
    %v2576 = vunpack.c.l.b16 %v2571
    %v2577 = vpack.c.b16 %v2574, %v2574
    %v2578 = vpack.c.b16 %v2575, %v2575
    %v2579 = vpack.c.b16 %v2576, %v2576
    %2583 = vst.msk [vmem:[%s4 + $0xc] sm:$0xf] %vm2455, %v2577
    %2584 = vst.msk [vmem:[%s4 + $0x10] sm:$0xf] %vm2455, %v2578
    %2585 = vst.msk [vmem:[%s4 + $0x14] sm:$0xf] %vm2455, %v2579
    %v2586 = vmul.f32 %v1696, %v2419
    %v2587 = vmul.f32 %v1697, %v2419
    %v2588 = vmul.f32 %v1698, %v2419
    %v2589 = vadd.f32 %v2586, %v2428
    %v2590 = vadd.f32 %v2587, %v2428
    %v2591 = vadd.f32 %v2588, %v2428
    %vm2592 = vcmp.ge.f32.partialorder %v2589, 0.0
    %vm2593 = vcmp.ge.f32.partialorder %v2590, 0.0
    %vm2594 = vcmp.ge.f32.partialorder %v2591, 0.0
    %v2595 = vmul.f32 %v2589, 0.2
    %v2596 = vmul.f32 %v2590, 0.2
    %v2597 = vmul.f32 %v2591, 0.2
    %v2598 = vsel %vm2592, %v2589, %v2595
    %v2599 = vsel %vm2593, %v2590, %v2596
    %v2600 = vsel %vm2594, %v2591, %v2597
    %v2601 = vpack.c.bf16 %v2599, %v2598
    %v2602 = vpack.c.bf16 %v2600, %v2600
    %v2605 = vunpack.c.l.b16 %v2601
    %v2606 = vunpack.c.h.b16 %v2601
    %v2607 = vunpack.c.l.b16 %v2602
    %v2608 = vpack.c.b16 %v2605, %v2605
    %v2609 = vpack.c.b16 %v2606, %v2606
    %v2610 = vpack.c.b16 %v2607, %v2607
    %2614 = vst.msk [vmem:[%s2487 + $0xc] sm:$0xf] %vm2455, %v2608
    %2615 = vst.msk [vmem:[%s2487 + $0x10] sm:$0xf] %vm2455, %v2609
    %2616 = vst.msk [vmem:[%s2487 + $0x14] sm:$0xf] %vm2455, %v2610
    %v2617 = vmul.f32 %v1940, %v2419
    %v2618 = vmul.f32 %v1941, %v2419
    %v2619 = vmul.f32 %v1942, %v2419
    %v2620 = vadd.f32 %v2617, %v2428
    %v2621 = vadd.f32 %v2618, %v2428
    %v2622 = vadd.f32 %v2619, %v2428
    %vm2623 = vcmp.ge.f32.partialorder %v2620, 0.0
    %vm2624 = vcmp.ge.f32.partialorder %v2621, 0.0
    %vm2625 = vcmp.ge.f32.partialorder %v2622, 0.0
    %v2626 = vmul.f32 %v2620, 0.2
    %v2627 = vmul.f32 %v2621, 0.2
    %v2628 = vmul.f32 %v2622, 0.2
    %v2629 = vsel %vm2623, %v2620, %v2626
    %v2630 = vsel %vm2624, %v2621, %v2627
    %v2631 = vsel %vm2625, %v2622, %v2628
    %v2632 = vpack.c.bf16 %v2630, %v2629
    %v2633 = vpack.c.bf16 %v2631, %v2631
    %v2636 = vunpack.c.l.b16 %v2632
    %v2637 = vunpack.c.h.b16 %v2632
    %v2638 = vunpack.c.l.b16 %v2633
    %v2639 = vpack.c.b16 %v2636, %v2636
    %v2640 = vpack.c.b16 %v2637, %v2637
    %v2641 = vpack.c.b16 %v2638, %v2638
    %2645 = vst.msk [vmem:[%s2519 + $0xc] sm:$0xf] %vm2455, %v2639
    %2646 = vst.msk [vmem:[%s2519 + $0x10] sm:$0xf] %vm2455, %v2640
    %2647 = vst.msk [vmem:[%s2519 + $0x14] sm:$0xf] %vm2455, %v2641
    %v2648 = vmul.f32 %v2055, %v2419
    %v2649 = vmul.f32 %v2056, %v2419
    %v2650 = vmul.f32 %v2057, %v2419
    %v2651 = vadd.f32 %v2648, %v2428
    %v2652 = vadd.f32 %v2649, %v2428
    %v2653 = vadd.f32 %v2650, %v2428
    %vm2654 = vcmp.ge.f32.partialorder %v2651, 0.0
    %vm2655 = vcmp.ge.f32.partialorder %v2652, 0.0
    %vm2656 = vcmp.ge.f32.partialorder %v2653, 0.0
    %v2657 = vmul.f32 %v2651, 0.2
    %v2658 = vmul.f32 %v2652, 0.2
    %v2659 = vmul.f32 %v2653, 0.2
    %v2660 = vsel %vm2654, %v2651, %v2657
    %v2661 = vsel %vm2655, %v2652, %v2658
    %v2662 = vsel %vm2656, %v2653, %v2659
    %v2663 = vpack.c.bf16 %v2661, %v2660
    %v2664 = vpack.c.bf16 %v2662, %v2662
    %v2667 = vunpack.c.l.b16 %v2663
    %v2668 = vunpack.c.h.b16 %v2663
    %v2669 = vunpack.c.l.b16 %v2664
    %v2670 = vpack.c.b16 %v2667, %v2667
    %v2671 = vpack.c.b16 %v2668, %v2668
    %v2672 = vpack.c.b16 %v2669, %v2669
    %2676 = vst.msk [vmem:[%s2551 + $0xc] sm:$0xf] %vm2455, %v2670
    %2677 = vst.msk [vmem:[%s2551 + $0x10] sm:$0xf] %vm2455, %v2671
    %2678 = vst.msk [vmem:[%s2551 + $0x14] sm:$0xf] %vm2455, %v2672
    // Predicated region
    $region22: #{tpu_custom_call.1} parent=1 // pred_check
      _
    $region23: #{tpu_custom_call.1} parent=1 // pred_check_branch
      %2680 = sbr.rel (0) target = $region25
    $region24: #{tpu_custom_call.1} parent=1 // pred_region
      _
    $region25: #{tpu_custom_call.1} parent=1 // pred_fallthru
      _
    // Predicated region
    $region26: #{tpu_custom_call.1} parent=1 // pred_check
      _
    $region27: #{tpu_custom_call.1} parent=1 // pred_check_branch
      %2682 = sbr.rel (0) target = $region29
    $region28: #{tpu_custom_call.1} parent=1 // pred_region
      _
    $region29: #{tpu_custom_call.1} parent=1 // pred_fallthru
      _
    %2683 = vsyncpa [#allocation3], 1

</llo_original>
